<compile_context>
chip_gen: v7x
topology: tpu7x:2x2x1
jax: 0.10.0
libtpu: 0.0.40
codegen_flags: <defaults>
</compile_context>

<pallas_src>
import functools

import jax
import jax.numpy as jnp
from jax.experimental import pallas as pl
from jax.experimental.pallas import tpu as pltpu


# ---------------------------------------------------------------------------
# Fused 3x3 conv (pad=1) + bias + ReLU + 2x2 max-pool
# ---------------------------------------------------------------------------
def _conv3x3_relu_pool_kernel(x00, x01, x10, x11, w_ref, b_ref, o_ref,
                              *, Ph, Pw, C_in, C_out):
    """One image per grid step.

    x_pq: flattened (row-parity p, col-parity q) planes of the padded image,
          shape ((Ph+2)*(Pw+1), C_in), bf16.
    For pooled output pixel (ph, pw), pool sub-position (r, s) and conv tap
    (di, dj), the needed input lives in plane ((r+di)%2, (s+dj)%2) at flat
    offset ((r+di)//2)*(Pw+1) + (s+dj)//2 + m with m = ph*(Pw+1) + pw, i.e.
    one contiguous slice per (r, s, di, dj) -- no strided access, no im2col.
    The accumulator carries one scratch column (pw == Pw) that is dropped by
    the wrapper.
    """
    planes = ((x00, x01), (x10, x11))
    W1 = Pw + 1
    L = Ph * W1
    bias = b_ref[...].astype(jnp.float32)                     # (1, C_out)

    pooled = None
    for r in range(2):
        for s in range(2):
            acc = jnp.zeros((L, C_out), jnp.float32)
            for di in range(3):
                for dj in range(3):
                    a, b = r + di, s + dj
                    src = planes[a % 2][b % 2]
                    off = (a // 2) * W1 + (b // 2)             # static
                    patch = src[pl.ds(off, L), :]              # (L, C_in) bf16
                    wk = w_ref[di * 3 + dj]                    # (C_in, C_out) bf16
                    if C_in == 1:
                        # K == 1: broadcast FMA on the VPU (MXU gains nothing)
                        acc = acc + (patch.astype(jnp.float32)
                                     * wk.astype(jnp.float32))
                    else:
                        acc = acc + jnp.dot(patch, wk,
                                            preferred_element_type=jnp.float32)
            y = jnp.maximum(acc + bias, 0.0)                   # bias + ReLU (f32)
            pooled = y if pooled is None else jnp.maximum(pooled, y)
    o_ref[...] = pooled


def _split_parity_planes(x_nhwc):
    """Pad rows (1,3) / cols (1,1), split into 4 parity planes, flatten pixels."""
    N, H, W, C = x_nhwc.shape
    Ph, Pw = H // 2, W // 2
    xp = jnp.pad(x_nhwc, ((0, 0), (1, 3), (1, 1), (0, 0)))     # (N, H+4, W+2, C)
    planes = []
    for p in range(2):
        for q in range(2):
            pq = xp[:, p::2, q::2, :]                          # (N, Ph+2, Pw+1, C)
            planes.append(pq.reshape(N, (Ph + 2) * (Pw + 1), C))
    return planes


def conv3x3_relu_pool(x_nhwc, w_oihw, bias):
    """x: (N, H, W, C_in) f32 -> (N, H//2, W//2, C_out) f32."""
    N, H, W, C_in = x_nhwc.shape
    C_out = w_oihw.shape[0]
    Ph, Pw = H // 2, W // 2
    W1 = Pw + 1
    L = Ph * W1
    P = (Ph + 2) * W1

    planes = [p.astype(jnp.bfloat16) for p in _split_parity_planes(x_nhwc)]
    # OIHW -> (tap, C_in, C_out), bf16 for the MXU
    w_mat = jnp.transpose(w_oihw, (2, 3, 1, 0)).reshape(9, C_in, C_out)
    w_mat = w_mat.astype(jnp.bfloat16)
    b_mat = bias.reshape(1, C_out).astype(jnp.float32)

    kernel = functools.partial(_conv3x3_relu_pool_kernel,
                               Ph=Ph, Pw=Pw, C_in=C_in, C_out=C_out)
    plane_spec = pl.BlockSpec((None, P, C_in), lambda n: (n, 0, 0))

    out = pl.pallas_call(
        kernel,
        out_shape=jax.ShapeDtypeStruct((N, L, C_out), jnp.float32),
        grid=(N,),
        in_specs=[plane_spec, plane_spec, plane_spec, plane_spec,
                  pl.BlockSpec((9, C_in, C_out), lambda n: (0, 0, 0)),
                  pl.BlockSpec((1, C_out), lambda n: (0, 0))],
        out_specs=pl.BlockSpec((None, L, C_out), lambda n: (n, 0, 0)),
        compiler_params=pltpu.CompilerParams(
            dimension_semantics=("parallel",),
            vmem_limit_bytes=32 * 1024 * 1024),
    )(*planes, w_mat, b_mat)

    # drop the scratch column of the accumulator grid -> (N, Ph, Pw, C_out)
    return out.reshape(N, Ph, W1, C_out)[:, :, :Pw, :]


# ---------------------------------------------------------------------------
# Fused fc1 + ReLU + fc2
# ---------------------------------------------------------------------------
def _mlp_kernel(x_ref, w1_ref, b1_ref, w2_ref, b2_ref, o_ref):
    h = jnp.dot(x_ref[...], w1_ref[...], preferred_element_type=jnp.float32)
    h = jnp.maximum(h + b1_ref[...], 0.0)
    o = jnp.dot(h.astype(jnp.bfloat16), w2_ref[...],
                preferred_element_type=jnp.float32)
    o_ref[...] = o + b2_ref[...]


def mlp(x_flat, w1_mat, b1, w2_mat, b2):
    N = x_flat.shape[0]
    vmem = pl.BlockSpec(memory_space=pltpu.MemorySpace.VMEM)
    return pl.pallas_call(
        _mlp_kernel,
        out_shape=jax.ShapeDtypeStruct((N, w2_mat.shape[1]), jnp.float32),
        in_specs=[vmem] * 5,
        out_specs=vmem,
        compiler_params=pltpu.CompilerParams(vmem_limit_bytes=32 * 1024 * 1024),
    )(x_flat.astype(jnp.bfloat16),
      w1_mat.astype(jnp.bfloat16), b1.reshape(1, -1).astype(jnp.float32),
      w2_mat.astype(jnp.bfloat16), b2.reshape(1, -1).astype(jnp.float32))


# ---------------------------------------------------------------------------
# Full ConvNet forward (PyTorch semantics, NCHW interface)
# ---------------------------------------------------------------------------
def _fc1_weight_nhwc(fc1_w, C=64, H=7, W=7):
    """torch fc1 (128, C*H*W) with CHW flatten -> (H*W*C, 128) for NHWC flatten."""
    out_dim = fc1_w.shape[0]
    w = fc1_w.reshape(out_dim, C, H, W)
    return jnp.transpose(w, (2, 3, 1, 0)).reshape(H * W * C, out_dim)


def convnet_forward(x_nchw, params):
    x = jnp.transpose(x_nchw, (0, 2, 3, 1))                    # NCHW -> NHWC once
    h = conv3x3_relu_pool(x, params["conv1_w"], params["conv1_b"])   # (N,14,14,32)
    h = conv3x3_relu_pool(h, params["conv2_w"], params["conv2_b"])   # (N, 7, 7,64)
    N = h.shape[0]
    h_flat = h.reshape(N, -1)                                  # NHWC flatten
    w1 = _fc1_weight_nhwc(params["fc1_w"])                     # columns permuted to NHWC order
    return mlp(h_flat, w1, params["fc1_b"], params["fc2_w"].T, params["fc2_b"])


# ---------------------------------------------------------------------------
# Pure-JAX reference (same bf16-operand / f32-accumulate math)
# ---------------------------------------------------------------------------
def reference_forward(x, params):
    def conv(h, w, b):
        y = jax.lax.conv_general_dilated(
            h.astype(jnp.bfloat16), w.astype(jnp.bfloat16),
            window_strides=(1, 1), padding=[(1, 1), (1, 1)],
            dimension_numbers=("NCHW", "OIHW", "NCHW"),
            preferred_element_type=jnp.float32)
        return y + b.reshape(1, -1, 1, 1)

    def pool(h):
        N, C, H, W = h.shape
        return jnp.max(h.reshape(N, C, H // 2, 2, W // 2, 2), axis=(3, 5))

    h = pool(jax.nn.relu(conv(x, params["conv1_w"], params["conv1_b"])))
    h = pool(jax.nn.relu(conv(h, params["conv2_w"], params["conv2_b"])))
    hf = h.reshape(h.shape[0], -1)                             # CHW flatten (PyTorch view)
    h1 = jnp.dot(hf.astype(jnp.bfloat16), params["fc1_w"].T.astype(jnp.bfloat16),
                 preferred_element_type=jnp.float32) + params["fc1_b"]
    h1 = jax.nn.relu(h1)
    out = jnp.dot(h1.astype(jnp.bfloat16), params["fc2_w"].T.astype(jnp.bfloat16),
                  preferred_element_type=jnp.float32) + params["fc2_b"]
    return out


# ---------------------------------------------------------------------------
# Main
# ---------------------------------------------------------------------------
if __name__ == "__main__":
    # fc1 = Linear(64*7*7, 128) implies 28x28x1 input (28 -> 14 -> 7 after pools).
    N, H, W = 2, 28, 28
    key = jax.random.PRNGKey(0)
    ks = jax.random.split(key, 9)

    x = jax.random.normal(ks[0], (N, 1, H, W), dtype=jnp.float32)
    params = {
        # PyTorch layouts: conv OIHW, linear (out, in)
        "conv1_w": 0.1 * jax.random.normal(ks[1], (32, 1, 3, 3), jnp.float32),
        "conv1_b": 0.1 * jax.random.normal(ks[2], (32,), jnp.float32),
        "conv2_w": 0.05 * jax.random.normal(ks[3], (64, 32, 3, 3), jnp.float32),
        "conv2_b": 0.1 * jax.random.normal(ks[4], (64,), jnp.float32),
        "fc1_w": 0.02 * jax.random.normal(ks[5], (128, 64 * 7 * 7), jnp.float32),
        "fc1_b": 0.1 * jax.random.normal(ks[6], (128,), jnp.float32),
        "fc2_w": 0.05 * jax.random.normal(ks[7], (10, 128), jnp.float32),
        "fc2_b": 0.1 * jax.random.normal(ks[8], (10,), jnp.float32),
    }

    out = jax.block_until_ready(convnet_forward(x, params))
    ref = jax.block_until_ready(reference_forward(x, params))

    assert out.shape == (N, 10), out.shape
    max_err = float(jnp.max(jnp.abs(out - ref)))
    assert jnp.allclose(out, ref, atol=5e-3, rtol=5e-3), max_err

    print("KERNEL_OK")
</pallas_src>

<mosaic_0001>
module attributes {stable_mosaic.version = 11 : i64} {
  func.func @_conv3x3_relu_pool_kernel(%arg0: i32, %arg1: memref<1x240x1xbf16, #tpu.memory_space<vmem>>, %arg2: memref<1x240x1xbf16, #tpu.memory_space<vmem>>, %arg3: memref<1x240x1xbf16, #tpu.memory_space<vmem>>, %arg4: memref<1x240x1xbf16, #tpu.memory_space<vmem>>, %arg5: memref<9x1x32xbf16, #tpu.memory_space<vmem>>, %arg6: memref<1x32xf32, #tpu.memory_space<vmem>>, %arg7: memref<1x210x32xf32, #tpu.memory_space<vmem>>) attributes {dimension_semantics = [#tpu.dimension_semantics<parallel>], iteration_bounds = array<i64: 2>, scalar_prefetch = 0 : i64, scratch_operands = 0 : i64, tpu.core_type = #tpu.core_type<tc>, window_params = [{transform_indices = @transform_0, window_bounds = array<i64: 1, 240, 1>}, {transform_indices = @transform_1, window_bounds = array<i64: 1, 240, 1>}, {transform_indices = @transform_2, window_bounds = array<i64: 1, 240, 1>}, {transform_indices = @transform_3, window_bounds = array<i64: 1, 240, 1>}, {pipeline_mode = #tpu.pipeline_mode<synchronous>, transform_indices = @transform_4, window_bounds = array<i64: 9, 1, 32>}, {pipeline_mode = #tpu.pipeline_mode<synchronous>, transform_indices = @transform_5, window_bounds = array<i64: 1, 32>}, {transform_indices = @transform_6, window_bounds = array<i64: 1, 210, 32>}]} {
    %c0 = arith.constant 0 : index
    %c0_0 = arith.constant 0 : index
    %0 = vector.load %arg6[%c0, %c0_0] : memref<1x32xf32, #tpu.memory_space<vmem>>, vector<1x32xf32>
    %cst = arith.constant 0.000000e+00 : f32
    %1 = vector.broadcast %cst : f32 to vector<210x32xf32>
    %c0_1 = arith.constant 0 : index
    %c0_2 = arith.constant 0 : index
    %c0_3 = arith.constant 0 : index
    %2 = vector.load %arg1[%c0_1, %c0_2, %c0_3] : memref<1x240x1xbf16, #tpu.memory_space<vmem>>, vector<1x210x1xbf16>
    %3 = vector.shape_cast %2 : vector<1x210x1xbf16> to vector<210x1xbf16>
    %c0_4 = arith.constant 0 : index
    %c0_5 = arith.constant 0 : index
    %c0_6 = arith.constant 0 : index
    %4 = vector.load %arg5[%c0_4, %c0_5, %c0_6] : memref<9x1x32xbf16, #tpu.memory_space<vmem>>, vector<1x1x32xbf16>
    %5 = vector.shape_cast %4 : vector<1x1x32xbf16> to vector<1x32xbf16>
    %6 = arith.extf %3 : vector<210x1xbf16> to vector<210x1xf32>
    %7 = arith.extf %5 : vector<1x32xbf16> to vector<1x32xf32>
    %8 = vector.broadcast %6 : vector<210x1xf32> to vector<210x32xf32>
    %9 = vector.broadcast %7 : vector<1x32xf32> to vector<210x32xf32>
    %10 = arith.mulf %8, %9 : vector<210x32xf32>
    %11 = arith.addf %1, %10 : vector<210x32xf32>
    %c0_7 = arith.constant 0 : index
    %c0_8 = arith.constant 0 : index
    %c0_9 = arith.constant 0 : index
    %12 = vector.load %arg2[%c0_7, %c0_8, %c0_9] : memref<1x240x1xbf16, #tpu.memory_space<vmem>>, vector<1x210x1xbf16>
    %13 = vector.shape_cast %12 : vector<1x210x1xbf16> to vector<210x1xbf16>
    %c1 = arith.constant 1 : index
    %c0_10 = arith.constant 0 : index
    %c0_11 = arith.constant 0 : index
    %14 = vector.load %arg5[%c1, %c0_10, %c0_11] : memref<9x1x32xbf16, #tpu.memory_space<vmem>>, vector<1x1x32xbf16>
    %15 = vector.shape_cast %14 : vector<1x1x32xbf16> to vector<1x32xbf16>
    %16 = arith.extf %13 : vector<210x1xbf16> to vector<210x1xf32>
    %17 = arith.extf %15 : vector<1x32xbf16> to vector<1x32xf32>
    %18 = vector.broadcast %16 : vector<210x1xf32> to vector<210x32xf32>
    %19 = vector.broadcast %17 : vector<1x32xf32> to vector<210x32xf32>
    %20 = arith.mulf %18, %19 : vector<210x32xf32>
    %21 = arith.addf %11, %20 : vector<210x32xf32>
    %c0_12 = arith.constant 0 : index
    %c1_13 = arith.constant 1 : index
    %c0_14 = arith.constant 0 : index
    %22 = vector.load %arg1[%c0_12, %c1_13, %c0_14] : memref<1x240x1xbf16, #tpu.memory_space<vmem>>, vector<1x210x1xbf16>
    %23 = vector.shape_cast %22 : vector<1x210x1xbf16> to vector<210x1xbf16>
    %c2 = arith.constant 2 : index
    %c0_15 = arith.constant 0 : index
    %c0_16 = arith.constant 0 : index
    %24 = vector.load %arg5[%c2, %c0_15, %c0_16] : memref<9x1x32xbf16, #tpu.memory_space<vmem>>, vector<1x1x32xbf16>
    %25 = vector.shape_cast %24 : vector<1x1x32xbf16> to vector<1x32xbf16>
    %26 = arith.extf %23 : vector<210x1xbf16> to vector<210x1xf32>
    %27 = arith.extf %25 : vector<1x32xbf16> to vector<1x32xf32>
    %28 = vector.broadcast %26 : vector<210x1xf32> to vector<210x32xf32>
    %29 = vector.broadcast %27 : vector<1x32xf32> to vector<210x32xf32>
    %30 = arith.mulf %28, %29 : vector<210x32xf32>
    %31 = arith.addf %21, %30 : vector<210x32xf32>
    %c0_17 = arith.constant 0 : index
    %c0_18 = arith.constant 0 : index
    %c0_19 = arith.constant 0 : index
    %32 = vector.load %arg3[%c0_17, %c0_18, %c0_19] : memref<1x240x1xbf16, #tpu.memory_space<vmem>>, vector<1x210x1xbf16>
    %33 = vector.shape_cast %32 : vector<1x210x1xbf16> to vector<210x1xbf16>
    %c3 = arith.constant 3 : index
    %c0_20 = arith.constant 0 : index
    %c0_21 = arith.constant 0 : index
    %34 = vector.load %arg5[%c3, %c0_20, %c0_21] : memref<9x1x32xbf16, #tpu.memory_space<vmem>>, vector<1x1x32xbf16>
    %35 = vector.shape_cast %34 : vector<1x1x32xbf16> to vector<1x32xbf16>
    %36 = arith.extf %33 : vector<210x1xbf16> to vector<210x1xf32>
    %37 = arith.extf %35 : vector<1x32xbf16> to vector<1x32xf32>
    %38 = vector.broadcast %36 : vector<210x1xf32> to vector<210x32xf32>
    %39 = vector.broadcast %37 : vector<1x32xf32> to vector<210x32xf32>
    %40 = arith.mulf %38, %39 : vector<210x32xf32>
    %41 = arith.addf %31, %40 : vector<210x32xf32>
    %c0_22 = arith.constant 0 : index
    %c0_23 = arith.constant 0 : index
    %c0_24 = arith.constant 0 : index
    %42 = vector.load %arg4[%c0_22, %c0_23, %c0_24] : memref<1x240x1xbf16, #tpu.memory_space<vmem>>, vector<1x210x1xbf16>
    %43 = vector.shape_cast %42 : vector<1x210x1xbf16> to vector<210x1xbf16>
    %c4 = arith.constant 4 : index
    %c0_25 = arith.constant 0 : index
    %c0_26 = arith.constant 0 : index
    %44 = vector.load %arg5[%c4, %c0_25, %c0_26] : memref<9x1x32xbf16, #tpu.memory_space<vmem>>, vector<1x1x32xbf16>
    %45 = vector.shape_cast %44 : vector<1x1x32xbf16> to vector<1x32xbf16>
    %46 = arith.extf %43 : vector<210x1xbf16> to vector<210x1xf32>
    %47 = arith.extf %45 : vector<1x32xbf16> to vector<1x32xf32>
    %48 = vector.broadcast %46 : vector<210x1xf32> to vector<210x32xf32>
    %49 = vector.broadcast %47 : vector<1x32xf32> to vector<210x32xf32>
    %50 = arith.mulf %48, %49 : vector<210x32xf32>
    %51 = arith.addf %41, %50 : vector<210x32xf32>
    %c0_27 = arith.constant 0 : index
    %c1_28 = arith.constant 1 : index
    %c0_29 = arith.constant 0 : index
    %52 = vector.load %arg3[%c0_27, %c1_28, %c0_29] : memref<1x240x1xbf16, #tpu.memory_space<vmem>>, vector<1x210x1xbf16>
    %53 = vector.shape_cast %52 : vector<1x210x1xbf16> to vector<210x1xbf16>
    %c5 = arith.constant 5 : index
    %c0_30 = arith.constant 0 : index
    %c0_31 = arith.constant 0 : index
    %54 = vector.load %arg5[%c5, %c0_30, %c0_31] : memref<9x1x32xbf16, #tpu.memory_space<vmem>>, vector<1x1x32xbf16>
    %55 = vector.shape_cast %54 : vector<1x1x32xbf16> to vector<1x32xbf16>
    %56 = arith.extf %53 : vector<210x1xbf16> to vector<210x1xf32>
    %57 = arith.extf %55 : vector<1x32xbf16> to vector<1x32xf32>
    %58 = vector.broadcast %56 : vector<210x1xf32> to vector<210x32xf32>
    %59 = vector.broadcast %57 : vector<1x32xf32> to vector<210x32xf32>
    %60 = arith.mulf %58, %59 : vector<210x32xf32>
    %61 = arith.addf %51, %60 : vector<210x32xf32>
    %c0_32 = arith.constant 0 : index
    %c15 = arith.constant 15 : index
    %c0_33 = arith.constant 0 : index
    %62 = vector.load %arg1[%c0_32, %c15, %c0_33] : memref<1x240x1xbf16, #tpu.memory_space<vmem>>, vector<1x210x1xbf16>
    %63 = vector.shape_cast %62 : vector<1x210x1xbf16> to vector<210x1xbf16>
    %c6 = arith.constant 6 : index
    %c0_34 = arith.constant 0 : index
    %c0_35 = arith.constant 0 : index
    %64 = vector.load %arg5[%c6, %c0_34, %c0_35] : memref<9x1x32xbf16, #tpu.memory_space<vmem>>, vector<1x1x32xbf16>
    %65 = vector.shape_cast %64 : vector<1x1x32xbf16> to vector<1x32xbf16>
    %66 = arith.extf %63 : vector<210x1xbf16> to vector<210x1xf32>
    %67 = arith.extf %65 : vector<1x32xbf16> to vector<1x32xf32>
    %68 = vector.broadcast %66 : vector<210x1xf32> to vector<210x32xf32>
    %69 = vector.broadcast %67 : vector<1x32xf32> to vector<210x32xf32>
    %70 = arith.mulf %68, %69 : vector<210x32xf32>
    %71 = arith.addf %61, %70 : vector<210x32xf32>
    %c0_36 = arith.constant 0 : index
    %c15_37 = arith.constant 15 : index
    %c0_38 = arith.constant 0 : index
    %72 = vector.load %arg2[%c0_36, %c15_37, %c0_38] : memref<1x240x1xbf16, #tpu.memory_space<vmem>>, vector<1x210x1xbf16>
    %73 = vector.shape_cast %72 : vector<1x210x1xbf16> to vector<210x1xbf16>
    %c7 = arith.constant 7 : index
    %c0_39 = arith.constant 0 : index
    %c0_40 = arith.constant 0 : index
    %74 = vector.load %arg5[%c7, %c0_39, %c0_40] : memref<9x1x32xbf16, #tpu.memory_space<vmem>>, vector<1x1x32xbf16>
    %75 = vector.shape_cast %74 : vector<1x1x32xbf16> to vector<1x32xbf16>
    %76 = arith.extf %73 : vector<210x1xbf16> to vector<210x1xf32>
    %77 = arith.extf %75 : vector<1x32xbf16> to vector<1x32xf32>
    %78 = vector.broadcast %76 : vector<210x1xf32> to vector<210x32xf32>
    %79 = vector.broadcast %77 : vector<1x32xf32> to vector<210x32xf32>
    %80 = arith.mulf %78, %79 : vector<210x32xf32>
    %81 = arith.addf %71, %80 : vector<210x32xf32>
    %c0_41 = arith.constant 0 : index
    %c16 = arith.constant 16 : index
    %c0_42 = arith.constant 0 : index
    %82 = vector.load %arg1[%c0_41, %c16, %c0_42] : memref<1x240x1xbf16, #tpu.memory_space<vmem>>, vector<1x210x1xbf16>
    %83 = vector.shape_cast %82 : vector<1x210x1xbf16> to vector<210x1xbf16>
    %c8 = arith.constant 8 : index
    %c0_43 = arith.constant 0 : index
    %c0_44 = arith.constant 0 : index
    %84 = vector.load %arg5[%c8, %c0_43, %c0_44] : memref<9x1x32xbf16, #tpu.memory_space<vmem>>, vector<1x1x32xbf16>
    %85 = vector.shape_cast %84 : vector<1x1x32xbf16> to vector<1x32xbf16>
    %86 = arith.extf %83 : vector<210x1xbf16> to vector<210x1xf32>
    %87 = arith.extf %85 : vector<1x32xbf16> to vector<1x32xf32>
    %88 = vector.broadcast %86 : vector<210x1xf32> to vector<210x32xf32>
    %89 = vector.broadcast %87 : vector<1x32xf32> to vector<210x32xf32>
    %90 = arith.mulf %88, %89 : vector<210x32xf32>
    %91 = arith.addf %81, %90 : vector<210x32xf32>
    %92 = vector.broadcast %0 : vector<1x32xf32> to vector<210x32xf32>
    %93 = arith.addf %91, %92 : vector<210x32xf32>
    %cst_45 = arith.constant 0.000000e+00 : f32
    %94 = vector.broadcast %cst_45 : f32 to vector<210x32xf32>
    %95 = arith.maximumf %93, %94 : vector<210x32xf32>
    %cst_46 = arith.constant 0.000000e+00 : f32
    %96 = vector.broadcast %cst_46 : f32 to vector<210x32xf32>
    %c0_47 = arith.constant 0 : index
    %c0_48 = arith.constant 0 : index
    %c0_49 = arith.constant 0 : index
    %97 = vector.load %arg2[%c0_47, %c0_48, %c0_49] : memref<1x240x1xbf16, #tpu.memory_space<vmem>>, vector<1x210x1xbf16>
    %98 = vector.shape_cast %97 : vector<1x210x1xbf16> to vector<210x1xbf16>
    %c0_50 = arith.constant 0 : index
    %c0_51 = arith.constant 0 : index
    %c0_52 = arith.constant 0 : index
    %99 = vector.load %arg5[%c0_50, %c0_51, %c0_52] : memref<9x1x32xbf16, #tpu.memory_space<vmem>>, vector<1x1x32xbf16>
    %100 = vector.shape_cast %99 : vector<1x1x32xbf16> to vector<1x32xbf16>
    %101 = arith.extf %98 : vector<210x1xbf16> to vector<210x1xf32>
    %102 = arith.extf %100 : vector<1x32xbf16> to vector<1x32xf32>
    %103 = vector.broadcast %101 : vector<210x1xf32> to vector<210x32xf32>
    %104 = vector.broadcast %102 : vector<1x32xf32> to vector<210x32xf32>
    %105 = arith.mulf %103, %104 : vector<210x32xf32>
    %106 = arith.addf %96, %105 : vector<210x32xf32>
    %c0_53 = arith.constant 0 : index
    %c1_54 = arith.constant 1 : index
    %c0_55 = arith.constant 0 : index
    %107 = vector.load %arg1[%c0_53, %c1_54, %c0_55] : memref<1x240x1xbf16, #tpu.memory_space<vmem>>, vector<1x210x1xbf16>
    %108 = vector.shape_cast %107 : vector<1x210x1xbf16> to vector<210x1xbf16>
    %c1_56 = arith.constant 1 : index
    %c0_57 = arith.constant 0 : index
    %c0_58 = arith.constant 0 : index
    %109 = vector.load %arg5[%c1_56, %c0_57, %c0_58] : memref<9x1x32xbf16, #tpu.memory_space<vmem>>, vector<1x1x32xbf16>
    %110 = vector.shape_cast %109 : vector<1x1x32xbf16> to vector<1x32xbf16>
    %111 = arith.extf %108 : vector<210x1xbf16> to vector<210x1xf32>
    %112 = arith.extf %110 : vector<1x32xbf16> to vector<1x32xf32>
    %113 = vector.broadcast %111 : vector<210x1xf32> to vector<210x32xf32>
    %114 = vector.broadcast %112 : vector<1x32xf32> to vector<210x32xf32>
    %115 = arith.mulf %113, %114 : vector<210x32xf32>
    %116 = arith.addf %106, %115 : vector<210x32xf32>
    %c0_59 = arith.constant 0 : index
    %c1_60 = arith.constant 1 : index
    %c0_61 = arith.constant 0 : index
    %117 = vector.load %arg2[%c0_59, %c1_60, %c0_61] : memref<1x240x1xbf16, #tpu.memory_space<vmem>>, vector<1x210x1xbf16>
    %118 = vector.shape_cast %117 : vector<1x210x1xbf16> to vector<210x1xbf16>
    %c2_62 = arith.constant 2 : index
    %c0_63 = arith.constant 0 : index
    %c0_64 = arith.constant 0 : index
    %119 = vector.load %arg5[%c2_62, %c0_63, %c0_64] : memref<9x1x32xbf16, #tpu.memory_space<vmem>>, vector<1x1x32xbf16>
    %120 = vector.shape_cast %119 : vector<1x1x32xbf16> to vector<1x32xbf16>
    %121 = arith.extf %118 : vector<210x1xbf16> to vector<210x1xf32>
    %122 = arith.extf %120 : vector<1x32xbf16> to vector<1x32xf32>
    %123 = vector.broadcast %121 : vector<210x1xf32> to vector<210x32xf32>
    %124 = vector.broadcast %122 : vector<1x32xf32> to vector<210x32xf32>
    %125 = arith.mulf %123, %124 : vector<210x32xf32>
    %126 = arith.addf %116, %125 : vector<210x32xf32>
    %c0_65 = arith.constant 0 : index
    %c0_66 = arith.constant 0 : index
    %c0_67 = arith.constant 0 : index
    %127 = vector.load %arg4[%c0_65, %c0_66, %c0_67] : memref<1x240x1xbf16, #tpu.memory_space<vmem>>, vector<1x210x1xbf16>
    %128 = vector.shape_cast %127 : vector<1x210x1xbf16> to vector<210x1xbf16>
    %c3_68 = arith.constant 3 : index
    %c0_69 = arith.constant 0 : index
    %c0_70 = arith.constant 0 : index
    %129 = vector.load %arg5[%c3_68, %c0_69, %c0_70] : memref<9x1x32xbf16, #tpu.memory_space<vmem>>, vector<1x1x32xbf16>
    %130 = vector.shape_cast %129 : vector<1x1x32xbf16> to vector<1x32xbf16>
    %131 = arith.extf %128 : vector<210x1xbf16> to vector<210x1xf32>
    %132 = arith.extf %130 : vector<1x32xbf16> to vector<1x32xf32>
    %133 = vector.broadcast %131 : vector<210x1xf32> to vector<210x32xf32>
    %134 = vector.broadcast %132 : vector<1x32xf32> to vector<210x32xf32>
    %135 = arith.mulf %133, %134 : vector<210x32xf32>
    %136 = arith.addf %126, %135 : vector<210x32xf32>
    %c0_71 = arith.constant 0 : index
    %c1_72 = arith.constant 1 : index
    %c0_73 = arith.constant 0 : index
    %137 = vector.load %arg3[%c0_71, %c1_72, %c0_73] : memref<1x240x1xbf16, #tpu.memory_space<vmem>>, vector<1x210x1xbf16>
    %138 = vector.shape_cast %137 : vector<1x210x1xbf16> to vector<210x1xbf16>
    %c4_74 = arith.constant 4 : index
    %c0_75 = arith.constant 0 : index
    %c0_76 = arith.constant 0 : index
    %139 = vector.load %arg5[%c4_74, %c0_75, %c0_76] : memref<9x1x32xbf16, #tpu.memory_space<vmem>>, vector<1x1x32xbf16>
    %140 = vector.shape_cast %139 : vector<1x1x32xbf16> to vector<1x32xbf16>
    %141 = arith.extf %138 : vector<210x1xbf16> to vector<210x1xf32>
    %142 = arith.extf %140 : vector<1x32xbf16> to vector<1x32xf32>
    %143 = vector.broadcast %141 : vector<210x1xf32> to vector<210x32xf32>
    %144 = vector.broadcast %142 : vector<1x32xf32> to vector<210x32xf32>
    %145 = arith.mulf %143, %144 : vector<210x32xf32>
    %146 = arith.addf %136, %145 : vector<210x32xf32>
    %c0_77 = arith.constant 0 : index
    %c1_78 = arith.constant 1 : index
    %c0_79 = arith.constant 0 : index
    %147 = vector.load %arg4[%c0_77, %c1_78, %c0_79] : memref<1x240x1xbf16, #tpu.memory_space<vmem>>, vector<1x210x1xbf16>
    %148 = vector.shape_cast %147 : vector<1x210x1xbf16> to vector<210x1xbf16>
    %c5_80 = arith.constant 5 : index
    %c0_81 = arith.constant 0 : index
    %c0_82 = arith.constant 0 : index
    %149 = vector.load %arg5[%c5_80, %c0_81, %c0_82] : memref<9x1x32xbf16, #tpu.memory_space<vmem>>, vector<1x1x32xbf16>
    %150 = vector.shape_cast %149 : vector<1x1x32xbf16> to vector<1x32xbf16>
    %151 = arith.extf %148 : vector<210x1xbf16> to vector<210x1xf32>
    %152 = arith.extf %150 : vector<1x32xbf16> to vector<1x32xf32>
    %153 = vector.broadcast %151 : vector<210x1xf32> to vector<210x32xf32>
    %154 = vector.broadcast %152 : vector<1x32xf32> to vector<210x32xf32>
    %155 = arith.mulf %153, %154 : vector<210x32xf32>
    %156 = arith.addf %146, %155 : vector<210x32xf32>
    %c0_83 = arith.constant 0 : index
    %c15_84 = arith.constant 15 : index
    %c0_85 = arith.constant 0 : index
    %157 = vector.load %arg2[%c0_83, %c15_84, %c0_85] : memref<1x240x1xbf16, #tpu.memory_space<vmem>>, vector<1x210x1xbf16>
    %158 = vector.shape_cast %157 : vector<1x210x1xbf16> to vector<210x1xbf16>
    %c6_86 = arith.constant 6 : index
    %c0_87 = arith.constant 0 : index
    %c0_88 = arith.constant 0 : index
    %159 = vector.load %arg5[%c6_86, %c0_87, %c0_88] : memref<9x1x32xbf16, #tpu.memory_space<vmem>>, vector<1x1x32xbf16>
    %160 = vector.shape_cast %159 : vector<1x1x32xbf16> to vector<1x32xbf16>
    %161 = arith.extf %158 : vector<210x1xbf16> to vector<210x1xf32>
    %162 = arith.extf %160 : vector<1x32xbf16> to vector<1x32xf32>
    %163 = vector.broadcast %161 : vector<210x1xf32> to vector<210x32xf32>
    %164 = vector.broadcast %162 : vector<1x32xf32> to vector<210x32xf32>
    %165 = arith.mulf %163, %164 : vector<210x32xf32>
    %166 = arith.addf %156, %165 : vector<210x32xf32>
    %c0_89 = arith.constant 0 : index
    %c16_90 = arith.constant 16 : index
    %c0_91 = arith.constant 0 : index
    %167 = vector.load %arg1[%c0_89, %c16_90, %c0_91] : memref<1x240x1xbf16, #tpu.memory_space<vmem>>, vector<1x210x1xbf16>
    %168 = vector.shape_cast %167 : vector<1x210x1xbf16> to vector<210x1xbf16>
    %c7_92 = arith.constant 7 : index
    %c0_93 = arith.constant 0 : index
    %c0_94 = arith.constant 0 : index
    %169 = vector.load %arg5[%c7_92, %c0_93, %c0_94] : memref<9x1x32xbf16, #tpu.memory_space<vmem>>, vector<1x1x32xbf16>
    %170 = vector.shape_cast %169 : vector<1x1x32xbf16> to vector<1x32xbf16>
    %171 = arith.extf %168 : vector<210x1xbf16> to vector<210x1xf32>
    %172 = arith.extf %170 : vector<1x32xbf16> to vector<1x32xf32>
    %173 = vector.broadcast %171 : vector<210x1xf32> to vector<210x32xf32>
    %174 = vector.broadcast %172 : vector<1x32xf32> to vector<210x32xf32>
    %175 = arith.mulf %173, %174 : vector<210x32xf32>
    %176 = arith.addf %166, %175 : vector<210x32xf32>
    %c0_95 = arith.constant 0 : index
    %c16_96 = arith.constant 16 : index
    %c0_97 = arith.constant 0 : index
    %177 = vector.load %arg2[%c0_95, %c16_96, %c0_97] : memref<1x240x1xbf16, #tpu.memory_space<vmem>>, vector<1x210x1xbf16>
    %178 = vector.shape_cast %177 : vector<1x210x1xbf16> to vector<210x1xbf16>
    %c8_98 = arith.constant 8 : index
    %c0_99 = arith.constant 0 : index
    %c0_100 = arith.constant 0 : index
    %179 = vector.load %arg5[%c8_98, %c0_99, %c0_100] : memref<9x1x32xbf16, #tpu.memory_space<vmem>>, vector<1x1x32xbf16>
    %180 = vector.shape_cast %179 : vector<1x1x32xbf16> to vector<1x32xbf16>
    %181 = arith.extf %178 : vector<210x1xbf16> to vector<210x1xf32>
    %182 = arith.extf %180 : vector<1x32xbf16> to vector<1x32xf32>
    %183 = vector.broadcast %181 : vector<210x1xf32> to vector<210x32xf32>
    %184 = vector.broadcast %182 : vector<1x32xf32> to vector<210x32xf32>
    %185 = arith.mulf %183, %184 : vector<210x32xf32>
    %186 = arith.addf %176, %185 : vector<210x32xf32>
    %187 = vector.broadcast %0 : vector<1x32xf32> to vector<210x32xf32>
    %188 = arith.addf %186, %187 : vector<210x32xf32>
    %cst_101 = arith.constant 0.000000e+00 : f32
    %189 = vector.broadcast %cst_101 : f32 to vector<210x32xf32>
    %190 = arith.maximumf %188, %189 : vector<210x32xf32>
    %191 = arith.maximumf %95, %190 : vector<210x32xf32>
    %cst_102 = arith.constant 0.000000e+00 : f32
    %192 = vector.broadcast %cst_102 : f32 to vector<210x32xf32>
    %c0_103 = arith.constant 0 : index
    %c0_104 = arith.constant 0 : index
    %c0_105 = arith.constant 0 : index
    %193 = vector.load %arg3[%c0_103, %c0_104, %c0_105] : memref<1x240x1xbf16, #tpu.memory_space<vmem>>, vector<1x210x1xbf16>
    %194 = vector.shape_cast %193 : vector<1x210x1xbf16> to vector<210x1xbf16>
    %c0_106 = arith.constant 0 : index
    %c0_107 = arith.constant 0 : index
    %c0_108 = arith.constant 0 : index
    %195 = vector.load %arg5[%c0_106, %c0_107, %c0_108] : memref<9x1x32xbf16, #tpu.memory_space<vmem>>, vector<1x1x32xbf16>
    %196 = vector.shape_cast %195 : vector<1x1x32xbf16> to vector<1x32xbf16>
    %197 = arith.extf %194 : vector<210x1xbf16> to vector<210x1xf32>
    %198 = arith.extf %196 : vector<1x32xbf16> to vector<1x32xf32>
    %199 = vector.broadcast %197 : vector<210x1xf32> to vector<210x32xf32>
    %200 = vector.broadcast %198 : vector<1x32xf32> to vector<210x32xf32>
    %201 = arith.mulf %199, %200 : vector<210x32xf32>
    %202 = arith.addf %192, %201 : vector<210x32xf32>
    %c0_109 = arith.constant 0 : index
    %c0_110 = arith.constant 0 : index
    %c0_111 = arith.constant 0 : index
    %203 = vector.load %arg4[%c0_109, %c0_110, %c0_111] : memref<1x240x1xbf16, #tpu.memory_space<vmem>>, vector<1x210x1xbf16>
    %204 = vector.shape_cast %203 : vector<1x210x1xbf16> to vector<210x1xbf16>
    %c1_112 = arith.constant 1 : index
    %c0_113 = arith.constant 0 : index
    %c0_114 = arith.constant 0 : index
    %205 = vector.load %arg5[%c1_112, %c0_113, %c0_114] : memref<9x1x32xbf16, #tpu.memory_space<vmem>>, vector<1x1x32xbf16>
    %206 = vector.shape_cast %205 : vector<1x1x32xbf16> to vector<1x32xbf16>
    %207 = arith.extf %204 : vector<210x1xbf16> to vector<210x1xf32>
    %208 = arith.extf %206 : vector<1x32xbf16> to vector<1x32xf32>
    %209 = vector.broadcast %207 : vector<210x1xf32> to vector<210x32xf32>
    %210 = vector.broadcast %208 : vector<1x32xf32> to vector<210x32xf32>
    %211 = arith.mulf %209, %210 : vector<210x32xf32>
    %212 = arith.addf %202, %211 : vector<210x32xf32>
    %c0_115 = arith.constant 0 : index
    %c1_116 = arith.constant 1 : index
    %c0_117 = arith.constant 0 : index
    %213 = vector.load %arg3[%c0_115, %c1_116, %c0_117] : memref<1x240x1xbf16, #tpu.memory_space<vmem>>, vector<1x210x1xbf16>
    %214 = vector.shape_cast %213 : vector<1x210x1xbf16> to vector<210x1xbf16>
    %c2_118 = arith.constant 2 : index
    %c0_119 = arith.constant 0 : index
    %c0_120 = arith.constant 0 : index
    %215 = vector.load %arg5[%c2_118, %c0_119, %c0_120] : memref<9x1x32xbf16, #tpu.memory_space<vmem>>, vector<1x1x32xbf16>
    %216 = vector.shape_cast %215 : vector<1x1x32xbf16> to vector<1x32xbf16>
    %217 = arith.extf %214 : vector<210x1xbf16> to vector<210x1xf32>
    %218 = arith.extf %216 : vector<1x32xbf16> to vector<1x32xf32>
    %219 = vector.broadcast %217 : vector<210x1xf32> to vector<210x32xf32>
    %220 = vector.broadcast %218 : vector<1x32xf32> to vector<210x32xf32>
    %221 = arith.mulf %219, %220 : vector<210x32xf32>
    %222 = arith.addf %212, %221 : vector<210x32xf32>
    %c0_121 = arith.constant 0 : index
    %c15_122 = arith.constant 15 : index
    %c0_123 = arith.constant 0 : index
    %223 = vector.load %arg1[%c0_121, %c15_122, %c0_123] : memref<1x240x1xbf16, #tpu.memory_space<vmem>>, vector<1x210x1xbf16>
    %224 = vector.shape_cast %223 : vector<1x210x1xbf16> to vector<210x1xbf16>
    %c3_124 = arith.constant 3 : index
    %c0_125 = arith.constant 0 : index
    %c0_126 = arith.constant 0 : index
    %225 = vector.load %arg5[%c3_124, %c0_125, %c0_126] : memref<9x1x32xbf16, #tpu.memory_space<vmem>>, vector<1x1x32xbf16>
    %226 = vector.shape_cast %225 : vector<1x1x32xbf16> to vector<1x32xbf16>
    %227 = arith.extf %224 : vector<210x1xbf16> to vector<210x1xf32>
    %228 = arith.extf %226 : vector<1x32xbf16> to vector<1x32xf32>
    %229 = vector.broadcast %227 : vector<210x1xf32> to vector<210x32xf32>
    %230 = vector.broadcast %228 : vector<1x32xf32> to vector<210x32xf32>
    %231 = arith.mulf %229, %230 : vector<210x32xf32>
    %232 = arith.addf %222, %231 : vector<210x32xf32>
    %c0_127 = arith.constant 0 : index
    %c15_128 = arith.constant 15 : index
    %c0_129 = arith.constant 0 : index
    %233 = vector.load %arg2[%c0_127, %c15_128, %c0_129] : memref<1x240x1xbf16, #tpu.memory_space<vmem>>, vector<1x210x1xbf16>
    %234 = vector.shape_cast %233 : vector<1x210x1xbf16> to vector<210x1xbf16>
    %c4_130 = arith.constant 4 : index
    %c0_131 = arith.constant 0 : index
    %c0_132 = arith.constant 0 : index
    %235 = vector.load %arg5[%c4_130, %c0_131, %c0_132] : memref<9x1x32xbf16, #tpu.memory_space<vmem>>, vector<1x1x32xbf16>
    %236 = vector.shape_cast %235 : vector<1x1x32xbf16> to vector<1x32xbf16>
    %237 = arith.extf %234 : vector<210x1xbf16> to vector<210x1xf32>
    %238 = arith.extf %236 : vector<1x32xbf16> to vector<1x32xf32>
    %239 = vector.broadcast %237 : vector<210x1xf32> to vector<210x32xf32>
    %240 = vector.broadcast %238 : vector<1x32xf32> to vector<210x32xf32>
    %241 = arith.mulf %239, %240 : vector<210x32xf32>
    %242 = arith.addf %232, %241 : vector<210x32xf32>
    %c0_133 = arith.constant 0 : index
    %c16_134 = arith.constant 16 : index
    %c0_135 = arith.constant 0 : index
    %243 = vector.load %arg1[%c0_133, %c16_134, %c0_135] : memref<1x240x1xbf16, #tpu.memory_space<vmem>>, vector<1x210x1xbf16>
    %244 = vector.shape_cast %243 : vector<1x210x1xbf16> to vector<210x1xbf16>
    %c5_136 = arith.constant 5 : index
    %c0_137 = arith.constant 0 : index
    %c0_138 = arith.constant 0 : index
    %245 = vector.load %arg5[%c5_136, %c0_137, %c0_138] : memref<9x1x32xbf16, #tpu.memory_space<vmem>>, vector<1x1x32xbf16>
    %246 = vector.shape_cast %245 : vector<1x1x32xbf16> to vector<1x32xbf16>
    %247 = arith.extf %244 : vector<210x1xbf16> to vector<210x1xf32>
    %248 = arith.extf %246 : vector<1x32xbf16> to vector<1x32xf32>
    %249 = vector.broadcast %247 : vector<210x1xf32> to vector<210x32xf32>
    %250 = vector.broadcast %248 : vector<1x32xf32> to vector<210x32xf32>
    %251 = arith.mulf %249, %250 : vector<210x32xf32>
    %252 = arith.addf %242, %251 : vector<210x32xf32>
    %c0_139 = arith.constant 0 : index
    %c15_140 = arith.constant 15 : index
    %c0_141 = arith.constant 0 : index
    %253 = vector.load %arg3[%c0_139, %c15_140, %c0_141] : memref<1x240x1xbf16, #tpu.memory_space<vmem>>, vector<1x210x1xbf16>
    %254 = vector.shape_cast %253 : vector<1x210x1xbf16> to vector<210x1xbf16>
    %c6_142 = arith.constant 6 : index
    %c0_143 = arith.constant 0 : index
    %c0_144 = arith.constant 0 : index
    %255 = vector.load %arg5[%c6_142, %c0_143, %c0_144] : memref<9x1x32xbf16, #tpu.memory_space<vmem>>, vector<1x1x32xbf16>
    %256 = vector.shape_cast %255 : vector<1x1x32xbf16> to vector<1x32xbf16>
    %257 = arith.extf %254 : vector<210x1xbf16> to vector<210x1xf32>
    %258 = arith.extf %256 : vector<1x32xbf16> to vector<1x32xf32>
    %259 = vector.broadcast %257 : vector<210x1xf32> to vector<210x32xf32>
    %260 = vector.broadcast %258 : vector<1x32xf32> to vector<210x32xf32>
    %261 = arith.mulf %259, %260 : vector<210x32xf32>
    %262 = arith.addf %252, %261 : vector<210x32xf32>
    %c0_145 = arith.constant 0 : index
    %c15_146 = arith.constant 15 : index
    %c0_147 = arith.constant 0 : index
    %263 = vector.load %arg4[%c0_145, %c15_146, %c0_147] : memref<1x240x1xbf16, #tpu.memory_space<vmem>>, vector<1x210x1xbf16>
    %264 = vector.shape_cast %263 : vector<1x210x1xbf16> to vector<210x1xbf16>
    %c7_148 = arith.constant 7 : index
    %c0_149 = arith.constant 0 : index
    %c0_150 = arith.constant 0 : index
    %265 = vector.load %arg5[%c7_148, %c0_149, %c0_150] : memref<9x1x32xbf16, #tpu.memory_space<vmem>>, vector<1x1x32xbf16>
    %266 = vector.shape_cast %265 : vector<1x1x32xbf16> to vector<1x32xbf16>
    %267 = arith.extf %264 : vector<210x1xbf16> to vector<210x1xf32>
    %268 = arith.extf %266 : vector<1x32xbf16> to vector<1x32xf32>
    %269 = vector.broadcast %267 : vector<210x1xf32> to vector<210x32xf32>
    %270 = vector.broadcast %268 : vector<1x32xf32> to vector<210x32xf32>
    %271 = arith.mulf %269, %270 : vector<210x32xf32>
    %272 = arith.addf %262, %271 : vector<210x32xf32>
    %c0_151 = arith.constant 0 : index
    %c16_152 = arith.constant 16 : index
    %c0_153 = arith.constant 0 : index
    %273 = vector.load %arg3[%c0_151, %c16_152, %c0_153] : memref<1x240x1xbf16, #tpu.memory_space<vmem>>, vector<1x210x1xbf16>
    %274 = vector.shape_cast %273 : vector<1x210x1xbf16> to vector<210x1xbf16>
    %c8_154 = arith.constant 8 : index
    %c0_155 = arith.constant 0 : index
    %c0_156 = arith.constant 0 : index
    %275 = vector.load %arg5[%c8_154, %c0_155, %c0_156] : memref<9x1x32xbf16, #tpu.memory_space<vmem>>, vector<1x1x32xbf16>
    %276 = vector.shape_cast %275 : vector<1x1x32xbf16> to vector<1x32xbf16>
    %277 = arith.extf %274 : vector<210x1xbf16> to vector<210x1xf32>
    %278 = arith.extf %276 : vector<1x32xbf16> to vector<1x32xf32>
    %279 = vector.broadcast %277 : vector<210x1xf32> to vector<210x32xf32>
    %280 = vector.broadcast %278 : vector<1x32xf32> to vector<210x32xf32>
    %281 = arith.mulf %279, %280 : vector<210x32xf32>
    %282 = arith.addf %272, %281 : vector<210x32xf32>
    %283 = vector.broadcast %0 : vector<1x32xf32> to vector<210x32xf32>
    %284 = arith.addf %282, %283 : vector<210x32xf32>
    %cst_157 = arith.constant 0.000000e+00 : f32
    %285 = vector.broadcast %cst_157 : f32 to vector<210x32xf32>
    %286 = arith.maximumf %284, %285 : vector<210x32xf32>
    %287 = arith.maximumf %191, %286 : vector<210x32xf32>
    %cst_158 = arith.constant 0.000000e+00 : f32
    %288 = vector.broadcast %cst_158 : f32 to vector<210x32xf32>
    %c0_159 = arith.constant 0 : index
    %c0_160 = arith.constant 0 : index
    %c0_161 = arith.constant 0 : index
    %289 = vector.load %arg4[%c0_159, %c0_160, %c0_161] : memref<1x240x1xbf16, #tpu.memory_space<vmem>>, vector<1x210x1xbf16>
    %290 = vector.shape_cast %289 : vector<1x210x1xbf16> to vector<210x1xbf16>
    %c0_162 = arith.constant 0 : index
    %c0_163 = arith.constant 0 : index
    %c0_164 = arith.constant 0 : index
    %291 = vector.load %arg5[%c0_162, %c0_163, %c0_164] : memref<9x1x32xbf16, #tpu.memory_space<vmem>>, vector<1x1x32xbf16>
    %292 = vector.shape_cast %291 : vector<1x1x32xbf16> to vector<1x32xbf16>
    %293 = arith.extf %290 : vector<210x1xbf16> to vector<210x1xf32>
    %294 = arith.extf %292 : vector<1x32xbf16> to vector<1x32xf32>
    %295 = vector.broadcast %293 : vector<210x1xf32> to vector<210x32xf32>
    %296 = vector.broadcast %294 : vector<1x32xf32> to vector<210x32xf32>
    %297 = arith.mulf %295, %296 : vector<210x32xf32>
    %298 = arith.addf %288, %297 : vector<210x32xf32>
    %c0_165 = arith.constant 0 : index
    %c1_166 = arith.constant 1 : index
    %c0_167 = arith.constant 0 : index
    %299 = vector.load %arg3[%c0_165, %c1_166, %c0_167] : memref<1x240x1xbf16, #tpu.memory_space<vmem>>, vector<1x210x1xbf16>
    %300 = vector.shape_cast %299 : vector<1x210x1xbf16> to vector<210x1xbf16>
    %c1_168 = arith.constant 1 : index
    %c0_169 = arith.constant 0 : index
    %c0_170 = arith.constant 0 : index
    %301 = vector.load %arg5[%c1_168, %c0_169, %c0_170] : memref<9x1x32xbf16, #tpu.memory_space<vmem>>, vector<1x1x32xbf16>
    %302 = vector.shape_cast %301 : vector<1x1x32xbf16> to vector<1x32xbf16>
    %303 = arith.extf %300 : vector<210x1xbf16> to vector<210x1xf32>
    %304 = arith.extf %302 : vector<1x32xbf16> to vector<1x32xf32>
    %305 = vector.broadcast %303 : vector<210x1xf32> to vector<210x32xf32>
    %306 = vector.broadcast %304 : vector<1x32xf32> to vector<210x32xf32>
    %307 = arith.mulf %305, %306 : vector<210x32xf32>
    %308 = arith.addf %298, %307 : vector<210x32xf32>
    %c0_171 = arith.constant 0 : index
    %c1_172 = arith.constant 1 : index
    %c0_173 = arith.constant 0 : index
    %309 = vector.load %arg4[%c0_171, %c1_172, %c0_173] : memref<1x240x1xbf16, #tpu.memory_space<vmem>>, vector<1x210x1xbf16>
    %310 = vector.shape_cast %309 : vector<1x210x1xbf16> to vector<210x1xbf16>
    %c2_174 = arith.constant 2 : index
    %c0_175 = arith.constant 0 : index
    %c0_176 = arith.constant 0 : index
    %311 = vector.load %arg5[%c2_174, %c0_175, %c0_176] : memref<9x1x32xbf16, #tpu.memory_space<vmem>>, vector<1x1x32xbf16>
    %312 = vector.shape_cast %311 : vector<1x1x32xbf16> to vector<1x32xbf16>
    %313 = arith.extf %310 : vector<210x1xbf16> to vector<210x1xf32>
    %314 = arith.extf %312 : vector<1x32xbf16> to vector<1x32xf32>
    %315 = vector.broadcast %313 : vector<210x1xf32> to vector<210x32xf32>
    %316 = vector.broadcast %314 : vector<1x32xf32> to vector<210x32xf32>
    %317 = arith.mulf %315, %316 : vector<210x32xf32>
    %318 = arith.addf %308, %317 : vector<210x32xf32>
    %c0_177 = arith.constant 0 : index
    %c15_178 = arith.constant 15 : index
    %c0_179 = arith.constant 0 : index
    %319 = vector.load %arg2[%c0_177, %c15_178, %c0_179] : memref<1x240x1xbf16, #tpu.memory_space<vmem>>, vector<1x210x1xbf16>
    %320 = vector.shape_cast %319 : vector<1x210x1xbf16> to vector<210x1xbf16>
    %c3_180 = arith.constant 3 : index
    %c0_181 = arith.constant 0 : index
    %c0_182 = arith.constant 0 : index
    %321 = vector.load %arg5[%c3_180, %c0_181, %c0_182] : memref<9x1x32xbf16, #tpu.memory_space<vmem>>, vector<1x1x32xbf16>
    %322 = vector.shape_cast %321 : vector<1x1x32xbf16> to vector<1x32xbf16>
    %323 = arith.extf %320 : vector<210x1xbf16> to vector<210x1xf32>
    %324 = arith.extf %322 : vector<1x32xbf16> to vector<1x32xf32>
    %325 = vector.broadcast %323 : vector<210x1xf32> to vector<210x32xf32>
    %326 = vector.broadcast %324 : vector<1x32xf32> to vector<210x32xf32>
    %327 = arith.mulf %325, %326 : vector<210x32xf32>
    %328 = arith.addf %318, %327 : vector<210x32xf32>
    %c0_183 = arith.constant 0 : index
    %c16_184 = arith.constant 16 : index
    %c0_185 = arith.constant 0 : index
    %329 = vector.load %arg1[%c0_183, %c16_184, %c0_185] : memref<1x240x1xbf16, #tpu.memory_space<vmem>>, vector<1x210x1xbf16>
    %330 = vector.shape_cast %329 : vector<1x210x1xbf16> to vector<210x1xbf16>
    %c4_186 = arith.constant 4 : index
    %c0_187 = arith.constant 0 : index
    %c0_188 = arith.constant 0 : index
    %331 = vector.load %arg5[%c4_186, %c0_187, %c0_188] : memref<9x1x32xbf16, #tpu.memory_space<vmem>>, vector<1x1x32xbf16>
    %332 = vector.shape_cast %331 : vector<1x1x32xbf16> to vector<1x32xbf16>
    %333 = arith.extf %330 : vector<210x1xbf16> to vector<210x1xf32>
    %334 = arith.extf %332 : vector<1x32xbf16> to vector<1x32xf32>
    %335 = vector.broadcast %333 : vector<210x1xf32> to vector<210x32xf32>
    %336 = vector.broadcast %334 : vector<1x32xf32> to vector<210x32xf32>
    %337 = arith.mulf %335, %336 : vector<210x32xf32>
    %338 = arith.addf %328, %337 : vector<210x32xf32>
    %c0_189 = arith.constant 0 : index
    %c16_190 = arith.constant 16 : index
    %c0_191 = arith.constant 0 : index
    %339 = vector.load %arg2[%c0_189, %c16_190, %c0_191] : memref<1x240x1xbf16, #tpu.memory_space<vmem>>, vector<1x210x1xbf16>
    %340 = vector.shape_cast %339 : vector<1x210x1xbf16> to vector<210x1xbf16>
    %c5_192 = arith.constant 5 : index
    %c0_193 = arith.constant 0 : index
    %c0_194 = arith.constant 0 : index
    %341 = vector.load %arg5[%c5_192, %c0_193, %c0_194] : memref<9x1x32xbf16, #tpu.memory_space<vmem>>, vector<1x1x32xbf16>
    %342 = vector.shape_cast %341 : vector<1x1x32xbf16> to vector<1x32xbf16>
    %343 = arith.extf %340 : vector<210x1xbf16> to vector<210x1xf32>
    %344 = arith.extf %342 : vector<1x32xbf16> to vector<1x32xf32>
    %345 = vector.broadcast %343 : vector<210x1xf32> to vector<210x32xf32>
    %346 = vector.broadcast %344 : vector<1x32xf32> to vector<210x32xf32>
    %347 = arith.mulf %345, %346 : vector<210x32xf32>
    %348 = arith.addf %338, %347 : vector<210x32xf32>
    %c0_195 = arith.constant 0 : index
    %c15_196 = arith.constant 15 : index
    %c0_197 = arith.constant 0 : index
    %349 = vector.load %arg4[%c0_195, %c15_196, %c0_197] : memref<1x240x1xbf16, #tpu.memory_space<vmem>>, vector<1x210x1xbf16>
    %350 = vector.shape_cast %349 : vector<1x210x1xbf16> to vector<210x1xbf16>
    %c6_198 = arith.constant 6 : index
    %c0_199 = arith.constant 0 : index
    %c0_200 = arith.constant 0 : index
    %351 = vector.load %arg5[%c6_198, %c0_199, %c0_200] : memref<9x1x32xbf16, #tpu.memory_space<vmem>>, vector<1x1x32xbf16>
    %352 = vector.shape_cast %351 : vector<1x1x32xbf16> to vector<1x32xbf16>
    %353 = arith.extf %350 : vector<210x1xbf16> to vector<210x1xf32>
    %354 = arith.extf %352 : vector<1x32xbf16> to vector<1x32xf32>
    %355 = vector.broadcast %353 : vector<210x1xf32> to vector<210x32xf32>
    %356 = vector.broadcast %354 : vector<1x32xf32> to vector<210x32xf32>
    %357 = arith.mulf %355, %356 : vector<210x32xf32>
    %358 = arith.addf %348, %357 : vector<210x32xf32>
    %c0_201 = arith.constant 0 : index
    %c16_202 = arith.constant 16 : index
    %c0_203 = arith.constant 0 : index
    %359 = vector.load %arg3[%c0_201, %c16_202, %c0_203] : memref<1x240x1xbf16, #tpu.memory_space<vmem>>, vector<1x210x1xbf16>
    %360 = vector.shape_cast %359 : vector<1x210x1xbf16> to vector<210x1xbf16>
    %c7_204 = arith.constant 7 : index
    %c0_205 = arith.constant 0 : index
    %c0_206 = arith.constant 0 : index
    %361 = vector.load %arg5[%c7_204, %c0_205, %c0_206] : memref<9x1x32xbf16, #tpu.memory_space<vmem>>, vector<1x1x32xbf16>
    %362 = vector.shape_cast %361 : vector<1x1x32xbf16> to vector<1x32xbf16>
    %363 = arith.extf %360 : vector<210x1xbf16> to vector<210x1xf32>
    %364 = arith.extf %362 : vector<1x32xbf16> to vector<1x32xf32>
    %365 = vector.broadcast %363 : vector<210x1xf32> to vector<210x32xf32>
    %366 = vector.broadcast %364 : vector<1x32xf32> to vector<210x32xf32>
    %367 = arith.mulf %365, %366 : vector<210x32xf32>
    %368 = arith.addf %358, %367 : vector<210x32xf32>
    %c0_207 = arith.constant 0 : index
    %c16_208 = arith.constant 16 : index
    %c0_209 = arith.constant 0 : index
    %369 = vector.load %arg4[%c0_207, %c16_208, %c0_209] : memref<1x240x1xbf16, #tpu.memory_space<vmem>>, vector<1x210x1xbf16>
    %370 = vector.shape_cast %369 : vector<1x210x1xbf16> to vector<210x1xbf16>
    %c8_210 = arith.constant 8 : index
    %c0_211 = arith.constant 0 : index
    %c0_212 = arith.constant 0 : index
    %371 = vector.load %arg5[%c8_210, %c0_211, %c0_212] : memref<9x1x32xbf16, #tpu.memory_space<vmem>>, vector<1x1x32xbf16>
    %372 = vector.shape_cast %371 : vector<1x1x32xbf16> to vector<1x32xbf16>
    %373 = arith.extf %370 : vector<210x1xbf16> to vector<210x1xf32>
    %374 = arith.extf %372 : vector<1x32xbf16> to vector<1x32xf32>
    %375 = vector.broadcast %373 : vector<210x1xf32> to vector<210x32xf32>
    %376 = vector.broadcast %374 : vector<1x32xf32> to vector<210x32xf32>
    %377 = arith.mulf %375, %376 : vector<210x32xf32>
    %378 = arith.addf %368, %377 : vector<210x32xf32>
    %379 = vector.broadcast %0 : vector<1x32xf32> to vector<210x32xf32>
    %380 = arith.addf %378, %379 : vector<210x32xf32>
    %cst_213 = arith.constant 0.000000e+00 : f32
    %381 = vector.broadcast %cst_213 : f32 to vector<210x32xf32>
    %382 = arith.maximumf %380, %381 : vector<210x32xf32>
    %383 = arith.maximumf %287, %382 : vector<210x32xf32>
    %c0_214 = arith.constant 0 : index
    %c0_215 = arith.constant 0 : index
    %c0_216 = arith.constant 0 : index
    %384 = vector.load %arg7[%c0_214, %c0_215, %c0_216] : memref<1x210x32xf32, #tpu.memory_space<vmem>>, vector<1x210x32xf32>
    %385 = vector.shape_cast %384 : vector<1x210x32xf32> to vector<210x32xf32>
    %386 = vector.shape_cast %383 : vector<210x32xf32> to vector<1x210x32xf32>
    tpu.vector_store %arg7[%c0_214, %c0_215, %c0_216], %386 {strides = array<i32>} : memref<1x210x32xf32, #tpu.memory_space<vmem>>, vector<1x210x32xf32>,
    return
  }
  func.func @transform_0(%arg0: i32) -> (i32, i32, i32) {
    %c0_i32 = arith.constant 0 : i32
    %c0_i32_0 = arith.constant 0 : i32
    %c0_i32_1 = arith.constant 0 : i32
    return %arg0, %c0_i32, %c0_i32_0 : i32, i32, i32
  }
  func.func @transform_1(%arg0: i32) -> (i32, i32, i32) {
    %c0_i32 = arith.constant 0 : i32
    %c0_i32_0 = arith.constant 0 : i32
    %c0_i32_1 = arith.constant 0 : i32
    return %arg0, %c0_i32, %c0_i32_0 : i32, i32, i32
  }
  func.func @transform_2(%arg0: i32) -> (i32, i32, i32) {
    %c0_i32 = arith.constant 0 : i32
    %c0_i32_0 = arith.constant 0 : i32
    %c0_i32_1 = arith.constant 0 : i32
    return %arg0, %c0_i32, %c0_i32_0 : i32, i32, i32
  }
  func.func @transform_3(%arg0: i32) -> (i32, i32, i32) {
    %c0_i32 = arith.constant 0 : i32
    %c0_i32_0 = arith.constant 0 : i32
    %c0_i32_1 = arith.constant 0 : i32
    return %arg0, %c0_i32, %c0_i32_0 : i32, i32, i32
  }
  func.func @transform_4(%arg0: i32) -> (i32, i32, i32) {
    %c0_i32 = arith.constant 0 : i32
    %c0_i32_0 = arith.constant 0 : i32
    %c0_i32_1 = arith.constant 0 : i32
    %c0_i32_2 = arith.constant 0 : i32
    return %c0_i32, %c0_i32_0, %c0_i32_1 : i32, i32, i32
  }
  func.func @transform_5(%arg0: i32) -> (i32, i32) {
    %c0_i32 = arith.constant 0 : i32
    %c0_i32_0 = arith.constant 0 : i32
    %c0_i32_1 = arith.constant 0 : i32
    return %c0_i32, %c0_i32_0 : i32, i32
  }
  func.func @transform_6(%arg0: i32) -> (i32, i32, i32) {
    %c0_i32 = arith.constant 0 : i32
    %c0_i32_0 = arith.constant 0 : i32
    %c0_i32_1 = arith.constant 0 : i32
    return %arg0, %c0_i32, %c0_i32_0 : i32, i32, i32
  }
}

</mosaic_0001>

<llo_original>
// kernel: tpu_custom_call.1
$region0: #{tpu_custom_call.1}
  #allocation0 [shape = 'u32[]', space=smem, size = 0x4, offset = 0x4, fixed_abs, tag = 'smem constant byte address 0x4 - core index']
  #allocation1 [shape = 'u32[144,128]{1,0:T(1,128)}', space=vmem, size = 0x12000, scoped, tag = 'internal scratch']
  %s0 = inlined_call_operand.vmem [shape: bf16[2,240,1], index: 0, kind: input, shape index: {}]
  %s1 = inlined_call_operand.vmem [shape: bf16[2,240,1], index: 1, kind: input, shape index: {}]
  %s2 = inlined_call_operand.vmem [shape: bf16[2,240,1], index: 2, kind: input, shape index: {}]
  %s3 = inlined_call_operand.vmem [shape: bf16[2,240,1], index: 3, kind: input, shape index: {}]
  %s4 = inlined_call_operand.vmem [shape: bf16[9,1,32], index: 4, kind: input, shape index: {}]
  %s5 = inlined_call_operand.vmem [shape: f32[1,32], index: 5, kind: input, shape index: {}]
  %s6 = inlined_call_operand.vmem [shape: f32[2,210,32], index: 6, kind: output, shape index: {}]
  %s7 = sld [smem:[#allocation0]]
  $region57: #{tpu_custom_call.1} parent=0
    _
  %s9 = ssub.s32 1, %s7
  %s10 = scalar_select 0, %s9, %s7
  loop: start=0, step=1, limit=4
  $region2: #{tpu_custom_call.1} parent=0 // loop_pre_header
    _
  $region3: #{tpu_custom_call.1} parent=0 // loop_header
    %s12 = sphi 0, %s16
    %p13 = scmp.ge.s32.totalorder %s12, 4
    %s22 = sphi 0, %s24
    %s25 = sphi 0, %s22
    %s26 = sphi 0, %s25
    %s42 = sphi 0, %s26
    %s48 = sphi 0, %s50
    %s51 = sphi 0, %s48
    %s52 = sphi 0, %s51
    %s68 = sphi 0, %s52
    %s74 = sphi 0, %s76
    %s77 = sphi 0, %s74
    %s78 = sphi 0, %s77
    %s94 = sphi 0, %s78
    %s100 = sphi 0, %s102
    %s103 = sphi 0, %s100
    %s104 = sphi 0, %s103
    %s120 = sphi 0, %s104
    %s124 = sphi 0, %s124
    %s126 = sphi 0, %s124
    %s127 = sphi 0, %s126
    %s141 = sphi 0, %s127
    %s145 = sphi 0, %s145
    %s147 = sphi 0, %s145
    %s148 = sphi 0, %s147
    %s162 = sphi 0, %s148
    %s168 = sphi 0, %s170
    %s171 = sphi 0, %s168
    %s172 = sphi 0, %s171
    %s188 = sphi 0, %s172
  $region4: #{tpu_custom_call.1} parent=0 // loop_header_branch
    %15 = sbr.rel (%p13) target = $region8
  $region5: #{tpu_custom_call.1} parent=0 // loop_body
    %s17 = ssub.s32 %s12, 1
    %s18 = ssub.s32 %s12, 2
    %s19 = sadd.s32 %s12, 1
    %s20 = ssub.s32 %s12, %s19
    %p21 = scmp.eq.s32.totalorder %s20, 0
    %s23 = sadd.s32 %s22, 1
    %s24 = scalar_select %p21, %s22, %s23
    %p27 = pneg %p21
    %p28 = scmp.eq.s32.totalorder %s12, 1
    %p29 = por %p27, %p28
    %p30 = scmp.ne.s32.totalorder %s22, %s25
    %p31 = scmp.eq.s32.totalorder %s12, 0
    %p32 = por %p30, %p31
    %p33 = scmp.ne.s32.totalorder %s22, %s25
    %p34 = scmp.eq.s32.totalorder %s17, 1
    %p35 = por %p33, %p34
    %p36 = scmp.ne.s32.totalorder %s25, %s26
    %p37 = scmp.eq.s32.totalorder %s17, 0
    %p38 = por %p36, %p37
    %p39 = scmp.ne.s32.totalorder %s25, %s26
    %p40 = scmp.eq.s32.totalorder %s18, 1
    %p41 = por %p39, %p40
    %p43 = scmp.ne.s32.totalorder %s26, %s42
    %p44 = scmp.eq.s32.totalorder %s18, 0
    %p45 = por %p43, %p44
    %s46 = ssub.s32 %s12, %s19
    %p47 = scmp.eq.s32.totalorder %s46, 0
    %s49 = sadd.s32 %s48, 1
    %s50 = scalar_select %p47, %s48, %s49
    %p53 = pneg %p47
    %p54 = scmp.eq.s32.totalorder %s12, 1
    %p55 = por %p53, %p54
    %p56 = scmp.ne.s32.totalorder %s48, %s51
    %p57 = scmp.eq.s32.totalorder %s12, 0
    %p58 = por %p56, %p57
    %p59 = scmp.ne.s32.totalorder %s48, %s51
    %p60 = scmp.eq.s32.totalorder %s17, 1
    %p61 = por %p59, %p60
    %p62 = scmp.ne.s32.totalorder %s51, %s52
    %p63 = scmp.eq.s32.totalorder %s17, 0
    %p64 = por %p62, %p63
    %p65 = scmp.ne.s32.totalorder %s51, %s52
    %p66 = scmp.eq.s32.totalorder %s18, 1
    %p67 = por %p65, %p66
    %p69 = scmp.ne.s32.totalorder %s52, %s68
    %p70 = scmp.eq.s32.totalorder %s18, 0
    %p71 = por %p69, %p70
    %s72 = ssub.s32 %s12, %s19
    %p73 = scmp.eq.s32.totalorder %s72, 0
    %s75 = sadd.s32 %s74, 1
    %s76 = scalar_select %p73, %s74, %s75
    %p79 = pneg %p73
    %p80 = scmp.eq.s32.totalorder %s12, 1
    %p81 = por %p79, %p80
    %p82 = scmp.ne.s32.totalorder %s74, %s77
    %p83 = scmp.eq.s32.totalorder %s12, 0
    %p84 = por %p82, %p83
    %p85 = scmp.ne.s32.totalorder %s74, %s77
    %p86 = scmp.eq.s32.totalorder %s17, 1
    %p87 = por %p85, %p86
    %p88 = scmp.ne.s32.totalorder %s77, %s78
    %p89 = scmp.eq.s32.totalorder %s17, 0
    %p90 = por %p88, %p89
    %p91 = scmp.ne.s32.totalorder %s77, %s78
    %p92 = scmp.eq.s32.totalorder %s18, 1
    %p93 = por %p91, %p92
    %p95 = scmp.ne.s32.totalorder %s78, %s94
    %p96 = scmp.eq.s32.totalorder %s18, 0
    %p97 = por %p95, %p96
    %s98 = ssub.s32 %s12, %s19
    %p99 = scmp.eq.s32.totalorder %s98, 0
    %s101 = sadd.s32 %s100, 1
    %s102 = scalar_select %p99, %s100, %s101
    %p105 = pneg %p99
    %p106 = scmp.eq.s32.totalorder %s12, 1
    %p107 = por %p105, %p106
    %p108 = scmp.ne.s32.totalorder %s100, %s103
    %p109 = scmp.eq.s32.totalorder %s12, 0
    %p110 = por %p108, %p109
    %p111 = scmp.ne.s32.totalorder %s100, %s103
    %p112 = scmp.eq.s32.totalorder %s17, 1
    %p113 = por %p111, %p112
    %p114 = scmp.ne.s32.totalorder %s103, %s104
    %p115 = scmp.eq.s32.totalorder %s17, 0
    %p116 = por %p114, %p115
    %p117 = scmp.ne.s32.totalorder %s103, %s104
    %p118 = scmp.eq.s32.totalorder %s18, 1
    %p119 = por %p117, %p118
    %p121 = scmp.ne.s32.totalorder %s104, %s120
    %p122 = scmp.eq.s32.totalorder %s18, 0
    %p123 = por %p121, %p122
    %s125 = sadd.s32 %s124, 1
    %p128 = scmp.eq.s32.totalorder %s12, 1
    %p129 = scmp.ne.s32.totalorder %s124, %s126
    %p130 = scmp.eq.s32.totalorder %s12, 0
    %p131 = por %p129, %p130
    %p132 = scmp.ne.s32.totalorder %s124, %s126
    %p133 = scmp.eq.s32.totalorder %s17, 1
    %p134 = por %p132, %p133
    %p135 = scmp.ne.s32.totalorder %s126, %s127
    %p136 = scmp.eq.s32.totalorder %s17, 0
    %p137 = por %p135, %p136
    %p138 = scmp.ne.s32.totalorder %s126, %s127
    %p139 = scmp.eq.s32.totalorder %s18, 1
    %p140 = por %p138, %p139
    %p142 = scmp.ne.s32.totalorder %s127, %s141
    %p143 = scmp.eq.s32.totalorder %s18, 0
    %p144 = por %p142, %p143
    %s146 = sadd.s32 %s145, 1
    %p149 = scmp.eq.s32.totalorder %s12, 1
    %p150 = scmp.ne.s32.totalorder %s145, %s147
    %p151 = scmp.eq.s32.totalorder %s12, 0
    %p152 = por %p150, %p151
    %p153 = scmp.ne.s32.totalorder %s145, %s147
    %p154 = scmp.eq.s32.totalorder %s17, 1
    %p155 = por %p153, %p154
    %p156 = scmp.ne.s32.totalorder %s147, %s148
    %p157 = scmp.eq.s32.totalorder %s17, 0
    %p158 = por %p156, %p157
    %p159 = scmp.ne.s32.totalorder %s147, %s148
    %p160 = scmp.eq.s32.totalorder %s18, 1
    %p161 = por %p159, %p160
    %p163 = scmp.ne.s32.totalorder %s148, %s162
    %p164 = scmp.eq.s32.totalorder %s18, 0
    %p165 = por %p163, %p164
    %s166 = ssub.s32 %s12, %s19
    %p167 = scmp.eq.s32.totalorder %s166, 0
    %s169 = sadd.s32 %s168, 1
    %s170 = scalar_select %p167, %s168, %s169
    %p173 = pneg %p167
    %p174 = scmp.eq.s32.totalorder %s12, 1
    %p175 = por %p173, %p174
    %p176 = scmp.ne.s32.totalorder %s168, %s171
    %p177 = scmp.eq.s32.totalorder %s12, 0
    %p178 = por %p176, %p177
    %p179 = scmp.ne.s32.totalorder %s168, %s171
    %p180 = scmp.eq.s32.totalorder %s17, 1
    %p181 = por %p179, %p180
    %p182 = scmp.ne.s32.totalorder %s171, %s172
    %p183 = scmp.eq.s32.totalorder %s17, 0
    %p184 = por %p182, %p183
    %p185 = scmp.ne.s32.totalorder %s171, %s172
    %p186 = scmp.eq.s32.totalorder %s18, 1
    %p187 = por %p185, %p186
    %p189 = scmp.ne.s32.totalorder %s172, %s188
    %p190 = scmp.eq.s32.totalorder %s18, 0
    %p191 = por %p189, %p190
    %p192 = scmp.le.s32.totalorder 1, %s12
    %p193 = scmp.lt.s32.totalorder %s12, 3
    %p194 = pnand %p192, %p193
    %p195 = pneg %p194
    // Predicated region
    $region9: #{tpu_custom_call.1} parent=5 // pred_check
      _
    $region10: #{tpu_custom_call.1} parent=5 // pred_check_branch
      %197 = sbr.rel (%p194) target = $region12
    $region11: #{tpu_custom_call.1} parent=5 // pred_region
      %s198 = ssub.s32 %s12, 1
      // Predicated region
      $region13: #{tpu_custom_call.1} parent=11 // pred_check
        %p199 = pneg %p137
      $region14: #{tpu_custom_call.1} parent=11 // pred_check_branch
        %201 = sbr.rel (%p199) target = $region16
      $region15: #{tpu_custom_call.1} parent=11 // pred_region
        _
      $region16: #{tpu_custom_call.1} parent=11 // pred_fallthru
        _
      // Predicated region
      $region17: #{tpu_custom_call.1} parent=11 // pred_check
        %p202 = pneg %p158
      $region18: #{tpu_custom_call.1} parent=11 // pred_check_branch
        %204 = sbr.rel (%p202) target = $region20
      $region19: #{tpu_custom_call.1} parent=11 // pred_region
        _
      $region20: #{tpu_custom_call.1} parent=11 // pred_fallthru
        _
    $region12: #{tpu_custom_call.1} parent=5 // pred_fallthru
      _
    %p205 = scmp.lt.s32.totalorder %s12, 2
    // Predicated region
    $region21: #{tpu_custom_call.1} parent=5 // pred_check
      %p206 = pneg %p205
    $region22: #{tpu_custom_call.1} parent=5 // pred_check_branch
      %208 = sbr.rel (%p206) target = $region24
    $region23: #{tpu_custom_call.1} parent=5 // pred_region
      // Predicated region
      $region25: #{tpu_custom_call.1} parent=23 // pred_check
        %p209 = pneg %p32
      $region26: #{tpu_custom_call.1} parent=23 // pred_check_branch
        %211 = sbr.rel (%p209) target = $region28
      $region27: #{tpu_custom_call.1} parent=23 // pred_region
        %p212 = scmp.lt.s32.totalorder %s12, 1
        %s213 = scalar_select %p212, %s12, 1
        %s214 = smul.addr %s213, 30
        %s215 = smul.addr %s214, 4
        %s216 = scalar_lea.vmem %s0, %s215
      $region28: #{tpu_custom_call.1} parent=23 // pred_fallthru
        _
      // Predicated region
      $region29: #{tpu_custom_call.1} parent=23 // pred_check
        %p217 = pneg %p58
      $region30: #{tpu_custom_call.1} parent=23 // pred_check_branch
        %219 = sbr.rel (%p217) target = $region32
      $region31: #{tpu_custom_call.1} parent=23 // pred_region
        %p220 = scmp.lt.s32.totalorder %s12, 1
        %s221 = scalar_select %p220, %s12, 1
        %s222 = smul.addr %s221, 30
        %s223 = smul.addr %s222, 4
        %s224 = scalar_lea.vmem %s1, %s223
      $region32: #{tpu_custom_call.1} parent=23 // pred_fallthru
        _
      // Predicated region
      $region33: #{tpu_custom_call.1} parent=23 // pred_check
        %p225 = pneg %p84
      $region34: #{tpu_custom_call.1} parent=23 // pred_check_branch
        %227 = sbr.rel (%p225) target = $region36
      $region35: #{tpu_custom_call.1} parent=23 // pred_region
        %p228 = scmp.lt.s32.totalorder %s12, 1
        %s229 = scalar_select %p228, %s12, 1
        %s230 = smul.addr %s229, 30
        %s231 = smul.addr %s230, 4
        %s232 = scalar_lea.vmem %s2, %s231
      $region36: #{tpu_custom_call.1} parent=23 // pred_fallthru
        _
      // Predicated region
      $region37: #{tpu_custom_call.1} parent=23 // pred_check
        %p233 = pneg %p110
      $region38: #{tpu_custom_call.1} parent=23 // pred_check_branch
        %235 = sbr.rel (%p233) target = $region40
      $region39: #{tpu_custom_call.1} parent=23 // pred_region
        %p236 = scmp.lt.s32.totalorder %s12, 1
        %s237 = scalar_select %p236, %s12, 1
        %s238 = smul.addr %s237, 30
        %s239 = smul.addr %s238, 4
        %s240 = scalar_lea.vmem %s3, %s239
      $region40: #{tpu_custom_call.1} parent=23 // pred_fallthru
        _
    $region24: #{tpu_custom_call.1} parent=5 // pred_fallthru
      _
    %p241 = scmp.le.s32.totalorder 1, %s12
    %p242 = scmp.lt.s32.totalorder %s12, 3
    %p243 = pnand %p241, %p242
    %p244 = pneg %p243
    // Predicated region
    $region41: #{tpu_custom_call.1} parent=5 // pred_check
      _
    $region42: #{tpu_custom_call.1} parent=5 // pred_check_branch
      %246 = sbr.rel (%p243) target = $region44
    $region43: #{tpu_custom_call.1} parent=5 // pred_region
      %s247 = ssub.s32 %s12, 1
      %p248 = scmp.lt.s32.totalorder %s17, 1
      %s249 = scalar_select %p248, %s17, 1
      %s250 = smul.addr %s249, 30
      %s251 = smul.addr %s250, 4
      %s252 = scalar_lea.vmem %s0, %s251
      %p253 = pneg %p38
      %p254 = pneg %p35
      %p255 = scmp.lt.s32.totalorder %s17, 1
      %s256 = scalar_select %p255, %s17, 1
      %s257 = smul.addr %s256, 30
      %s258 = smul.addr %s257, 4
      %s259 = scalar_lea.vmem %s1, %s258
      %p260 = pneg %p64
      %p261 = pneg %p61
      %p262 = scmp.lt.s32.totalorder %s17, 1
      %s263 = scalar_select %p262, %s17, 1
      %s264 = smul.addr %s263, 30
      %s265 = smul.addr %s264, 4
      %s266 = scalar_lea.vmem %s2, %s265
      %p267 = pneg %p90
      %p268 = pneg %p87
      %p269 = scmp.lt.s32.totalorder %s17, 1
      %s270 = scalar_select %p269, %s17, 1
      %s271 = smul.addr %s270, 30
      %s272 = smul.addr %s271, 4
      %s273 = scalar_lea.vmem %s3, %s272
      %p274 = pneg %p116
      %p275 = pneg %p113
      %p276 = pneg %p137
      %p277 = pneg %p134
      %p278 = pneg %p158
      %p279 = pneg %p155
      %p280 = pneg %p184
      %p281 = pneg %p181
      %p282 = scmp.lt.s32.totalorder %s17, 1
      %s283 = scalar_select %p282, %s17, 1
      %s284 = smul.addr %s283, 27
      %s285 = smul.addr %s284, 8
      %s286 = scalar_lea.vmem %s6, %s285
      %p287 = scmp.lt.s32.totalorder %s17, 1
      %s288 = scalar_select %p287, %s17, 1
      %s289 = smul.addr %s288, 30
      %s290 = smul.addr %s289, 4
      %s291 = scalar_lea.vmem %s0, %s290
      %p292 = scmp.lt.s32.totalorder %s17, 1
      %s293 = scalar_select %p292, %s17, 1
      %s294 = smul.addr %s293, 30
      %s295 = smul.addr %s294, 4
      %s296 = scalar_lea.vmem %s1, %s295
      %p297 = scmp.lt.s32.totalorder %s17, 1
      %s298 = scalar_select %p297, %s17, 1
      %s299 = smul.addr %s298, 30
      %s300 = smul.addr %s299, 4
      %s301 = scalar_lea.vmem %s2, %s300
      %p302 = scmp.lt.s32.totalorder %s17, 1
      %s303 = scalar_select %p302, %s17, 1
      %s304 = smul.addr %s303, 30
      %s305 = smul.addr %s304, 4
      %s306 = scalar_lea.vmem %s3, %s305
      %p307 = scmp.lt.s32.totalorder %s17, 1
      %s308 = scalar_select %p307, %s17, 1
      %s309 = smul.addr %s308, 27
      %s310 = smul.addr %s309, 8
      %s311 = scalar_lea.vmem %s6, %s310
      %v312 = vld [vmem:[%s5] sm:$0x1]
      %v313 = vld [vmem:[%s291] sm:$0xf]
      %v314 = vld [vmem:[%s291 + $0x4] sm:$0xf]
      %v315 = vld [vmem:[%s291 + $0x8] sm:$0xf]
      %v316 = vld [vmem:[%s291 + $0xc] sm:$0xf]
      %v317 = vld [vmem:[%s291 + $0x10] sm:$0xf]
      %v318 = vld [vmem:[%s291 + $0x14] sm:$0xf]
      %v319 = vld [vmem:[%s291 + $0x18] sm:$0xf]
      %v320 = vld [vmem:[%s291 + $0x1c] sm:$0xf]
      %v321 = vld [vmem:[%s291 + $0x20] sm:$0xf]
      %v322 = vld [vmem:[%s291 + $0x24] sm:$0xf]
      %v323 = vld [vmem:[%s291 + $0x28] sm:$0xf]
      %v324 = vld [vmem:[%s291 + $0x2c] sm:$0xf]
      %v325 = vld [vmem:[%s291 + $0x30] sm:$0xf]
      %v326 = vld [vmem:[%s291 + $0x34] sm:$0xf]
      %v327 = vld [vmem:[%s291 + $0x38] sm:$0xf]
      %v328 = vld [vmem:[%s291 + $0x3c] sm:$0xf]
      %v329 = vld [vmem:[%s291 + $0x40] sm:$0xf]
      %v330 = vld [vmem:[%s291 + $0x44] sm:$0xf]
      %v331 = vld [vmem:[%s291 + $0x48] sm:$0xf]
      %v332 = vld [vmem:[%s291 + $0x4c] sm:$0xf]
      %v333 = vld [vmem:[%s291 + $0x50] sm:$0xf]
      %v334 = vld [vmem:[%s291 + $0x54] sm:$0xf]
      %v335 = vld [vmem:[%s291 + $0x58] sm:$0xf]
      %v336 = vld [vmem:[%s291 + $0x5c] sm:$0xf]
      %v337 = vld [vmem:[%s291 + $0x60] sm:$0xf]
      %v338 = vld [vmem:[%s291 + $0x64] sm:$0xf]
      %v339 = vld [vmem:[%s291 + $0x68] sm:$0x1]
      %v340 = vld [vmem:[%s4] sm:$0x1]
      %v341 = vunpack.c.l.bf16 %v313
      %v342 = vunpack.c.l.bf16 %v314
      %v343 = vunpack.c.l.bf16 %v315
      %v344 = vunpack.c.l.bf16 %v316
      %v345 = vunpack.c.l.bf16 %v317
      %v346 = vunpack.c.l.bf16 %v318
      %v347 = vunpack.c.l.bf16 %v319
      %v348 = vunpack.c.l.bf16 %v320
      %v349 = vunpack.c.l.bf16 %v321
      %v350 = vunpack.c.l.bf16 %v322
      %v351 = vunpack.c.l.bf16 %v323
      %v352 = vunpack.c.l.bf16 %v324
      %v353 = vunpack.c.l.bf16 %v325
      %v354 = vunpack.c.l.bf16 %v326
      %v355 = vunpack.c.l.bf16 %v327
      %v356 = vunpack.c.l.bf16 %v328
      %v357 = vunpack.c.l.bf16 %v329
      %v358 = vunpack.c.l.bf16 %v330
      %v359 = vunpack.c.l.bf16 %v331
      %v360 = vunpack.c.l.bf16 %v332
      %v361 = vunpack.c.l.bf16 %v333
      %v362 = vunpack.c.l.bf16 %v334
      %v363 = vunpack.c.l.bf16 %v335
      %v364 = vunpack.c.l.bf16 %v336
      %v365 = vunpack.c.l.bf16 %v337
      %v366 = vunpack.c.l.bf16 %v338
      %v367 = vunpack.c.l.bf16 %v339
      %v368 = vunpack.c.l.bf16 %v340
      %370 = vset.pattern.permute.xlu0 0
      %371 = vperm.xlu0 %370, %v341
      %v372 = vpop.permute.xlu0 %371
      %375 = vset.pattern.permute.xlu0 0
      %376 = vperm.xlu0 %375, %v342
      %v377 = vpop.permute.xlu0 %376
      %380 = vset.pattern.permute.xlu0 0
      %381 = vperm.xlu0 %380, %v343
      %v382 = vpop.permute.xlu0 %381
      %385 = vset.pattern.permute.xlu0 0
      %386 = vperm.xlu0 %385, %v344
      %v387 = vpop.permute.xlu0 %386
      %390 = vset.pattern.permute.xlu0 0
      %391 = vperm.xlu0 %390, %v345
      %v392 = vpop.permute.xlu0 %391
      %395 = vset.pattern.permute.xlu0 0
      %396 = vperm.xlu0 %395, %v346
      %v397 = vpop.permute.xlu0 %396
      %400 = vset.pattern.permute.xlu0 0
      %401 = vperm.xlu0 %400, %v347
      %v402 = vpop.permute.xlu0 %401
      %405 = vset.pattern.permute.xlu0 0
      %406 = vperm.xlu0 %405, %v348
      %v407 = vpop.permute.xlu0 %406
      %410 = vset.pattern.permute.xlu0 0
      %411 = vperm.xlu0 %410, %v349
      %v412 = vpop.permute.xlu0 %411
      %415 = vset.pattern.permute.xlu0 0
      %416 = vperm.xlu0 %415, %v350
      %v417 = vpop.permute.xlu0 %416
      %420 = vset.pattern.permute.xlu0 0
      %421 = vperm.xlu0 %420, %v351
      %v422 = vpop.permute.xlu0 %421
      %425 = vset.pattern.permute.xlu0 0
      %426 = vperm.xlu0 %425, %v352
      %v427 = vpop.permute.xlu0 %426
      %430 = vset.pattern.permute.xlu0 0
      %431 = vperm.xlu0 %430, %v353
      %v432 = vpop.permute.xlu0 %431
      %435 = vset.pattern.permute.xlu0 0
      %436 = vperm.xlu0 %435, %v354
      %v437 = vpop.permute.xlu0 %436
      %440 = vset.pattern.permute.xlu0 0
      %441 = vperm.xlu0 %440, %v355
      %v442 = vpop.permute.xlu0 %441
      %445 = vset.pattern.permute.xlu0 0
      %446 = vperm.xlu0 %445, %v356
      %v447 = vpop.permute.xlu0 %446
      %450 = vset.pattern.permute.xlu0 0
      %451 = vperm.xlu0 %450, %v357
      %v452 = vpop.permute.xlu0 %451
      %455 = vset.pattern.permute.xlu0 0
      %456 = vperm.xlu0 %455, %v358
      %v457 = vpop.permute.xlu0 %456
      %460 = vset.pattern.permute.xlu0 0
      %461 = vperm.xlu0 %460, %v359
      %v462 = vpop.permute.xlu0 %461
      %465 = vset.pattern.permute.xlu0 0
      %466 = vperm.xlu0 %465, %v360
      %v467 = vpop.permute.xlu0 %466
      %470 = vset.pattern.permute.xlu0 0
      %471 = vperm.xlu0 %470, %v361
      %v472 = vpop.permute.xlu0 %471
      %475 = vset.pattern.permute.xlu0 0
      %476 = vperm.xlu0 %475, %v362
      %v477 = vpop.permute.xlu0 %476
      %480 = vset.pattern.permute.xlu0 0
      %481 = vperm.xlu0 %480, %v363
      %v482 = vpop.permute.xlu0 %481
      %485 = vset.pattern.permute.xlu0 0
      %486 = vperm.xlu0 %485, %v364
      %v487 = vpop.permute.xlu0 %486
      %490 = vset.pattern.permute.xlu0 0
      %491 = vperm.xlu0 %490, %v365
      %v492 = vpop.permute.xlu0 %491
      %495 = vset.pattern.permute.xlu0 0
      %496 = vperm.xlu0 %495, %v366
      %v497 = vpop.permute.xlu0 %496
      %500 = vset.pattern.permute.xlu0 0
      %501 = vperm.xlu0 %500, %v367
      %v502 = vpop.permute.xlu0 %501
      %v504 = vlaneseq
      %v505 = vshrl.u32 %v504, 7
      %v506 = vsub.s32 0, %v505
      %v507 = vrot.slane %v368, %v506
      %v508 = vmul.f32 %v372, %v507
      %v509 = vmul.f32 %v377, %v507
      %v510 = vmul.f32 %v382, %v507
      %v511 = vmul.f32 %v387, %v507
      %v512 = vmul.f32 %v392, %v507
      %v513 = vmul.f32 %v397, %v507
      %v514 = vmul.f32 %v402, %v507
      %v515 = vmul.f32 %v407, %v507
      %v516 = vmul.f32 %v412, %v507
      %v517 = vmul.f32 %v417, %v507
      %v518 = vmul.f32 %v422, %v507
      %v519 = vmul.f32 %v427, %v507
      %v520 = vmul.f32 %v432, %v507
      %v521 = vmul.f32 %v437, %v507
      %v522 = vmul.f32 %v442, %v507
      %v523 = vmul.f32 %v447, %v507
      %v524 = vmul.f32 %v452, %v507
      %v525 = vmul.f32 %v457, %v507
      %v526 = vmul.f32 %v462, %v507
      %v527 = vmul.f32 %v467, %v507
      %v528 = vmul.f32 %v472, %v507
      %v529 = vmul.f32 %v477, %v507
      %v530 = vmul.f32 %v482, %v507
      %v531 = vmul.f32 %v487, %v507
      %v532 = vmul.f32 %v492, %v507
      %v533 = vmul.f32 %v497, %v507
      %v534 = vmul.f32 %v502, %v507
      %v535 = vadd.f32 %v508, 0.0
      %v536 = vadd.f32 %v509, 0.0
      %v537 = vadd.f32 %v510, 0.0
      %v538 = vadd.f32 %v511, 0.0
      %v539 = vadd.f32 %v512, 0.0
      %v540 = vadd.f32 %v513, 0.0
      %v541 = vadd.f32 %v514, 0.0
      %v542 = vadd.f32 %v515, 0.0
      %v543 = vadd.f32 %v516, 0.0
      %v544 = vadd.f32 %v517, 0.0
      %v545 = vadd.f32 %v518, 0.0
      %v546 = vadd.f32 %v519, 0.0
      %v547 = vadd.f32 %v520, 0.0
      %v548 = vadd.f32 %v521, 0.0
      %v549 = vadd.f32 %v522, 0.0
      %v550 = vadd.f32 %v523, 0.0
      %v551 = vadd.f32 %v524, 0.0
      %v552 = vadd.f32 %v525, 0.0
      %v553 = vadd.f32 %v526, 0.0
      %v554 = vadd.f32 %v527, 0.0
      %v555 = vadd.f32 %v528, 0.0
      %v556 = vadd.f32 %v529, 0.0
      %v557 = vadd.f32 %v530, 0.0
      %v558 = vadd.f32 %v531, 0.0
      %v559 = vadd.f32 %v532, 0.0
      %v560 = vadd.f32 %v533, 0.0
      %v561 = vadd.f32 %v534, 0.0
      %v562 = vld [vmem:[%s296] sm:$0xf]
      %v563 = vld [vmem:[%s296 + $0x4] sm:$0xf]
      %v564 = vld [vmem:[%s296 + $0x8] sm:$0xf]
      %v565 = vld [vmem:[%s296 + $0xc] sm:$0xf]
      %v566 = vld [vmem:[%s296 + $0x10] sm:$0xf]
      %v567 = vld [vmem:[%s296 + $0x14] sm:$0xf]
      %v568 = vld [vmem:[%s296 + $0x18] sm:$0xf]
      %v569 = vld [vmem:[%s296 + $0x1c] sm:$0xf]
      %v570 = vld [vmem:[%s296 + $0x20] sm:$0xf]
      %v571 = vld [vmem:[%s296 + $0x24] sm:$0xf]
      %v572 = vld [vmem:[%s296 + $0x28] sm:$0xf]
      %v573 = vld [vmem:[%s296 + $0x2c] sm:$0xf]
      %v574 = vld [vmem:[%s296 + $0x30] sm:$0xf]
      %v575 = vld [vmem:[%s296 + $0x34] sm:$0xf]
      %v576 = vld [vmem:[%s296 + $0x38] sm:$0xf]
      %v577 = vld [vmem:[%s296 + $0x3c] sm:$0xf]
      %v578 = vld [vmem:[%s296 + $0x40] sm:$0xf]
      %v579 = vld [vmem:[%s296 + $0x44] sm:$0xf]
      %v580 = vld [vmem:[%s296 + $0x48] sm:$0xf]
      %v581 = vld [vmem:[%s296 + $0x4c] sm:$0xf]
      %v582 = vld [vmem:[%s296 + $0x50] sm:$0xf]
      %v583 = vld [vmem:[%s296 + $0x54] sm:$0xf]
      %v584 = vld [vmem:[%s296 + $0x58] sm:$0xf]
      %v585 = vld [vmem:[%s296 + $0x5c] sm:$0xf]
      %v586 = vld [vmem:[%s296 + $0x60] sm:$0xf]
      %v587 = vld [vmem:[%s296 + $0x64] sm:$0xf]
      %v588 = vld [vmem:[%s296 + $0x68] sm:$0x1]
      %s589 = scalar_lea.vmem %s4, 1
      %v590 = vld [vmem:[%s589] sm:$0x1]
      %v591 = vunpack.c.l.bf16 %v562
      %v592 = vunpack.c.l.bf16 %v563
      %v593 = vunpack.c.l.bf16 %v564
      %v594 = vunpack.c.l.bf16 %v565
      %v595 = vunpack.c.l.bf16 %v566
      %v596 = vunpack.c.l.bf16 %v567
      %v597 = vunpack.c.l.bf16 %v568
      %v598 = vunpack.c.l.bf16 %v569
      %v599 = vunpack.c.l.bf16 %v570
      %v600 = vunpack.c.l.bf16 %v571
      %v601 = vunpack.c.l.bf16 %v572
      %v602 = vunpack.c.l.bf16 %v573
      %v603 = vunpack.c.l.bf16 %v574
      %v604 = vunpack.c.l.bf16 %v575
      %v605 = vunpack.c.l.bf16 %v576
      %v606 = vunpack.c.l.bf16 %v577
      %v607 = vunpack.c.l.bf16 %v578
      %v608 = vunpack.c.l.bf16 %v579
      %v609 = vunpack.c.l.bf16 %v580
      %v610 = vunpack.c.l.bf16 %v581
      %v611 = vunpack.c.l.bf16 %v582
      %v612 = vunpack.c.l.bf16 %v583
      %v613 = vunpack.c.l.bf16 %v584
      %v614 = vunpack.c.l.bf16 %v585
      %v615 = vunpack.c.l.bf16 %v586
      %v616 = vunpack.c.l.bf16 %v587
      %v617 = vunpack.c.l.bf16 %v588
      %v618 = vunpack.c.l.bf16 %v590
      %620 = vset.pattern.permute.xlu0 0
      %621 = vperm.xlu0 %620, %v591
      %v622 = vpop.permute.xlu0 %621
      %625 = vset.pattern.permute.xlu0 0
      %626 = vperm.xlu0 %625, %v592
      %v627 = vpop.permute.xlu0 %626
      %630 = vset.pattern.permute.xlu0 0
      %631 = vperm.xlu0 %630, %v593
      %v632 = vpop.permute.xlu0 %631
      %635 = vset.pattern.permute.xlu0 0
      %636 = vperm.xlu0 %635, %v594
      %v637 = vpop.permute.xlu0 %636
      %640 = vset.pattern.permute.xlu0 0
      %641 = vperm.xlu0 %640, %v595
      %v642 = vpop.permute.xlu0 %641
      %645 = vset.pattern.permute.xlu0 0
      %646 = vperm.xlu0 %645, %v596
      %v647 = vpop.permute.xlu0 %646
      %650 = vset.pattern.permute.xlu0 0
      %651 = vperm.xlu0 %650, %v597
      %v652 = vpop.permute.xlu0 %651
      %655 = vset.pattern.permute.xlu0 0
      %656 = vperm.xlu0 %655, %v598
      %v657 = vpop.permute.xlu0 %656
      %660 = vset.pattern.permute.xlu0 0
      %661 = vperm.xlu0 %660, %v599
      %v662 = vpop.permute.xlu0 %661
      %665 = vset.pattern.permute.xlu0 0
      %666 = vperm.xlu0 %665, %v600
      %v667 = vpop.permute.xlu0 %666
      %670 = vset.pattern.permute.xlu0 0
      %671 = vperm.xlu0 %670, %v601
      %v672 = vpop.permute.xlu0 %671
      %675 = vset.pattern.permute.xlu0 0
      %676 = vperm.xlu0 %675, %v602
      %v677 = vpop.permute.xlu0 %676
      %680 = vset.pattern.permute.xlu0 0
      %681 = vperm.xlu0 %680, %v603
      %v682 = vpop.permute.xlu0 %681
      %685 = vset.pattern.permute.xlu0 0
      %686 = vperm.xlu0 %685, %v604
      %v687 = vpop.permute.xlu0 %686
      %690 = vset.pattern.permute.xlu0 0
      %691 = vperm.xlu0 %690, %v605
      %v692 = vpop.permute.xlu0 %691
      %695 = vset.pattern.permute.xlu0 0
      %696 = vperm.xlu0 %695, %v606
      %v697 = vpop.permute.xlu0 %696
      %700 = vset.pattern.permute.xlu0 0
      %701 = vperm.xlu0 %700, %v607
      %v702 = vpop.permute.xlu0 %701
      %705 = vset.pattern.permute.xlu0 0
      %706 = vperm.xlu0 %705, %v608
      %v707 = vpop.permute.xlu0 %706
      %710 = vset.pattern.permute.xlu0 0
      %711 = vperm.xlu0 %710, %v609
      %v712 = vpop.permute.xlu0 %711
      %715 = vset.pattern.permute.xlu0 0
      %716 = vperm.xlu0 %715, %v610
      %v717 = vpop.permute.xlu0 %716
      %720 = vset.pattern.permute.xlu0 0
      %721 = vperm.xlu0 %720, %v611
      %v722 = vpop.permute.xlu0 %721
      %725 = vset.pattern.permute.xlu0 0
      %726 = vperm.xlu0 %725, %v612
      %v727 = vpop.permute.xlu0 %726
      %730 = vset.pattern.permute.xlu0 0
      %731 = vperm.xlu0 %730, %v613
      %v732 = vpop.permute.xlu0 %731
      %735 = vset.pattern.permute.xlu0 0
      %736 = vperm.xlu0 %735, %v614
      %v737 = vpop.permute.xlu0 %736
      %740 = vset.pattern.permute.xlu0 0
      %741 = vperm.xlu0 %740, %v615
      %v742 = vpop.permute.xlu0 %741
      %745 = vset.pattern.permute.xlu0 0
      %746 = vperm.xlu0 %745, %v616
      %v747 = vpop.permute.xlu0 %746
      %750 = vset.pattern.permute.xlu0 0
      %751 = vperm.xlu0 %750, %v617
      %v752 = vpop.permute.xlu0 %751
      %v754 = vlaneseq
      %v755 = vshrl.u32 %v754, 7
      %v756 = vsub.s32 0, %v755
      %v757 = vrot.slane %v618, %v756
      %v758 = vmul.f32 %v622, %v757
      %v759 = vmul.f32 %v627, %v757
      %v760 = vmul.f32 %v632, %v757
      %v761 = vmul.f32 %v637, %v757
      %v762 = vmul.f32 %v642, %v757
      %v763 = vmul.f32 %v647, %v757
      %v764 = vmul.f32 %v652, %v757
      %v765 = vmul.f32 %v657, %v757
      %v766 = vmul.f32 %v662, %v757
      %v767 = vmul.f32 %v667, %v757
      %v768 = vmul.f32 %v672, %v757
      %v769 = vmul.f32 %v677, %v757
      %v770 = vmul.f32 %v682, %v757
      %v771 = vmul.f32 %v687, %v757
      %v772 = vmul.f32 %v692, %v757
      %v773 = vmul.f32 %v697, %v757
      %v774 = vmul.f32 %v702, %v757
      %v775 = vmul.f32 %v707, %v757
      %v776 = vmul.f32 %v712, %v757
      %v777 = vmul.f32 %v717, %v757
      %v778 = vmul.f32 %v722, %v757
      %v779 = vmul.f32 %v727, %v757
      %v780 = vmul.f32 %v732, %v757
      %v781 = vmul.f32 %v737, %v757
      %v782 = vmul.f32 %v742, %v757
      %v783 = vmul.f32 %v747, %v757
      %v784 = vmul.f32 %v752, %v757
      %v785 = vadd.f32 %v535, %v758
      %v786 = vadd.f32 %v536, %v759
      %v787 = vadd.f32 %v537, %v760
      %v788 = vadd.f32 %v538, %v761
      %v789 = vadd.f32 %v539, %v762
      %v790 = vadd.f32 %v540, %v763
      %v791 = vadd.f32 %v541, %v764
      %v792 = vadd.f32 %v542, %v765
      %v793 = vadd.f32 %v543, %v766
      %v794 = vadd.f32 %v544, %v767
      %v795 = vadd.f32 %v545, %v768
      %v796 = vadd.f32 %v546, %v769
      %v797 = vadd.f32 %v547, %v770
      %v798 = vadd.f32 %v548, %v771
      %v799 = vadd.f32 %v549, %v772
      %v800 = vadd.f32 %v550, %v773
      %v801 = vadd.f32 %v551, %v774
      %v802 = vadd.f32 %v552, %v775
      %v803 = vadd.f32 %v553, %v776
      %v804 = vadd.f32 %v554, %v777
      %v805 = vadd.f32 %v555, %v778
      %v806 = vadd.f32 %v556, %v779
      %v807 = vadd.f32 %v557, %v780
      %v808 = vadd.f32 %v558, %v781
      %v809 = vadd.f32 %v559, %v782
      %v810 = vadd.f32 %v560, %v783
      %v811 = vadd.f32 %v561, %v784
      %v812 = vld [vmem:[%s291 + $0x68] sm:$0x3]
      %s813 = scalar_lea.vmem %s4, 2
      %v814 = vld [vmem:[%s813] sm:$0x1]
      %v815 = vunpack.c.l.bf16 %v812
      %v816 = vunpack.c.l.bf16 %v814
      %818 = vset.pattern.permute.xlu0 0
      %819 = vperm.xlu0 %818, %v815
      %v820 = vpop.permute.xlu0 %819
      %v822 = vlaneseq
      %v823 = vshrl.u32 %v822, 7
      %v824 = vsub.s32 0, %v823
      %v825 = vrot.slane %v816, %v824
      %v826 = vmul.f32 %v372, %v825
      %v827 = vmul.f32 %v377, %v825
      %v828 = vmul.f32 %v382, %v825
      %v829 = vmul.f32 %v387, %v825
      %v830 = vmul.f32 %v392, %v825
      %v831 = vmul.f32 %v397, %v825
      %v832 = vmul.f32 %v402, %v825
      %v833 = vmul.f32 %v407, %v825
      %v834 = vmul.f32 %v412, %v825
      %v835 = vmul.f32 %v417, %v825
      %v836 = vmul.f32 %v422, %v825
      %v837 = vmul.f32 %v427, %v825
      %v838 = vmul.f32 %v432, %v825
      %v839 = vmul.f32 %v437, %v825
      %v840 = vmul.f32 %v442, %v825
      %v841 = vmul.f32 %v447, %v825
      %v842 = vmul.f32 %v452, %v825
      %v843 = vmul.f32 %v457, %v825
      %v844 = vmul.f32 %v462, %v825
      %v845 = vmul.f32 %v467, %v825
      %v846 = vmul.f32 %v472, %v825
      %v847 = vmul.f32 %v477, %v825
      %v848 = vmul.f32 %v482, %v825
      %v849 = vmul.f32 %v487, %v825
      %v850 = vmul.f32 %v492, %v825
      %v851 = vmul.f32 %v497, %v825
      %v852 = vmul.f32 %v820, %v825
      %vm880 = vcmask 1046528
      %v881 = vrot.slane %v826, 1
      %v882 = vrot.slane %v827, 1
      %v883 = vsel %vm880, %v881, %v882
      %v884 = vrot.slane %v828, 1
      %v885 = vsel %vm880, %v882, %v884
      %v886 = vrot.slane %v829, 1
      %v887 = vsel %vm880, %v884, %v886
      %v888 = vrot.slane %v830, 1
      %v889 = vsel %vm880, %v886, %v888
      %v890 = vrot.slane %v831, 1
      %v891 = vsel %vm880, %v888, %v890
      %v892 = vrot.slane %v832, 1
      %v893 = vsel %vm880, %v890, %v892
      %v894 = vrot.slane %v833, 1
      %v895 = vsel %vm880, %v892, %v894
      %v896 = vrot.slane %v834, 1
      %v897 = vsel %vm880, %v894, %v896
      %v898 = vrot.slane %v835, 1
      %v899 = vsel %vm880, %v896, %v898
      %v900 = vrot.slane %v836, 1
      %v901 = vsel %vm880, %v898, %v900
      %v902 = vrot.slane %v837, 1
      %v903 = vsel %vm880, %v900, %v902
      %v904 = vrot.slane %v838, 1
      %v905 = vsel %vm880, %v902, %v904
      %v906 = vrot.slane %v839, 1
      %v907 = vsel %vm880, %v904, %v906
      %v908 = vrot.slane %v840, 1
      %v909 = vsel %vm880, %v906, %v908
      %v910 = vrot.slane %v841, 1
      %v911 = vsel %vm880, %v908, %v910
      %v912 = vrot.slane %v842, 1
      %v913 = vsel %vm880, %v910, %v912
      %v914 = vrot.slane %v843, 1
      %v915 = vsel %vm880, %v912, %v914
      %v916 = vrot.slane %v844, 1
      %v917 = vsel %vm880, %v914, %v916
      %v918 = vrot.slane %v845, 1
      %v919 = vsel %vm880, %v916, %v918
      %v920 = vrot.slane %v846, 1
      %v921 = vsel %vm880, %v918, %v920
      %v922 = vrot.slane %v847, 1
      %v923 = vsel %vm880, %v920, %v922
      %v924 = vrot.slane %v848, 1
      %v925 = vsel %vm880, %v922, %v924
      %v926 = vrot.slane %v849, 1
      %v927 = vsel %vm880, %v924, %v926
      %v928 = vrot.slane %v850, 1
      %v929 = vsel %vm880, %v926, %v928
      %v930 = vrot.slane %v851, 1
      %v931 = vsel %vm880, %v928, %v930
      %v932 = vrot.slane %v852, 1
      %v933 = vsel %vm880, %v930, %v932
      %v961 = vadd.f32 %v785, %v883
      %v962 = vadd.f32 %v786, %v885
      %v963 = vadd.f32 %v787, %v887
      %v964 = vadd.f32 %v788, %v889
      %v965 = vadd.f32 %v789, %v891
      %v966 = vadd.f32 %v790, %v893
      %v967 = vadd.f32 %v791, %v895
      %v968 = vadd.f32 %v792, %v897
      %v969 = vadd.f32 %v793, %v899
      %v970 = vadd.f32 %v794, %v901
      %v971 = vadd.f32 %v795, %v903
      %v972 = vadd.f32 %v796, %v905
      %v973 = vadd.f32 %v797, %v907
      %v974 = vadd.f32 %v798, %v909
      %v975 = vadd.f32 %v799, %v911
      %v976 = vadd.f32 %v800, %v913
      %v977 = vadd.f32 %v801, %v915
      %v978 = vadd.f32 %v802, %v917
      %v979 = vadd.f32 %v803, %v919
      %v980 = vadd.f32 %v804, %v921
      %v981 = vadd.f32 %v805, %v923
      %v982 = vadd.f32 %v806, %v925
      %v983 = vadd.f32 %v807, %v927
      %v984 = vadd.f32 %v808, %v929
      %v985 = vadd.f32 %v809, %v931
      %v986 = vadd.f32 %v810, %v933
      %v987 = vadd.f32 %v811, %v932
      %v988 = vld [vmem:[%s301] sm:$0xf]
      %v989 = vld [vmem:[%s301 + $0x4] sm:$0xf]
      %v990 = vld [vmem:[%s301 + $0x8] sm:$0xf]
      %v991 = vld [vmem:[%s301 + $0xc] sm:$0xf]
      %v992 = vld [vmem:[%s301 + $0x10] sm:$0xf]
      %v993 = vld [vmem:[%s301 + $0x14] sm:$0xf]
      %v994 = vld [vmem:[%s301 + $0x18] sm:$0xf]
      %v995 = vld [vmem:[%s301 + $0x1c] sm:$0xf]
      %v996 = vld [vmem:[%s301 + $0x20] sm:$0xf]
      %v997 = vld [vmem:[%s301 + $0x24] sm:$0xf]
      %v998 = vld [vmem:[%s301 + $0x28] sm:$0xf]
      %v999 = vld [vmem:[%s301 + $0x2c] sm:$0xf]
      %v1000 = vld [vmem:[%s301 + $0x30] sm:$0xf]
      %v1001 = vld [vmem:[%s301 + $0x34] sm:$0xf]
      %v1002 = vld [vmem:[%s301 + $0x38] sm:$0xf]
      %v1003 = vld [vmem:[%s301 + $0x3c] sm:$0xf]
      %v1004 = vld [vmem:[%s301 + $0x40] sm:$0xf]
      %v1005 = vld [vmem:[%s301 + $0x44] sm:$0xf]
      %v1006 = vld [vmem:[%s301 + $0x48] sm:$0xf]
      %v1007 = vld [vmem:[%s301 + $0x4c] sm:$0xf]
      %v1008 = vld [vmem:[%s301 + $0x50] sm:$0xf]
      %v1009 = vld [vmem:[%s301 + $0x54] sm:$0xf]
      %v1010 = vld [vmem:[%s301 + $0x58] sm:$0xf]
      %v1011 = vld [vmem:[%s301 + $0x5c] sm:$0xf]
      %v1012 = vld [vmem:[%s301 + $0x60] sm:$0xf]
      %v1013 = vld [vmem:[%s301 + $0x64] sm:$0xf]
      %v1014 = vld [vmem:[%s301 + $0x68] sm:$0x1]
      %s1015 = scalar_lea.vmem %s4, 3
      %v1016 = vld [vmem:[%s1015] sm:$0x1]
      %v1017 = vunpack.c.l.bf16 %v988
      %v1018 = vunpack.c.l.bf16 %v989
      %v1019 = vunpack.c.l.bf16 %v990
      %v1020 = vunpack.c.l.bf16 %v991
      %v1021 = vunpack.c.l.bf16 %v992
      %v1022 = vunpack.c.l.bf16 %v993
      %v1023 = vunpack.c.l.bf16 %v994
      %v1024 = vunpack.c.l.bf16 %v995
      %v1025 = vunpack.c.l.bf16 %v996
      %v1026 = vunpack.c.l.bf16 %v997
      %v1027 = vunpack.c.l.bf16 %v998
      %v1028 = vunpack.c.l.bf16 %v999
      %v1029 = vunpack.c.l.bf16 %v1000
      %v1030 = vunpack.c.l.bf16 %v1001
      %v1031 = vunpack.c.l.bf16 %v1002
      %v1032 = vunpack.c.l.bf16 %v1003
      %v1033 = vunpack.c.l.bf16 %v1004
      %v1034 = vunpack.c.l.bf16 %v1005
      %v1035 = vunpack.c.l.bf16 %v1006
      %v1036 = vunpack.c.l.bf16 %v1007
      %v1037 = vunpack.c.l.bf16 %v1008
      %v1038 = vunpack.c.l.bf16 %v1009
      %v1039 = vunpack.c.l.bf16 %v1010
      %v1040 = vunpack.c.l.bf16 %v1011
      %v1041 = vunpack.c.l.bf16 %v1012
      %v1042 = vunpack.c.l.bf16 %v1013
      %v1043 = vunpack.c.l.bf16 %v1014
      %v1044 = vunpack.c.l.bf16 %v1016
      %1046 = vset.pattern.permute.xlu0 0
      %1047 = vperm.xlu0 %1046, %v1017
      %v1048 = vpop.permute.xlu0 %1047
      %1051 = vset.pattern.permute.xlu0 0
      %1052 = vperm.xlu0 %1051, %v1018
      %v1053 = vpop.permute.xlu0 %1052
      %1056 = vset.pattern.permute.xlu0 0
      %1057 = vperm.xlu0 %1056, %v1019
      %v1058 = vpop.permute.xlu0 %1057
      %1061 = vset.pattern.permute.xlu0 0
      %1062 = vperm.xlu0 %1061, %v1020
      %v1063 = vpop.permute.xlu0 %1062
      %1066 = vset.pattern.permute.xlu0 0
      %1067 = vperm.xlu0 %1066, %v1021
      %v1068 = vpop.permute.xlu0 %1067
      %1071 = vset.pattern.permute.xlu0 0
      %1072 = vperm.xlu0 %1071, %v1022
      %v1073 = vpop.permute.xlu0 %1072
      %1076 = vset.pattern.permute.xlu0 0
      %1077 = vperm.xlu0 %1076, %v1023
      %v1078 = vpop.permute.xlu0 %1077
      %1081 = vset.pattern.permute.xlu0 0
      %1082 = vperm.xlu0 %1081, %v1024
      %v1083 = vpop.permute.xlu0 %1082
      %1086 = vset.pattern.permute.xlu0 0
      %1087 = vperm.xlu0 %1086, %v1025
      %v1088 = vpop.permute.xlu0 %1087
      %1091 = vset.pattern.permute.xlu0 0
      %1092 = vperm.xlu0 %1091, %v1026
      %v1093 = vpop.permute.xlu0 %1092
      %1096 = vset.pattern.permute.xlu0 0
      %1097 = vperm.xlu0 %1096, %v1027
      %v1098 = vpop.permute.xlu0 %1097
      %1101 = vset.pattern.permute.xlu0 0
      %1102 = vperm.xlu0 %1101, %v1028
      %v1103 = vpop.permute.xlu0 %1102
      %1106 = vset.pattern.permute.xlu0 0
      %1107 = vperm.xlu0 %1106, %v1029
      %v1108 = vpop.permute.xlu0 %1107
      %1111 = vset.pattern.permute.xlu0 0
      %1112 = vperm.xlu0 %1111, %v1030
      %v1113 = vpop.permute.xlu0 %1112
      %1116 = vset.pattern.permute.xlu0 0
      %1117 = vperm.xlu0 %1116, %v1031
      %v1118 = vpop.permute.xlu0 %1117
      %1121 = vset.pattern.permute.xlu0 0
      %1122 = vperm.xlu0 %1121, %v1032
      %v1123 = vpop.permute.xlu0 %1122
      %1126 = vset.pattern.permute.xlu0 0
      %1127 = vperm.xlu0 %1126, %v1033
      %v1128 = vpop.permute.xlu0 %1127
      %1131 = vset.pattern.permute.xlu0 0
      %1132 = vperm.xlu0 %1131, %v1034
      %v1133 = vpop.permute.xlu0 %1132
      %1136 = vset.pattern.permute.xlu0 0
      %1137 = vperm.xlu0 %1136, %v1035
      %v1138 = vpop.permute.xlu0 %1137
      %1141 = vset.pattern.permute.xlu0 0
      %1142 = vperm.xlu0 %1141, %v1036
      %v1143 = vpop.permute.xlu0 %1142
      %1146 = vset.pattern.permute.xlu0 0
      %1147 = vperm.xlu0 %1146, %v1037
      %v1148 = vpop.permute.xlu0 %1147
      %1151 = vset.pattern.permute.xlu0 0
      %1152 = vperm.xlu0 %1151, %v1038
      %v1153 = vpop.permute.xlu0 %1152
      %1156 = vset.pattern.permute.xlu0 0
      %1157 = vperm.xlu0 %1156, %v1039
      %v1158 = vpop.permute.xlu0 %1157
      %1161 = vset.pattern.permute.xlu0 0
      %1162 = vperm.xlu0 %1161, %v1040
      %v1163 = vpop.permute.xlu0 %1162
      %1166 = vset.pattern.permute.xlu0 0
      %1167 = vperm.xlu0 %1166, %v1041
      %v1168 = vpop.permute.xlu0 %1167
      %1171 = vset.pattern.permute.xlu0 0
      %1172 = vperm.xlu0 %1171, %v1042
      %v1173 = vpop.permute.xlu0 %1172
      %1176 = vset.pattern.permute.xlu0 0
      %1177 = vperm.xlu0 %1176, %v1043
      %v1178 = vpop.permute.xlu0 %1177
      %v1180 = vlaneseq
      %v1181 = vshrl.u32 %v1180, 7
      %v1182 = vsub.s32 0, %v1181
      %v1183 = vrot.slane %v1044, %v1182
      %v1184 = vmul.f32 %v1048, %v1183
      %v1185 = vmul.f32 %v1053, %v1183
      %v1186 = vmul.f32 %v1058, %v1183
      %v1187 = vmul.f32 %v1063, %v1183
      %v1188 = vmul.f32 %v1068, %v1183
      %v1189 = vmul.f32 %v1073, %v1183
      %v1190 = vmul.f32 %v1078, %v1183
      %v1191 = vmul.f32 %v1083, %v1183
      %v1192 = vmul.f32 %v1088, %v1183
      %v1193 = vmul.f32 %v1093, %v1183
      %v1194 = vmul.f32 %v1098, %v1183
      %v1195 = vmul.f32 %v1103, %v1183
      %v1196 = vmul.f32 %v1108, %v1183
      %v1197 = vmul.f32 %v1113, %v1183
      %v1198 = vmul.f32 %v1118, %v1183
      %v1199 = vmul.f32 %v1123, %v1183
      %v1200 = vmul.f32 %v1128, %v1183
      %v1201 = vmul.f32 %v1133, %v1183
      %v1202 = vmul.f32 %v1138, %v1183
      %v1203 = vmul.f32 %v1143, %v1183
      %v1204 = vmul.f32 %v1148, %v1183
      %v1205 = vmul.f32 %v1153, %v1183
      %v1206 = vmul.f32 %v1158, %v1183
      %v1207 = vmul.f32 %v1163, %v1183
      %v1208 = vmul.f32 %v1168, %v1183
      %v1209 = vmul.f32 %v1173, %v1183
      %v1210 = vmul.f32 %v1178, %v1183
      %v1211 = vadd.f32 %v961, %v1184
      %v1212 = vadd.f32 %v962, %v1185
      %v1213 = vadd.f32 %v963, %v1186
      %v1214 = vadd.f32 %v964, %v1187
      %v1215 = vadd.f32 %v965, %v1188
      %v1216 = vadd.f32 %v966, %v1189
      %v1217 = vadd.f32 %v967, %v1190
      %v1218 = vadd.f32 %v968, %v1191
      %v1219 = vadd.f32 %v969, %v1192
      %v1220 = vadd.f32 %v970, %v1193
      %v1221 = vadd.f32 %v971, %v1194
      %v1222 = vadd.f32 %v972, %v1195
      %v1223 = vadd.f32 %v973, %v1196
      %v1224 = vadd.f32 %v974, %v1197
      %v1225 = vadd.f32 %v975, %v1198
      %v1226 = vadd.f32 %v976, %v1199
      %v1227 = vadd.f32 %v977, %v1200
      %v1228 = vadd.f32 %v978, %v1201
      %v1229 = vadd.f32 %v979, %v1202
      %v1230 = vadd.f32 %v980, %v1203
      %v1231 = vadd.f32 %v981, %v1204
      %v1232 = vadd.f32 %v982, %v1205
      %v1233 = vadd.f32 %v983, %v1206
      %v1234 = vadd.f32 %v984, %v1207
      %v1235 = vadd.f32 %v985, %v1208
      %v1236 = vadd.f32 %v986, %v1209
      %v1237 = vadd.f32 %v987, %v1210
      %v1238 = vld [vmem:[%s306] sm:$0xf]
      %v1239 = vld [vmem:[%s306 + $0x4] sm:$0xf]
      %v1240 = vld [vmem:[%s306 + $0x8] sm:$0xf]
      %v1241 = vld [vmem:[%s306 + $0xc] sm:$0xf]
      %v1242 = vld [vmem:[%s306 + $0x10] sm:$0xf]
      %v1243 = vld [vmem:[%s306 + $0x14] sm:$0xf]
      %v1244 = vld [vmem:[%s306 + $0x18] sm:$0xf]
      %v1245 = vld [vmem:[%s306 + $0x1c] sm:$0xf]
      %v1246 = vld [vmem:[%s306 + $0x20] sm:$0xf]
      %v1247 = vld [vmem:[%s306 + $0x24] sm:$0xf]
      %v1248 = vld [vmem:[%s306 + $0x28] sm:$0xf]
      %v1249 = vld [vmem:[%s306 + $0x2c] sm:$0xf]
      %v1250 = vld [vmem:[%s306 + $0x30] sm:$0xf]
      %v1251 = vld [vmem:[%s306 + $0x34] sm:$0xf]
      %v1252 = vld [vmem:[%s306 + $0x38] sm:$0xf]
      %v1253 = vld [vmem:[%s306 + $0x3c] sm:$0xf]
      %v1254 = vld [vmem:[%s306 + $0x40] sm:$0xf]
      %v1255 = vld [vmem:[%s306 + $0x44] sm:$0xf]
      %v1256 = vld [vmem:[%s306 + $0x48] sm:$0xf]
      %v1257 = vld [vmem:[%s306 + $0x4c] sm:$0xf]
      %v1258 = vld [vmem:[%s306 + $0x50] sm:$0xf]
      %v1259 = vld [vmem:[%s306 + $0x54] sm:$0xf]
      %v1260 = vld [vmem:[%s306 + $0x58] sm:$0xf]
      %v1261 = vld [vmem:[%s306 + $0x5c] sm:$0xf]
      %v1262 = vld [vmem:[%s306 + $0x60] sm:$0xf]
      %v1263 = vld [vmem:[%s306 + $0x64] sm:$0xf]
      %v1264 = vld [vmem:[%s306 + $0x68] sm:$0x1]
      %s1265 = scalar_lea.vmem %s4, 4
      %v1266 = vld [vmem:[%s1265] sm:$0x1]
      %v1267 = vunpack.c.l.bf16 %v1238
      %v1268 = vunpack.c.l.bf16 %v1239
      %v1269 = vunpack.c.l.bf16 %v1240
      %v1270 = vunpack.c.l.bf16 %v1241
      %v1271 = vunpack.c.l.bf16 %v1242
      %v1272 = vunpack.c.l.bf16 %v1243
      %v1273 = vunpack.c.l.bf16 %v1244
      %v1274 = vunpack.c.l.bf16 %v1245
      %v1275 = vunpack.c.l.bf16 %v1246
      %v1276 = vunpack.c.l.bf16 %v1247
      %v1277 = vunpack.c.l.bf16 %v1248
      %v1278 = vunpack.c.l.bf16 %v1249
      %v1279 = vunpack.c.l.bf16 %v1250
      %v1280 = vunpack.c.l.bf16 %v1251
      %v1281 = vunpack.c.l.bf16 %v1252
      %v1282 = vunpack.c.l.bf16 %v1253
      %v1283 = vunpack.c.l.bf16 %v1254
      %v1284 = vunpack.c.l.bf16 %v1255
      %v1285 = vunpack.c.l.bf16 %v1256
      %v1286 = vunpack.c.l.bf16 %v1257
      %v1287 = vunpack.c.l.bf16 %v1258
      %v1288 = vunpack.c.l.bf16 %v1259
      %v1289 = vunpack.c.l.bf16 %v1260
      %v1290 = vunpack.c.l.bf16 %v1261
      %v1291 = vunpack.c.l.bf16 %v1262
      %v1292 = vunpack.c.l.bf16 %v1263
      %v1293 = vunpack.c.l.bf16 %v1264
      %v1294 = vunpack.c.l.bf16 %v1266
      %1296 = vset.pattern.permute.xlu0 0
      %1297 = vperm.xlu0 %1296, %v1267
      %v1298 = vpop.permute.xlu0 %1297
      %1301 = vset.pattern.permute.xlu0 0
      %1302 = vperm.xlu0 %1301, %v1268
      %v1303 = vpop.permute.xlu0 %1302
      %1306 = vset.pattern.permute.xlu0 0
      %1307 = vperm.xlu0 %1306, %v1269
      %v1308 = vpop.permute.xlu0 %1307
      %1311 = vset.pattern.permute.xlu0 0
      %1312 = vperm.xlu0 %1311, %v1270
      %v1313 = vpop.permute.xlu0 %1312
      %1316 = vset.pattern.permute.xlu0 0
      %1317 = vperm.xlu0 %1316, %v1271
      %v1318 = vpop.permute.xlu0 %1317
      %1321 = vset.pattern.permute.xlu0 0
      %1322 = vperm.xlu0 %1321, %v1272
      %v1323 = vpop.permute.xlu0 %1322
      %1326 = vset.pattern.permute.xlu0 0
      %1327 = vperm.xlu0 %1326, %v1273
      %v1328 = vpop.permute.xlu0 %1327
      %1331 = vset.pattern.permute.xlu0 0
      %1332 = vperm.xlu0 %1331, %v1274
      %v1333 = vpop.permute.xlu0 %1332
      %1336 = vset.pattern.permute.xlu0 0
      %1337 = vperm.xlu0 %1336, %v1275
      %v1338 = vpop.permute.xlu0 %1337
      %1341 = vset.pattern.permute.xlu0 0
      %1342 = vperm.xlu0 %1341, %v1276
      %v1343 = vpop.permute.xlu0 %1342
      %1346 = vset.pattern.permute.xlu0 0
      %1347 = vperm.xlu0 %1346, %v1277
      %v1348 = vpop.permute.xlu0 %1347
      %1351 = vset.pattern.permute.xlu0 0
      %1352 = vperm.xlu0 %1351, %v1278
      %v1353 = vpop.permute.xlu0 %1352
      %1356 = vset.pattern.permute.xlu0 0
      %1357 = vperm.xlu0 %1356, %v1279
      %v1358 = vpop.permute.xlu0 %1357
      %1361 = vset.pattern.permute.xlu0 0
      %1362 = vperm.xlu0 %1361, %v1280
      %v1363 = vpop.permute.xlu0 %1362
      %1366 = vset.pattern.permute.xlu0 0
      %1367 = vperm.xlu0 %1366, %v1281
      %v1368 = vpop.permute.xlu0 %1367
      %1371 = vset.pattern.permute.xlu0 0
      %1372 = vperm.xlu0 %1371, %v1282
      %v1373 = vpop.permute.xlu0 %1372
      %1376 = vset.pattern.permute.xlu0 0
      %1377 = vperm.xlu0 %1376, %v1283
      %v1378 = vpop.permute.xlu0 %1377
      %1381 = vset.pattern.permute.xlu0 0
      %1382 = vperm.xlu0 %1381, %v1284
      %v1383 = vpop.permute.xlu0 %1382
      %1386 = vset.pattern.permute.xlu0 0
      %1387 = vperm.xlu0 %1386, %v1285
      %v1388 = vpop.permute.xlu0 %1387
      %1391 = vset.pattern.permute.xlu0 0
      %1392 = vperm.xlu0 %1391, %v1286
      %v1393 = vpop.permute.xlu0 %1392
      %1396 = vset.pattern.permute.xlu0 0
      %1397 = vperm.xlu0 %1396, %v1287
      %v1398 = vpop.permute.xlu0 %1397
      %1401 = vset.pattern.permute.xlu0 0
      %1402 = vperm.xlu0 %1401, %v1288
      %v1403 = vpop.permute.xlu0 %1402
      %1406 = vset.pattern.permute.xlu0 0
      %1407 = vperm.xlu0 %1406, %v1289
      %v1408 = vpop.permute.xlu0 %1407
      %1411 = vset.pattern.permute.xlu0 0
      %1412 = vperm.xlu0 %1411, %v1290
      %v1413 = vpop.permute.xlu0 %1412
      %1416 = vset.pattern.permute.xlu0 0
      %1417 = vperm.xlu0 %1416, %v1291
      %v1418 = vpop.permute.xlu0 %1417
      %1421 = vset.pattern.permute.xlu0 0
      %1422 = vperm.xlu0 %1421, %v1292
      %v1423 = vpop.permute.xlu0 %1422
      %1426 = vset.pattern.permute.xlu0 0
      %1427 = vperm.xlu0 %1426, %v1293
      %v1428 = vpop.permute.xlu0 %1427
      %v1430 = vlaneseq
      %v1431 = vshrl.u32 %v1430, 7
      %v1432 = vsub.s32 0, %v1431
      %v1433 = vrot.slane %v1294, %v1432
      %v1434 = vmul.f32 %v1298, %v1433
      %v1435 = vmul.f32 %v1303, %v1433
      %v1436 = vmul.f32 %v1308, %v1433
      %v1437 = vmul.f32 %v1313, %v1433
      %v1438 = vmul.f32 %v1318, %v1433
      %v1439 = vmul.f32 %v1323, %v1433
      %v1440 = vmul.f32 %v1328, %v1433
      %v1441 = vmul.f32 %v1333, %v1433
      %v1442 = vmul.f32 %v1338, %v1433
      %v1443 = vmul.f32 %v1343, %v1433
      %v1444 = vmul.f32 %v1348, %v1433
      %v1445 = vmul.f32 %v1353, %v1433
      %v1446 = vmul.f32 %v1358, %v1433
      %v1447 = vmul.f32 %v1363, %v1433
      %v1448 = vmul.f32 %v1368, %v1433
      %v1449 = vmul.f32 %v1373, %v1433
      %v1450 = vmul.f32 %v1378, %v1433
      %v1451 = vmul.f32 %v1383, %v1433
      %v1452 = vmul.f32 %v1388, %v1433
      %v1453 = vmul.f32 %v1393, %v1433
      %v1454 = vmul.f32 %v1398, %v1433
      %v1455 = vmul.f32 %v1403, %v1433
      %v1456 = vmul.f32 %v1408, %v1433
      %v1457 = vmul.f32 %v1413, %v1433
      %v1458 = vmul.f32 %v1418, %v1433
      %v1459 = vmul.f32 %v1423, %v1433
      %v1460 = vmul.f32 %v1428, %v1433
      %v1461 = vadd.f32 %v1211, %v1434
      %v1462 = vadd.f32 %v1212, %v1435
      %v1463 = vadd.f32 %v1213, %v1436
      %v1464 = vadd.f32 %v1214, %v1437
      %v1465 = vadd.f32 %v1215, %v1438
      %v1466 = vadd.f32 %v1216, %v1439
      %v1467 = vadd.f32 %v1217, %v1440
      %v1468 = vadd.f32 %v1218, %v1441
      %v1469 = vadd.f32 %v1219, %v1442
      %v1470 = vadd.f32 %v1220, %v1443
      %v1471 = vadd.f32 %v1221, %v1444
      %v1472 = vadd.f32 %v1222, %v1445
      %v1473 = vadd.f32 %v1223, %v1446
      %v1474 = vadd.f32 %v1224, %v1447
      %v1475 = vadd.f32 %v1225, %v1448
      %v1476 = vadd.f32 %v1226, %v1449
      %v1477 = vadd.f32 %v1227, %v1450
      %v1478 = vadd.f32 %v1228, %v1451
      %v1479 = vadd.f32 %v1229, %v1452
      %v1480 = vadd.f32 %v1230, %v1453
      %v1481 = vadd.f32 %v1231, %v1454
      %v1482 = vadd.f32 %v1232, %v1455
      %v1483 = vadd.f32 %v1233, %v1456
      %v1484 = vadd.f32 %v1234, %v1457
      %v1485 = vadd.f32 %v1235, %v1458
      %v1486 = vadd.f32 %v1236, %v1459
      %v1487 = vadd.f32 %v1237, %v1460
      %v1488 = vld [vmem:[%s301 + $0x68] sm:$0x3]
      %s1489 = scalar_lea.vmem %s4, 5
      %v1490 = vld [vmem:[%s1489] sm:$0x1]
      %v1491 = vunpack.c.l.bf16 %v1488
      %v1492 = vunpack.c.l.bf16 %v1490
      %1494 = vset.pattern.permute.xlu0 0
      %1495 = vperm.xlu0 %1494, %v1491
      %v1496 = vpop.permute.xlu0 %1495
      %v1498 = vlaneseq
      %v1499 = vshrl.u32 %v1498, 7
      %v1500 = vsub.s32 0, %v1499
      %v1501 = vrot.slane %v1492, %v1500
      %v1502 = vmul.f32 %v1048, %v1501
      %v1503 = vmul.f32 %v1053, %v1501
      %v1504 = vmul.f32 %v1058, %v1501
      %v1505 = vmul.f32 %v1063, %v1501
      %v1506 = vmul.f32 %v1068, %v1501
      %v1507 = vmul.f32 %v1073, %v1501
      %v1508 = vmul.f32 %v1078, %v1501
      %v1509 = vmul.f32 %v1083, %v1501
      %v1510 = vmul.f32 %v1088, %v1501
      %v1511 = vmul.f32 %v1093, %v1501
      %v1512 = vmul.f32 %v1098, %v1501
      %v1513 = vmul.f32 %v1103, %v1501
      %v1514 = vmul.f32 %v1108, %v1501
      %v1515 = vmul.f32 %v1113, %v1501
      %v1516 = vmul.f32 %v1118, %v1501
      %v1517 = vmul.f32 %v1123, %v1501
      %v1518 = vmul.f32 %v1128, %v1501
      %v1519 = vmul.f32 %v1133, %v1501
      %v1520 = vmul.f32 %v1138, %v1501
      %v1521 = vmul.f32 %v1143, %v1501
      %v1522 = vmul.f32 %v1148, %v1501
      %v1523 = vmul.f32 %v1153, %v1501
      %v1524 = vmul.f32 %v1158, %v1501
      %v1525 = vmul.f32 %v1163, %v1501
      %v1526 = vmul.f32 %v1168, %v1501
      %v1527 = vmul.f32 %v1173, %v1501
      %v1528 = vmul.f32 %v1496, %v1501
      %v1556 = vrot.slane %v1502, 1
      %v1557 = vrot.slane %v1503, 1
      %v1558 = vsel %vm880, %v1556, %v1557
      %v1559 = vrot.slane %v1504, 1
      %v1560 = vsel %vm880, %v1557, %v1559
      %v1561 = vrot.slane %v1505, 1
      %v1562 = vsel %vm880, %v1559, %v1561
      %v1563 = vrot.slane %v1506, 1
      %v1564 = vsel %vm880, %v1561, %v1563
      %v1565 = vrot.slane %v1507, 1
      %v1566 = vsel %vm880, %v1563, %v1565
      %v1567 = vrot.slane %v1508, 1
      %v1568 = vsel %vm880, %v1565, %v1567
      %v1569 = vrot.slane %v1509, 1
      %v1570 = vsel %vm880, %v1567, %v1569
      %v1571 = vrot.slane %v1510, 1
      %v1572 = vsel %vm880, %v1569, %v1571
      %v1573 = vrot.slane %v1511, 1
      %v1574 = vsel %vm880, %v1571, %v1573
      %v1575 = vrot.slane %v1512, 1
      %v1576 = vsel %vm880, %v1573, %v1575
      %v1577 = vrot.slane %v1513, 1
      %v1578 = vsel %vm880, %v1575, %v1577
      %v1579 = vrot.slane %v1514, 1
      %v1580 = vsel %vm880, %v1577, %v1579
      %v1581 = vrot.slane %v1515, 1
      %v1582 = vsel %vm880, %v1579, %v1581
      %v1583 = vrot.slane %v1516, 1
      %v1584 = vsel %vm880, %v1581, %v1583
      %v1585 = vrot.slane %v1517, 1
      %v1586 = vsel %vm880, %v1583, %v1585
      %v1587 = vrot.slane %v1518, 1
      %v1588 = vsel %vm880, %v1585, %v1587
      %v1589 = vrot.slane %v1519, 1
      %v1590 = vsel %vm880, %v1587, %v1589
      %v1591 = vrot.slane %v1520, 1
      %v1592 = vsel %vm880, %v1589, %v1591
      %v1593 = vrot.slane %v1521, 1
      %v1594 = vsel %vm880, %v1591, %v1593
      %v1595 = vrot.slane %v1522, 1
      %v1596 = vsel %vm880, %v1593, %v1595
      %v1597 = vrot.slane %v1523, 1
      %v1598 = vsel %vm880, %v1595, %v1597
      %v1599 = vrot.slane %v1524, 1
      %v1600 = vsel %vm880, %v1597, %v1599
      %v1601 = vrot.slane %v1525, 1
      %v1602 = vsel %vm880, %v1599, %v1601
      %v1603 = vrot.slane %v1526, 1
      %v1604 = vsel %vm880, %v1601, %v1603
      %v1605 = vrot.slane %v1527, 1
      %v1606 = vsel %vm880, %v1603, %v1605
      %v1607 = vrot.slane %v1528, 1
      %v1608 = vsel %vm880, %v1605, %v1607
      %v1636 = vadd.f32 %v1461, %v1558
      %v1637 = vadd.f32 %v1462, %v1560
      %v1638 = vadd.f32 %v1463, %v1562
      %v1639 = vadd.f32 %v1464, %v1564
      %v1640 = vadd.f32 %v1465, %v1566
      %v1641 = vadd.f32 %v1466, %v1568
      %v1642 = vadd.f32 %v1467, %v1570
      %v1643 = vadd.f32 %v1468, %v1572
      %v1644 = vadd.f32 %v1469, %v1574
      %v1645 = vadd.f32 %v1470, %v1576
      %v1646 = vadd.f32 %v1471, %v1578
      %v1647 = vadd.f32 %v1472, %v1580
      %v1648 = vadd.f32 %v1473, %v1582
      %v1649 = vadd.f32 %v1474, %v1584
      %v1650 = vadd.f32 %v1475, %v1586
      %v1651 = vadd.f32 %v1476, %v1588
      %v1652 = vadd.f32 %v1477, %v1590
      %v1653 = vadd.f32 %v1478, %v1592
      %v1654 = vadd.f32 %v1479, %v1594
      %v1655 = vadd.f32 %v1480, %v1596
      %v1656 = vadd.f32 %v1481, %v1598
      %v1657 = vadd.f32 %v1482, %v1600
      %v1658 = vadd.f32 %v1483, %v1602
      %v1659 = vadd.f32 %v1484, %v1604
      %v1660 = vadd.f32 %v1485, %v1606
      %v1661 = vadd.f32 %v1486, %v1608
      %v1662 = vadd.f32 %v1487, %v1607
      %v1663 = vld [vmem:[%s291 + $0x4] sm:$0x8]
      %v1664 = vld [vmem:[%s291 + $0x8] sm:$0xf]
      %v1665 = vld [vmem:[%s291 + $0xc] sm:$0xf]
      %v1666 = vld [vmem:[%s291 + $0x10] sm:$0xf]
      %v1667 = vld [vmem:[%s291 + $0x14] sm:$0xf]
      %v1668 = vld [vmem:[%s291 + $0x18] sm:$0xf]
      %v1669 = vld [vmem:[%s291 + $0x1c] sm:$0xf]
      %v1670 = vld [vmem:[%s291 + $0x20] sm:$0xf]
      %v1671 = vld [vmem:[%s291 + $0x24] sm:$0xf]
      %v1672 = vld [vmem:[%s291 + $0x28] sm:$0xf]
      %v1673 = vld [vmem:[%s291 + $0x2c] sm:$0xf]
      %v1674 = vld [vmem:[%s291 + $0x30] sm:$0xf]
      %v1675 = vld [vmem:[%s291 + $0x34] sm:$0xf]
      %v1676 = vld [vmem:[%s291 + $0x38] sm:$0xf]
      %v1677 = vld [vmem:[%s291 + $0x3c] sm:$0xf]
      %v1678 = vld [vmem:[%s291 + $0x40] sm:$0xf]
      %v1679 = vld [vmem:[%s291 + $0x44] sm:$0xf]
      %v1680 = vld [vmem:[%s291 + $0x48] sm:$0xf]
      %v1681 = vld [vmem:[%s291 + $0x4c] sm:$0xf]
      %v1682 = vld [vmem:[%s291 + $0x50] sm:$0xf]
      %v1683 = vld [vmem:[%s291 + $0x54] sm:$0xf]
      %v1684 = vld [vmem:[%s291 + $0x58] sm:$0xf]
      %v1685 = vld [vmem:[%s291 + $0x5c] sm:$0xf]
      %v1686 = vld [vmem:[%s291 + $0x60] sm:$0xf]
      %v1687 = vld [vmem:[%s291 + $0x64] sm:$0xf]
      %v1688 = vld [vmem:[%s291 + $0x68] sm:$0xf]
      %v1689 = vld [vmem:[%s291 + $0x6c] sm:$0xf]
      %v1690 = vld [vmem:[%s291 + $0x70] sm:$0x1]
      %s1691 = scalar_lea.vmem %s4, 6
      %v1692 = vld [vmem:[%s1691] sm:$0x1]
      %v1693 = vunpack.c.l.bf16 %v1663
      %v1694 = vunpack.c.l.bf16 %v1664
      %v1695 = vunpack.c.l.bf16 %v1665
      %v1696 = vunpack.c.l.bf16 %v1666
      %v1697 = vunpack.c.l.bf16 %v1667
      %v1698 = vunpack.c.l.bf16 %v1668
      %v1699 = vunpack.c.l.bf16 %v1669
      %v1700 = vunpack.c.l.bf16 %v1670
      %v1701 = vunpack.c.l.bf16 %v1671
      %v1702 = vunpack.c.l.bf16 %v1672
      %v1703 = vunpack.c.l.bf16 %v1673
      %v1704 = vunpack.c.l.bf16 %v1674
      %v1705 = vunpack.c.l.bf16 %v1675
      %v1706 = vunpack.c.l.bf16 %v1676
      %v1707 = vunpack.c.l.bf16 %v1677
      %v1708 = vunpack.c.l.bf16 %v1678
      %v1709 = vunpack.c.l.bf16 %v1679
      %v1710 = vunpack.c.l.bf16 %v1680
      %v1711 = vunpack.c.l.bf16 %v1681
      %v1712 = vunpack.c.l.bf16 %v1682
      %v1713 = vunpack.c.l.bf16 %v1683
      %v1714 = vunpack.c.l.bf16 %v1684
      %v1715 = vunpack.c.l.bf16 %v1685
      %v1716 = vunpack.c.l.bf16 %v1686
      %v1717 = vunpack.c.l.bf16 %v1687
      %v1718 = vunpack.c.l.bf16 %v1688
      %v1719 = vunpack.c.l.bf16 %v1689
      %v1720 = vunpack.c.l.bf16 %v1690
      %v1721 = vunpack.c.l.bf16 %v1692
      %1723 = vset.pattern.permute.xlu0 0
      %1724 = vperm.xlu0 %1723, %v1693
      %v1725 = vpop.permute.xlu0 %1724
      %1728 = vset.pattern.permute.xlu0 0
      %1729 = vperm.xlu0 %1728, %v1694
      %v1730 = vpop.permute.xlu0 %1729
      %1733 = vset.pattern.permute.xlu0 0
      %1734 = vperm.xlu0 %1733, %v1695
      %v1735 = vpop.permute.xlu0 %1734
      %1738 = vset.pattern.permute.xlu0 0
      %1739 = vperm.xlu0 %1738, %v1696
      %v1740 = vpop.permute.xlu0 %1739
      %1743 = vset.pattern.permute.xlu0 0
      %1744 = vperm.xlu0 %1743, %v1697
      %v1745 = vpop.permute.xlu0 %1744
      %1748 = vset.pattern.permute.xlu0 0
      %1749 = vperm.xlu0 %1748, %v1698
      %v1750 = vpop.permute.xlu0 %1749
      %1753 = vset.pattern.permute.xlu0 0
      %1754 = vperm.xlu0 %1753, %v1699
      %v1755 = vpop.permute.xlu0 %1754
      %1758 = vset.pattern.permute.xlu0 0
      %1759 = vperm.xlu0 %1758, %v1700
      %v1760 = vpop.permute.xlu0 %1759
      %1763 = vset.pattern.permute.xlu0 0
      %1764 = vperm.xlu0 %1763, %v1701
      %v1765 = vpop.permute.xlu0 %1764
      %1768 = vset.pattern.permute.xlu0 0
      %1769 = vperm.xlu0 %1768, %v1702
      %v1770 = vpop.permute.xlu0 %1769
      %1773 = vset.pattern.permute.xlu0 0
      %1774 = vperm.xlu0 %1773, %v1703
      %v1775 = vpop.permute.xlu0 %1774
      %1778 = vset.pattern.permute.xlu0 0
      %1779 = vperm.xlu0 %1778, %v1704
      %v1780 = vpop.permute.xlu0 %1779
      %1783 = vset.pattern.permute.xlu0 0
      %1784 = vperm.xlu0 %1783, %v1705
      %v1785 = vpop.permute.xlu0 %1784
      %1788 = vset.pattern.permute.xlu0 0
      %1789 = vperm.xlu0 %1788, %v1706
      %v1790 = vpop.permute.xlu0 %1789
      %1793 = vset.pattern.permute.xlu0 0
      %1794 = vperm.xlu0 %1793, %v1707
      %v1795 = vpop.permute.xlu0 %1794
      %1798 = vset.pattern.permute.xlu0 0
      %1799 = vperm.xlu0 %1798, %v1708
      %v1800 = vpop.permute.xlu0 %1799
      %1803 = vset.pattern.permute.xlu0 0
      %1804 = vperm.xlu0 %1803, %v1709
      %v1805 = vpop.permute.xlu0 %1804
      %1808 = vset.pattern.permute.xlu0 0
      %1809 = vperm.xlu0 %1808, %v1710
      %v1810 = vpop.permute.xlu0 %1809
      %1813 = vset.pattern.permute.xlu0 0
      %1814 = vperm.xlu0 %1813, %v1711
      %v1815 = vpop.permute.xlu0 %1814
      %1818 = vset.pattern.permute.xlu0 0
      %1819 = vperm.xlu0 %1818, %v1712
      %v1820 = vpop.permute.xlu0 %1819
      %1823 = vset.pattern.permute.xlu0 0
      %1824 = vperm.xlu0 %1823, %v1713
      %v1825 = vpop.permute.xlu0 %1824
      %1828 = vset.pattern.permute.xlu0 0
      %1829 = vperm.xlu0 %1828, %v1714
      %v1830 = vpop.permute.xlu0 %1829
      %1833 = vset.pattern.permute.xlu0 0
      %1834 = vperm.xlu0 %1833, %v1715
      %v1835 = vpop.permute.xlu0 %1834
      %1838 = vset.pattern.permute.xlu0 0
      %1839 = vperm.xlu0 %1838, %v1716
      %v1840 = vpop.permute.xlu0 %1839
      %1843 = vset.pattern.permute.xlu0 0
      %1844 = vperm.xlu0 %1843, %v1717
      %v1845 = vpop.permute.xlu0 %1844
      %1848 = vset.pattern.permute.xlu0 0
      %1849 = vperm.xlu0 %1848, %v1718
      %v1850 = vpop.permute.xlu0 %1849
      %1853 = vset.pattern.permute.xlu0 0
      %1854 = vperm.xlu0 %1853, %v1719
      %v1855 = vpop.permute.xlu0 %1854
      %1858 = vset.pattern.permute.xlu0 0
      %1859 = vperm.xlu0 %1858, %v1720
      %v1860 = vpop.permute.xlu0 %1859
      %v1862 = vlaneseq
      %v1863 = vshrl.u32 %v1862, 7
      %v1864 = vsub.s32 0, %v1863
      %v1865 = vrot.slane %v1721, %v1864
      %v1866 = vmul.f32 %v1725, %v1865
      %v1867 = vmul.f32 %v1730, %v1865
      %v1868 = vmul.f32 %v1735, %v1865
      %v1869 = vmul.f32 %v1740, %v1865
      %v1870 = vmul.f32 %v1745, %v1865
      %v1871 = vmul.f32 %v1750, %v1865
      %v1872 = vmul.f32 %v1755, %v1865
      %v1873 = vmul.f32 %v1760, %v1865
      %v1874 = vmul.f32 %v1765, %v1865
      %v1875 = vmul.f32 %v1770, %v1865
      %v1876 = vmul.f32 %v1775, %v1865
      %v1877 = vmul.f32 %v1780, %v1865
      %v1878 = vmul.f32 %v1785, %v1865
      %v1879 = vmul.f32 %v1790, %v1865
      %v1880 = vmul.f32 %v1795, %v1865
      %v1881 = vmul.f32 %v1800, %v1865
      %v1882 = vmul.f32 %v1805, %v1865
      %v1883 = vmul.f32 %v1810, %v1865
      %v1884 = vmul.f32 %v1815, %v1865
      %v1885 = vmul.f32 %v1820, %v1865
      %v1886 = vmul.f32 %v1825, %v1865
      %v1887 = vmul.f32 %v1830, %v1865
      %v1888 = vmul.f32 %v1835, %v1865
      %v1889 = vmul.f32 %v1840, %v1865
      %v1890 = vmul.f32 %v1845, %v1865
      %v1891 = vmul.f32 %v1850, %v1865
      %v1892 = vmul.f32 %v1855, %v1865
      %v1893 = vmul.f32 %v1860, %v1865
      %vm1922 = vcmask 1040384
      %v1923 = vrot.slane %v1866, 7
      %v1924 = vrot.slane %v1867, 7
      %v1925 = vsel %vm1922, %v1923, %v1924
      %v1926 = vrot.slane %v1868, 7
      %v1927 = vsel %vm1922, %v1924, %v1926
      %v1928 = vrot.slane %v1869, 7
      %v1929 = vsel %vm1922, %v1926, %v1928
      %v1930 = vrot.slane %v1870, 7
      %v1931 = vsel %vm1922, %v1928, %v1930
      %v1932 = vrot.slane %v1871, 7
      %v1933 = vsel %vm1922, %v1930, %v1932
      %v1934 = vrot.slane %v1872, 7
      %v1935 = vsel %vm1922, %v1932, %v1934
      %v1936 = vrot.slane %v1873, 7
      %v1937 = vsel %vm1922, %v1934, %v1936
      %v1938 = vrot.slane %v1874, 7
      %v1939 = vsel %vm1922, %v1936, %v1938
      %v1940 = vrot.slane %v1875, 7
      %v1941 = vsel %vm1922, %v1938, %v1940
      %v1942 = vrot.slane %v1876, 7
      %v1943 = vsel %vm1922, %v1940, %v1942
      %v1944 = vrot.slane %v1877, 7
      %v1945 = vsel %vm1922, %v1942, %v1944
      %v1946 = vrot.slane %v1878, 7
      %v1947 = vsel %vm1922, %v1944, %v1946
      %v1948 = vrot.slane %v1879, 7
      %v1949 = vsel %vm1922, %v1946, %v1948
      %v1950 = vrot.slane %v1880, 7
      %v1951 = vsel %vm1922, %v1948, %v1950
      %v1952 = vrot.slane %v1881, 7
      %v1953 = vsel %vm1922, %v1950, %v1952
      %v1954 = vrot.slane %v1882, 7
      %v1955 = vsel %vm1922, %v1952, %v1954
      %v1956 = vrot.slane %v1883, 7
      %v1957 = vsel %vm1922, %v1954, %v1956
      %v1958 = vrot.slane %v1884, 7
      %v1959 = vsel %vm1922, %v1956, %v1958
      %v1960 = vrot.slane %v1885, 7
      %v1961 = vsel %vm1922, %v1958, %v1960
      %v1962 = vrot.slane %v1886, 7
      %v1963 = vsel %vm1922, %v1960, %v1962
      %v1964 = vrot.slane %v1887, 7
      %v1965 = vsel %vm1922, %v1962, %v1964
      %v1966 = vrot.slane %v1888, 7
      %v1967 = vsel %vm1922, %v1964, %v1966
      %v1968 = vrot.slane %v1889, 7
      %v1969 = vsel %vm1922, %v1966, %v1968
      %v1970 = vrot.slane %v1890, 7
      %v1971 = vsel %vm1922, %v1968, %v1970
      %v1972 = vrot.slane %v1891, 7
      %v1973 = vsel %vm1922, %v1970, %v1972
      %v1974 = vrot.slane %v1892, 7
      %v1975 = vsel %vm1922, %v1972, %v1974
      %v1976 = vrot.slane %v1893, 7
      %v1977 = vsel %vm1922, %v1974, %v1976
      %v2005 = vadd.f32 %v1636, %v1925
      %v2006 = vadd.f32 %v1637, %v1927
      %v2007 = vadd.f32 %v1638, %v1929
      %v2008 = vadd.f32 %v1639, %v1931
      %v2009 = vadd.f32 %v1640, %v1933
      %v2010 = vadd.f32 %v1641, %v1935
      %v2011 = vadd.f32 %v1642, %v1937
      %v2012 = vadd.f32 %v1643, %v1939
      %v2013 = vadd.f32 %v1644, %v1941
      %v2014 = vadd.f32 %v1645, %v1943
      %v2015 = vadd.f32 %v1646, %v1945
      %v2016 = vadd.f32 %v1647, %v1947
      %v2017 = vadd.f32 %v1648, %v1949
      %v2018 = vadd.f32 %v1649, %v1951
      %v2019 = vadd.f32 %v1650, %v1953
      %v2020 = vadd.f32 %v1651, %v1955
      %v2021 = vadd.f32 %v1652, %v1957
      %v2022 = vadd.f32 %v1653, %v1959
      %v2023 = vadd.f32 %v1654, %v1961
      %v2024 = vadd.f32 %v1655, %v1963
      %v2025 = vadd.f32 %v1656, %v1965
      %v2026 = vadd.f32 %v1657, %v1967
      %v2027 = vadd.f32 %v1658, %v1969
      %v2028 = vadd.f32 %v1659, %v1971
      %v2029 = vadd.f32 %v1660, %v1973
      %v2030 = vadd.f32 %v1661, %v1975
      %v2031 = vadd.f32 %v1662, %v1977
      %v2032 = vld [vmem:[%s296 + $0x4] sm:$0x8]
      %v2033 = vld [vmem:[%s296 + $0x8] sm:$0xf]
      %v2034 = vld [vmem:[%s296 + $0xc] sm:$0xf]
      %v2035 = vld [vmem:[%s296 + $0x10] sm:$0xf]
      %v2036 = vld [vmem:[%s296 + $0x14] sm:$0xf]
      %v2037 = vld [vmem:[%s296 + $0x18] sm:$0xf]
      %v2038 = vld [vmem:[%s296 + $0x1c] sm:$0xf]
      %v2039 = vld [vmem:[%s296 + $0x20] sm:$0xf]
      %v2040 = vld [vmem:[%s296 + $0x24] sm:$0xf]
      %v2041 = vld [vmem:[%s296 + $0x28] sm:$0xf]
      %v2042 = vld [vmem:[%s296 + $0x2c] sm:$0xf]
      %v2043 = vld [vmem:[%s296 + $0x30] sm:$0xf]
      %v2044 = vld [vmem:[%s296 + $0x34] sm:$0xf]
      %v2045 = vld [vmem:[%s296 + $0x38] sm:$0xf]
      %v2046 = vld [vmem:[%s296 + $0x3c] sm:$0xf]
      %v2047 = vld [vmem:[%s296 + $0x40] sm:$0xf]
      %v2048 = vld [vmem:[%s296 + $0x44] sm:$0xf]
      %v2049 = vld [vmem:[%s296 + $0x48] sm:$0xf]
      %v2050 = vld [vmem:[%s296 + $0x4c] sm:$0xf]
      %v2051 = vld [vmem:[%s296 + $0x50] sm:$0xf]
      %v2052 = vld [vmem:[%s296 + $0x54] sm:$0xf]
      %v2053 = vld [vmem:[%s296 + $0x58] sm:$0xf]
      %v2054 = vld [vmem:[%s296 + $0x5c] sm:$0xf]
      %v2055 = vld [vmem:[%s296 + $0x60] sm:$0xf]
      %v2056 = vld [vmem:[%s296 + $0x64] sm:$0xf]
      %v2057 = vld [vmem:[%s296 + $0x68] sm:$0xf]
      %v2058 = vld [vmem:[%s296 + $0x6c] sm:$0xf]
      %v2059 = vld [vmem:[%s296 + $0x70] sm:$0x1]
      %s2060 = scalar_lea.vmem %s4, 7
      %v2061 = vld [vmem:[%s2060] sm:$0x1]
      %v2062 = vunpack.c.l.bf16 %v2032
      %v2063 = vunpack.c.l.bf16 %v2033
      %v2064 = vunpack.c.l.bf16 %v2034
      %v2065 = vunpack.c.l.bf16 %v2035
      %v2066 = vunpack.c.l.bf16 %v2036
      %v2067 = vunpack.c.l.bf16 %v2037
      %v2068 = vunpack.c.l.bf16 %v2038
      %v2069 = vunpack.c.l.bf16 %v2039
      %v2070 = vunpack.c.l.bf16 %v2040
      %v2071 = vunpack.c.l.bf16 %v2041
      %v2072 = vunpack.c.l.bf16 %v2042
      %v2073 = vunpack.c.l.bf16 %v2043
      %v2074 = vunpack.c.l.bf16 %v2044
      %v2075 = vunpack.c.l.bf16 %v2045
      %v2076 = vunpack.c.l.bf16 %v2046
      %v2077 = vunpack.c.l.bf16 %v2047
      %v2078 = vunpack.c.l.bf16 %v2048
      %v2079 = vunpack.c.l.bf16 %v2049
      %v2080 = vunpack.c.l.bf16 %v2050
      %v2081 = vunpack.c.l.bf16 %v2051
      %v2082 = vunpack.c.l.bf16 %v2052
      %v2083 = vunpack.c.l.bf16 %v2053
      %v2084 = vunpack.c.l.bf16 %v2054
      %v2085 = vunpack.c.l.bf16 %v2055
      %v2086 = vunpack.c.l.bf16 %v2056
      %v2087 = vunpack.c.l.bf16 %v2057
      %v2088 = vunpack.c.l.bf16 %v2058
      %v2089 = vunpack.c.l.bf16 %v2059
      %v2090 = vunpack.c.l.bf16 %v2061
      %2092 = vset.pattern.permute.xlu0 0
      %2093 = vperm.xlu0 %2092, %v2062
      %v2094 = vpop.permute.xlu0 %2093
      %2097 = vset.pattern.permute.xlu0 0
      %2098 = vperm.xlu0 %2097, %v2063
      %v2099 = vpop.permute.xlu0 %2098
      %2102 = vset.pattern.permute.xlu0 0
      %2103 = vperm.xlu0 %2102, %v2064
      %v2104 = vpop.permute.xlu0 %2103
      %2107 = vset.pattern.permute.xlu0 0
      %2108 = vperm.xlu0 %2107, %v2065
      %v2109 = vpop.permute.xlu0 %2108
      %2112 = vset.pattern.permute.xlu0 0
      %2113 = vperm.xlu0 %2112, %v2066
      %v2114 = vpop.permute.xlu0 %2113
      %2117 = vset.pattern.permute.xlu0 0
      %2118 = vperm.xlu0 %2117, %v2067
      %v2119 = vpop.permute.xlu0 %2118
      %2122 = vset.pattern.permute.xlu0 0
      %2123 = vperm.xlu0 %2122, %v2068
      %v2124 = vpop.permute.xlu0 %2123
      %2127 = vset.pattern.permute.xlu0 0
      %2128 = vperm.xlu0 %2127, %v2069
      %v2129 = vpop.permute.xlu0 %2128
      %2132 = vset.pattern.permute.xlu0 0
      %2133 = vperm.xlu0 %2132, %v2070
      %v2134 = vpop.permute.xlu0 %2133
      %2137 = vset.pattern.permute.xlu0 0
      %2138 = vperm.xlu0 %2137, %v2071
      %v2139 = vpop.permute.xlu0 %2138
      %2142 = vset.pattern.permute.xlu0 0
      %2143 = vperm.xlu0 %2142, %v2072
      %v2144 = vpop.permute.xlu0 %2143
      %2147 = vset.pattern.permute.xlu0 0
      %2148 = vperm.xlu0 %2147, %v2073
      %v2149 = vpop.permute.xlu0 %2148
      %2152 = vset.pattern.permute.xlu0 0
      %2153 = vperm.xlu0 %2152, %v2074
      %v2154 = vpop.permute.xlu0 %2153
      %2157 = vset.pattern.permute.xlu0 0
      %2158 = vperm.xlu0 %2157, %v2075
      %v2159 = vpop.permute.xlu0 %2158
      %2162 = vset.pattern.permute.xlu0 0
      %2163 = vperm.xlu0 %2162, %v2076
      %v2164 = vpop.permute.xlu0 %2163
      %2167 = vset.pattern.permute.xlu0 0
      %2168 = vperm.xlu0 %2167, %v2077
      %v2169 = vpop.permute.xlu0 %2168
      %2172 = vset.pattern.permute.xlu0 0
      %2173 = vperm.xlu0 %2172, %v2078
      %v2174 = vpop.permute.xlu0 %2173
      %2177 = vset.pattern.permute.xlu0 0
      %2178 = vperm.xlu0 %2177, %v2079
      %v2179 = vpop.permute.xlu0 %2178
      %2182 = vset.pattern.permute.xlu0 0
      %2183 = vperm.xlu0 %2182, %v2080
      %v2184 = vpop.permute.xlu0 %2183
      %2187 = vset.pattern.permute.xlu0 0
      %2188 = vperm.xlu0 %2187, %v2081
      %v2189 = vpop.permute.xlu0 %2188
      %2192 = vset.pattern.permute.xlu0 0
      %2193 = vperm.xlu0 %2192, %v2082
      %v2194 = vpop.permute.xlu0 %2193
      %2197 = vset.pattern.permute.xlu0 0
      %2198 = vperm.xlu0 %2197, %v2083
      %v2199 = vpop.permute.xlu0 %2198
      %2202 = vset.pattern.permute.xlu0 0
      %2203 = vperm.xlu0 %2202, %v2084
      %v2204 = vpop.permute.xlu0 %2203
      %2207 = vset.pattern.permute.xlu0 0
      %2208 = vperm.xlu0 %2207, %v2085
      %v2209 = vpop.permute.xlu0 %2208
      %2212 = vset.pattern.permute.xlu0 0
      %2213 = vperm.xlu0 %2212, %v2086
      %v2214 = vpop.permute.xlu0 %2213
      %2217 = vset.pattern.permute.xlu0 0
      %2218 = vperm.xlu0 %2217, %v2087
      %v2219 = vpop.permute.xlu0 %2218
      %2222 = vset.pattern.permute.xlu0 0
      %2223 = vperm.xlu0 %2222, %v2088
      %v2224 = vpop.permute.xlu0 %2223
      %2227 = vset.pattern.permute.xlu0 0
      %2228 = vperm.xlu0 %2227, %v2089
      %v2229 = vpop.permute.xlu0 %2228
      %v2231 = vlaneseq
      %v2232 = vshrl.u32 %v2231, 7
      %v2233 = vsub.s32 0, %v2232
      %v2234 = vrot.slane %v2090, %v2233
      %v2235 = vmul.f32 %v2094, %v2234
      %v2236 = vmul.f32 %v2099, %v2234
      %v2237 = vmul.f32 %v2104, %v2234
      %v2238 = vmul.f32 %v2109, %v2234
      %v2239 = vmul.f32 %v2114, %v2234
      %v2240 = vmul.f32 %v2119, %v2234
      %v2241 = vmul.f32 %v2124, %v2234
      %v2242 = vmul.f32 %v2129, %v2234
      %v2243 = vmul.f32 %v2134, %v2234
      %v2244 = vmul.f32 %v2139, %v2234
      %v2245 = vmul.f32 %v2144, %v2234
      %v2246 = vmul.f32 %v2149, %v2234
      %v2247 = vmul.f32 %v2154, %v2234
      %v2248 = vmul.f32 %v2159, %v2234
      %v2249 = vmul.f32 %v2164, %v2234
      %v2250 = vmul.f32 %v2169, %v2234
      %v2251 = vmul.f32 %v2174, %v2234
      %v2252 = vmul.f32 %v2179, %v2234
      %v2253 = vmul.f32 %v2184, %v2234
      %v2254 = vmul.f32 %v2189, %v2234
      %v2255 = vmul.f32 %v2194, %v2234
      %v2256 = vmul.f32 %v2199, %v2234
      %v2257 = vmul.f32 %v2204, %v2234
      %v2258 = vmul.f32 %v2209, %v2234
      %v2259 = vmul.f32 %v2214, %v2234
      %v2260 = vmul.f32 %v2219, %v2234
      %v2261 = vmul.f32 %v2224, %v2234
      %v2262 = vmul.f32 %v2229, %v2234
      %v2291 = vrot.slane %v2235, 7
      %v2292 = vrot.slane %v2236, 7
      %v2293 = vsel %vm1922, %v2291, %v2292
      %v2294 = vrot.slane %v2237, 7
      %v2295 = vsel %vm1922, %v2292, %v2294
      %v2296 = vrot.slane %v2238, 7
      %v2297 = vsel %vm1922, %v2294, %v2296
      %v2298 = vrot.slane %v2239, 7
      %v2299 = vsel %vm1922, %v2296, %v2298
      %v2300 = vrot.slane %v2240, 7
      %v2301 = vsel %vm1922, %v2298, %v2300
      %v2302 = vrot.slane %v2241, 7
      %v2303 = vsel %vm1922, %v2300, %v2302
      %v2304 = vrot.slane %v2242, 7
      %v2305 = vsel %vm1922, %v2302, %v2304
      %v2306 = vrot.slane %v2243, 7
      %v2307 = vsel %vm1922, %v2304, %v2306
      %v2308 = vrot.slane %v2244, 7
      %v2309 = vsel %vm1922, %v2306, %v2308
      %v2310 = vrot.slane %v2245, 7
      %v2311 = vsel %vm1922, %v2308, %v2310
      %v2312 = vrot.slane %v2246, 7
      %v2313 = vsel %vm1922, %v2310, %v2312
      %v2314 = vrot.slane %v2247, 7
      %v2315 = vsel %vm1922, %v2312, %v2314
      %v2316 = vrot.slane %v2248, 7
      %v2317 = vsel %vm1922, %v2314, %v2316
      %v2318 = vrot.slane %v2249, 7
      %v2319 = vsel %vm1922, %v2316, %v2318
      %v2320 = vrot.slane %v2250, 7
      %v2321 = vsel %vm1922, %v2318, %v2320
      %v2322 = vrot.slane %v2251, 7
      %v2323 = vsel %vm1922, %v2320, %v2322
      %v2324 = vrot.slane %v2252, 7
      %v2325 = vsel %vm1922, %v2322, %v2324
      %v2326 = vrot.slane %v2253, 7
      %v2327 = vsel %vm1922, %v2324, %v2326
      %v2328 = vrot.slane %v2254, 7
      %v2329 = vsel %vm1922, %v2326, %v2328
      %v2330 = vrot.slane %v2255, 7
      %v2331 = vsel %vm1922, %v2328, %v2330
      %v2332 = vrot.slane %v2256, 7
      %v2333 = vsel %vm1922, %v2330, %v2332
      %v2334 = vrot.slane %v2257, 7
      %v2335 = vsel %vm1922, %v2332, %v2334
      %v2336 = vrot.slane %v2258, 7
      %v2337 = vsel %vm1922, %v2334, %v2336
      %v2338 = vrot.slane %v2259, 7
      %v2339 = vsel %vm1922, %v2336, %v2338
      %v2340 = vrot.slane %v2260, 7
      %v2341 = vsel %vm1922, %v2338, %v2340
      %v2342 = vrot.slane %v2261, 7
      %v2343 = vsel %vm1922, %v2340, %v2342
      %v2344 = vrot.slane %v2262, 7
      %v2345 = vsel %vm1922, %v2342, %v2344
      %v2373 = vadd.f32 %v2005, %v2293
      %v2374 = vadd.f32 %v2006, %v2295
      %v2375 = vadd.f32 %v2007, %v2297
      %v2376 = vadd.f32 %v2008, %v2299
      %v2377 = vadd.f32 %v2009, %v2301
      %v2378 = vadd.f32 %v2010, %v2303
      %v2379 = vadd.f32 %v2011, %v2305
      %v2380 = vadd.f32 %v2012, %v2307
      %v2381 = vadd.f32 %v2013, %v2309
      %v2382 = vadd.f32 %v2014, %v2311
      %v2383 = vadd.f32 %v2015, %v2313
      %v2384 = vadd.f32 %v2016, %v2315
      %v2385 = vadd.f32 %v2017, %v2317
      %v2386 = vadd.f32 %v2018, %v2319
      %v2387 = vadd.f32 %v2019, %v2321
      %v2388 = vadd.f32 %v2020, %v2323
      %v2389 = vadd.f32 %v2021, %v2325
      %v2390 = vadd.f32 %v2022, %v2327
      %v2391 = vadd.f32 %v2023, %v2329
      %v2392 = vadd.f32 %v2024, %v2331
      %v2393 = vadd.f32 %v2025, %v2333
      %v2394 = vadd.f32 %v2026, %v2335
      %v2395 = vadd.f32 %v2027, %v2337
      %v2396 = vadd.f32 %v2028, %v2339
      %v2397 = vadd.f32 %v2029, %v2341
      %v2398 = vadd.f32 %v2030, %v2343
      %v2399 = vadd.f32 %v2031, %v2345
      %s2400 = scalar_lea.vmem %s4, 8
      %v2401 = vld [vmem:[%s2400] sm:$0x1]
      %v2402 = vunpack.c.l.bf16 %v2401
      %v2403 = vlaneseq
      %v2404 = vshrl.u32 %v2403, 7
      %v2405 = vsub.s32 0, %v2404
      %v2406 = vrot.slane %v2402, %v2405
      %v2407 = vmul.f32 %v1730, %v2406
      %v2408 = vmul.f32 %v1735, %v2406
      %v2409 = vmul.f32 %v1740, %v2406
      %v2410 = vmul.f32 %v1745, %v2406
      %v2411 = vmul.f32 %v1750, %v2406
      %v2412 = vmul.f32 %v1755, %v2406
      %v2413 = vmul.f32 %v1760, %v2406
      %v2414 = vmul.f32 %v1765, %v2406
      %v2415 = vmul.f32 %v1770, %v2406
      %v2416 = vmul.f32 %v1775, %v2406
      %v2417 = vmul.f32 %v1780, %v2406
      %v2418 = vmul.f32 %v1785, %v2406
      %v2419 = vmul.f32 %v1790, %v2406
      %v2420 = vmul.f32 %v1795, %v2406
      %v2421 = vmul.f32 %v1800, %v2406
      %v2422 = vmul.f32 %v1805, %v2406
      %v2423 = vmul.f32 %v1810, %v2406
      %v2424 = vmul.f32 %v1815, %v2406
      %v2425 = vmul.f32 %v1820, %v2406
      %v2426 = vmul.f32 %v1825, %v2406
      %v2427 = vmul.f32 %v1830, %v2406
      %v2428 = vmul.f32 %v1835, %v2406
      %v2429 = vmul.f32 %v1840, %v2406
      %v2430 = vmul.f32 %v1845, %v2406
      %v2431 = vmul.f32 %v1850, %v2406
      %v2432 = vmul.f32 %v1855, %v2406
      %v2433 = vmul.f32 %v1860, %v2406
      %v2434 = vadd.f32 %v2373, %v2407
      %v2435 = vadd.f32 %v2374, %v2408
      %v2436 = vadd.f32 %v2375, %v2409
      %v2437 = vadd.f32 %v2376, %v2410
      %v2438 = vadd.f32 %v2377, %v2411
      %v2439 = vadd.f32 %v2378, %v2412
      %v2440 = vadd.f32 %v2379, %v2413
      %v2441 = vadd.f32 %v2380, %v2414
      %v2442 = vadd.f32 %v2381, %v2415
      %v2443 = vadd.f32 %v2382, %v2416
      %v2444 = vadd.f32 %v2383, %v2417
      %v2445 = vadd.f32 %v2384, %v2418
      %v2446 = vadd.f32 %v2385, %v2419
      %v2447 = vadd.f32 %v2386, %v2420
      %v2448 = vadd.f32 %v2387, %v2421
      %v2449 = vadd.f32 %v2388, %v2422
      %v2450 = vadd.f32 %v2389, %v2423
      %v2451 = vadd.f32 %v2390, %v2424
      %v2452 = vadd.f32 %v2391, %v2425
      %v2453 = vadd.f32 %v2392, %v2426
      %v2454 = vadd.f32 %v2393, %v2427
      %v2455 = vadd.f32 %v2394, %v2428
      %v2456 = vadd.f32 %v2395, %v2429
      %v2457 = vadd.f32 %v2396, %v2430
      %v2458 = vadd.f32 %v2397, %v2431
      %v2459 = vadd.f32 %v2398, %v2432
      %v2460 = vadd.f32 %v2399, %v2433
      %v2462 = vlaneseq
      %v2463 = vshrl.u32 %v2462, 7
      %v2464 = vsub.s32 0, %v2463
      %v2465 = vrot.slane %v312, %v2464
      %v2467 = vadd.f32 %v2434, %v2465
      %v2468 = vadd.f32 %v2435, %v2465
      %v2469 = vadd.f32 %v2436, %v2465
      %v2470 = vadd.f32 %v2437, %v2465
      %v2471 = vadd.f32 %v2438, %v2465
      %v2472 = vadd.f32 %v2439, %v2465
      %v2473 = vadd.f32 %v2440, %v2465
      %v2474 = vadd.f32 %v2441, %v2465
      %v2475 = vadd.f32 %v2442, %v2465
      %v2476 = vadd.f32 %v2443, %v2465
      %v2477 = vadd.f32 %v2444, %v2465
      %v2478 = vadd.f32 %v2445, %v2465
      %v2479 = vadd.f32 %v2446, %v2465
      %v2480 = vadd.f32 %v2447, %v2465
      %v2481 = vadd.f32 %v2448, %v2465
      %v2482 = vadd.f32 %v2449, %v2465
      %v2483 = vadd.f32 %v2450, %v2465
      %v2484 = vadd.f32 %v2451, %v2465
      %v2485 = vadd.f32 %v2452, %v2465
      %v2486 = vadd.f32 %v2453, %v2465
      %v2487 = vadd.f32 %v2454, %v2465
      %v2488 = vadd.f32 %v2455, %v2465
      %v2489 = vadd.f32 %v2456, %v2465
      %v2490 = vadd.f32 %v2457, %v2465
      %v2491 = vadd.f32 %v2458, %v2465
      %v2492 = vadd.f32 %v2459, %v2465
      %v2493 = vadd.f32 %v2460, %v2465
      %v2494 = vmax.f32 %v2467, 0.0
      %v2495 = vmax.f32 %v2468, 0.0
      %v2496 = vmax.f32 %v2469, 0.0
      %v2497 = vmax.f32 %v2470, 0.0
      %v2498 = vmax.f32 %v2471, 0.0
      %v2499 = vmax.f32 %v2472, 0.0
      %v2500 = vmax.f32 %v2473, 0.0
      %v2501 = vmax.f32 %v2474, 0.0
      %v2502 = vmax.f32 %v2475, 0.0
      %v2503 = vmax.f32 %v2476, 0.0
      %v2504 = vmax.f32 %v2477, 0.0
      %v2505 = vmax.f32 %v2478, 0.0
      %v2506 = vmax.f32 %v2479, 0.0
      %v2507 = vmax.f32 %v2480, 0.0
      %v2508 = vmax.f32 %v2481, 0.0
      %v2509 = vmax.f32 %v2482, 0.0
      %v2510 = vmax.f32 %v2483, 0.0
      %v2511 = vmax.f32 %v2484, 0.0
      %v2512 = vmax.f32 %v2485, 0.0
      %v2513 = vmax.f32 %v2486, 0.0
      %v2514 = vmax.f32 %v2487, 0.0
      %v2515 = vmax.f32 %v2488, 0.0
      %v2516 = vmax.f32 %v2489, 0.0
      %v2517 = vmax.f32 %v2490, 0.0
      %v2518 = vmax.f32 %v2491, 0.0
      %v2519 = vmax.f32 %v2492, 0.0
      %v2520 = vmax.f32 %v2493, 0.0
      %v2521 = vmul.f32 %v622, %v507
      %v2522 = vmul.f32 %v627, %v507
      %v2523 = vmul.f32 %v632, %v507
      %v2524 = vmul.f32 %v637, %v507
      %v2525 = vmul.f32 %v642, %v507
      %v2526 = vmul.f32 %v647, %v507
      %v2527 = vmul.f32 %v652, %v507
      %v2528 = vmul.f32 %v657, %v507
      %v2529 = vmul.f32 %v662, %v507
      %v2530 = vmul.f32 %v667, %v507
      %v2531 = vmul.f32 %v672, %v507
      %v2532 = vmul.f32 %v677, %v507
      %v2533 = vmul.f32 %v682, %v507
      %v2534 = vmul.f32 %v687, %v507
      %v2535 = vmul.f32 %v692, %v507
      %v2536 = vmul.f32 %v697, %v507
      %v2537 = vmul.f32 %v702, %v507
      %v2538 = vmul.f32 %v707, %v507
      %v2539 = vmul.f32 %v712, %v507
      %v2540 = vmul.f32 %v717, %v507
      %v2541 = vmul.f32 %v722, %v507
      %v2542 = vmul.f32 %v727, %v507
      %v2543 = vmul.f32 %v732, %v507
      %v2544 = vmul.f32 %v737, %v507
      %v2545 = vmul.f32 %v742, %v507
      %v2546 = vmul.f32 %v747, %v507
      %v2547 = vmul.f32 %v752, %v507
      %v2548 = vadd.f32 %v2521, 0.0
      %v2549 = vadd.f32 %v2522, 0.0
      %v2550 = vadd.f32 %v2523, 0.0
      %v2551 = vadd.f32 %v2524, 0.0
      %v2552 = vadd.f32 %v2525, 0.0
      %v2553 = vadd.f32 %v2526, 0.0
      %v2554 = vadd.f32 %v2527, 0.0
      %v2555 = vadd.f32 %v2528, 0.0
      %v2556 = vadd.f32 %v2529, 0.0
      %v2557 = vadd.f32 %v2530, 0.0
      %v2558 = vadd.f32 %v2531, 0.0
      %v2559 = vadd.f32 %v2532, 0.0
      %v2560 = vadd.f32 %v2533, 0.0
      %v2561 = vadd.f32 %v2534, 0.0
      %v2562 = vadd.f32 %v2535, 0.0
      %v2563 = vadd.f32 %v2536, 0.0
      %v2564 = vadd.f32 %v2537, 0.0
      %v2565 = vadd.f32 %v2538, 0.0
      %v2566 = vadd.f32 %v2539, 0.0
      %v2567 = vadd.f32 %v2540, 0.0
      %v2568 = vadd.f32 %v2541, 0.0
      %v2569 = vadd.f32 %v2542, 0.0
      %v2570 = vadd.f32 %v2543, 0.0
      %v2571 = vadd.f32 %v2544, 0.0
      %v2572 = vadd.f32 %v2545, 0.0
      %v2573 = vadd.f32 %v2546, 0.0
      %v2574 = vadd.f32 %v2547, 0.0
      %v2575 = vmul.f32 %v372, %v757
      %v2576 = vmul.f32 %v377, %v757
      %v2577 = vmul.f32 %v382, %v757
      %v2578 = vmul.f32 %v387, %v757
      %v2579 = vmul.f32 %v392, %v757
      %v2580 = vmul.f32 %v397, %v757
      %v2581 = vmul.f32 %v402, %v757
      %v2582 = vmul.f32 %v407, %v757
      %v2583 = vmul.f32 %v412, %v757
      %v2584 = vmul.f32 %v417, %v757
      %v2585 = vmul.f32 %v422, %v757
      %v2586 = vmul.f32 %v427, %v757
      %v2587 = vmul.f32 %v432, %v757
      %v2588 = vmul.f32 %v437, %v757
      %v2589 = vmul.f32 %v442, %v757
      %v2590 = vmul.f32 %v447, %v757
      %v2591 = vmul.f32 %v452, %v757
      %v2592 = vmul.f32 %v457, %v757
      %v2593 = vmul.f32 %v462, %v757
      %v2594 = vmul.f32 %v467, %v757
      %v2595 = vmul.f32 %v472, %v757
      %v2596 = vmul.f32 %v477, %v757
      %v2597 = vmul.f32 %v482, %v757
      %v2598 = vmul.f32 %v487, %v757
      %v2599 = vmul.f32 %v492, %v757
      %v2600 = vmul.f32 %v497, %v757
      %v2601 = vmul.f32 %v820, %v757
      %v2629 = vrot.slane %v2575, 1
      %v2630 = vrot.slane %v2576, 1
      %v2631 = vsel %vm880, %v2629, %v2630
      %v2632 = vrot.slane %v2577, 1
      %v2633 = vsel %vm880, %v2630, %v2632
      %v2634 = vrot.slane %v2578, 1
      %v2635 = vsel %vm880, %v2632, %v2634
      %v2636 = vrot.slane %v2579, 1
      %v2637 = vsel %vm880, %v2634, %v2636
      %v2638 = vrot.slane %v2580, 1
      %v2639 = vsel %vm880, %v2636, %v2638
      %v2640 = vrot.slane %v2581, 1
      %v2641 = vsel %vm880, %v2638, %v2640
      %v2642 = vrot.slane %v2582, 1
      %v2643 = vsel %vm880, %v2640, %v2642
      %v2644 = vrot.slane %v2583, 1
      %v2645 = vsel %vm880, %v2642, %v2644
      %v2646 = vrot.slane %v2584, 1
      %v2647 = vsel %vm880, %v2644, %v2646
      %v2648 = vrot.slane %v2585, 1
      %v2649 = vsel %vm880, %v2646, %v2648
      %v2650 = vrot.slane %v2586, 1
      %v2651 = vsel %vm880, %v2648, %v2650
      %v2652 = vrot.slane %v2587, 1
      %v2653 = vsel %vm880, %v2650, %v2652
      %v2654 = vrot.slane %v2588, 1
      %v2655 = vsel %vm880, %v2652, %v2654
      %v2656 = vrot.slane %v2589, 1
      %v2657 = vsel %vm880, %v2654, %v2656
      %v2658 = vrot.slane %v2590, 1
      %v2659 = vsel %vm880, %v2656, %v2658
      %v2660 = vrot.slane %v2591, 1
      %v2661 = vsel %vm880, %v2658, %v2660
      %v2662 = vrot.slane %v2592, 1
      %v2663 = vsel %vm880, %v2660, %v2662
      %v2664 = vrot.slane %v2593, 1
      %v2665 = vsel %vm880, %v2662, %v2664
      %v2666 = vrot.slane %v2594, 1
      %v2667 = vsel %vm880, %v2664, %v2666
      %v2668 = vrot.slane %v2595, 1
      %v2669 = vsel %vm880, %v2666, %v2668
      %v2670 = vrot.slane %v2596, 1
      %v2671 = vsel %vm880, %v2668, %v2670
      %v2672 = vrot.slane %v2597, 1
      %v2673 = vsel %vm880, %v2670, %v2672
      %v2674 = vrot.slane %v2598, 1
      %v2675 = vsel %vm880, %v2672, %v2674
      %v2676 = vrot.slane %v2599, 1
      %v2677 = vsel %vm880, %v2674, %v2676
      %v2678 = vrot.slane %v2600, 1
      %v2679 = vsel %vm880, %v2676, %v2678
      %v2680 = vrot.slane %v2601, 1
      %v2681 = vsel %vm880, %v2678, %v2680
      %v2709 = vadd.f32 %v2548, %v2631
      %v2710 = vadd.f32 %v2549, %v2633
      %v2711 = vadd.f32 %v2550, %v2635
      %v2712 = vadd.f32 %v2551, %v2637
      %v2713 = vadd.f32 %v2552, %v2639
      %v2714 = vadd.f32 %v2553, %v2641
      %v2715 = vadd.f32 %v2554, %v2643
      %v2716 = vadd.f32 %v2555, %v2645
      %v2717 = vadd.f32 %v2556, %v2647
      %v2718 = vadd.f32 %v2557, %v2649
      %v2719 = vadd.f32 %v2558, %v2651
      %v2720 = vadd.f32 %v2559, %v2653
      %v2721 = vadd.f32 %v2560, %v2655
      %v2722 = vadd.f32 %v2561, %v2657
      %v2723 = vadd.f32 %v2562, %v2659
      %v2724 = vadd.f32 %v2563, %v2661
      %v2725 = vadd.f32 %v2564, %v2663
      %v2726 = vadd.f32 %v2565, %v2665
      %v2727 = vadd.f32 %v2566, %v2667
      %v2728 = vadd.f32 %v2567, %v2669
      %v2729 = vadd.f32 %v2568, %v2671
      %v2730 = vadd.f32 %v2569, %v2673
      %v2731 = vadd.f32 %v2570, %v2675
      %v2732 = vadd.f32 %v2571, %v2677
      %v2733 = vadd.f32 %v2572, %v2679
      %v2734 = vadd.f32 %v2573, %v2681
      %v2735 = vadd.f32 %v2574, %v2680
      %v2736 = vld [vmem:[%s296 + $0x68] sm:$0x3]
      %v2737 = vunpack.c.l.bf16 %v2736
      %2739 = vset.pattern.permute.xlu0 0
      %2740 = vperm.xlu0 %2739, %v2737
      %v2741 = vpop.permute.xlu0 %2740
      %v2743 = vmul.f32 %v622, %v825
      %v2744 = vmul.f32 %v627, %v825
      %v2745 = vmul.f32 %v632, %v825
      %v2746 = vmul.f32 %v637, %v825
      %v2747 = vmul.f32 %v642, %v825
      %v2748 = vmul.f32 %v647, %v825
      %v2749 = vmul.f32 %v652, %v825
      %v2750 = vmul.f32 %v657, %v825
      %v2751 = vmul.f32 %v662, %v825
      %v2752 = vmul.f32 %v667, %v825
      %v2753 = vmul.f32 %v672, %v825
      %v2754 = vmul.f32 %v677, %v825
      %v2755 = vmul.f32 %v682, %v825
      %v2756 = vmul.f32 %v687, %v825
      %v2757 = vmul.f32 %v692, %v825
      %v2758 = vmul.f32 %v697, %v825
      %v2759 = vmul.f32 %v702, %v825
      %v2760 = vmul.f32 %v707, %v825
      %v2761 = vmul.f32 %v712, %v825
      %v2762 = vmul.f32 %v717, %v825
      %v2763 = vmul.f32 %v722, %v825
      %v2764 = vmul.f32 %v727, %v825
      %v2765 = vmul.f32 %v732, %v825
      %v2766 = vmul.f32 %v737, %v825
      %v2767 = vmul.f32 %v742, %v825
      %v2768 = vmul.f32 %v747, %v825
      %v2769 = vmul.f32 %v2741, %v825
      %v2797 = vrot.slane %v2743, 1
      %v2798 = vrot.slane %v2744, 1
      %v2799 = vsel %vm880, %v2797, %v2798
      %v2800 = vrot.slane %v2745, 1
      %v2801 = vsel %vm880, %v2798, %v2800
      %v2802 = vrot.slane %v2746, 1
      %v2803 = vsel %vm880, %v2800, %v2802
      %v2804 = vrot.slane %v2747, 1
      %v2805 = vsel %vm880, %v2802, %v2804
      %v2806 = vrot.slane %v2748, 1
      %v2807 = vsel %vm880, %v2804, %v2806
      %v2808 = vrot.slane %v2749, 1
      %v2809 = vsel %vm880, %v2806, %v2808
      %v2810 = vrot.slane %v2750, 1
      %v2811 = vsel %vm880, %v2808, %v2810
      %v2812 = vrot.slane %v2751, 1
      %v2813 = vsel %vm880, %v2810, %v2812
      %v2814 = vrot.slane %v2752, 1
      %v2815 = vsel %vm880, %v2812, %v2814
      %v2816 = vrot.slane %v2753, 1
      %v2817 = vsel %vm880, %v2814, %v2816
      %v2818 = vrot.slane %v2754, 1
      %v2819 = vsel %vm880, %v2816, %v2818
      %v2820 = vrot.slane %v2755, 1
      %v2821 = vsel %vm880, %v2818, %v2820
      %v2822 = vrot.slane %v2756, 1
      %v2823 = vsel %vm880, %v2820, %v2822
      %v2824 = vrot.slane %v2757, 1
      %v2825 = vsel %vm880, %v2822, %v2824
      %v2826 = vrot.slane %v2758, 1
      %v2827 = vsel %vm880, %v2824, %v2826
      %v2828 = vrot.slane %v2759, 1
      %v2829 = vsel %vm880, %v2826, %v2828
      %v2830 = vrot.slane %v2760, 1
      %v2831 = vsel %vm880, %v2828, %v2830
      %v2832 = vrot.slane %v2761, 1
      %v2833 = vsel %vm880, %v2830, %v2832
      %v2834 = vrot.slane %v2762, 1
      %v2835 = vsel %vm880, %v2832, %v2834
      %v2836 = vrot.slane %v2763, 1
      %v2837 = vsel %vm880, %v2834, %v2836
      %v2838 = vrot.slane %v2764, 1
      %v2839 = vsel %vm880, %v2836, %v2838
      %v2840 = vrot.slane %v2765, 1
      %v2841 = vsel %vm880, %v2838, %v2840
      %v2842 = vrot.slane %v2766, 1
      %v2843 = vsel %vm880, %v2840, %v2842
      %v2844 = vrot.slane %v2767, 1
      %v2845 = vsel %vm880, %v2842, %v2844
      %v2846 = vrot.slane %v2768, 1
      %v2847 = vsel %vm880, %v2844, %v2846
      %v2848 = vrot.slane %v2769, 1
      %v2849 = vsel %vm880, %v2846, %v2848
      %v2877 = vadd.f32 %v2709, %v2799
      %v2878 = vadd.f32 %v2710, %v2801
      %v2879 = vadd.f32 %v2711, %v2803
      %v2880 = vadd.f32 %v2712, %v2805
      %v2881 = vadd.f32 %v2713, %v2807
      %v2882 = vadd.f32 %v2714, %v2809
      %v2883 = vadd.f32 %v2715, %v2811
      %v2884 = vadd.f32 %v2716, %v2813
      %v2885 = vadd.f32 %v2717, %v2815
      %v2886 = vadd.f32 %v2718, %v2817
      %v2887 = vadd.f32 %v2719, %v2819
      %v2888 = vadd.f32 %v2720, %v2821
      %v2889 = vadd.f32 %v2721, %v2823
      %v2890 = vadd.f32 %v2722, %v2825
      %v2891 = vadd.f32 %v2723, %v2827
      %v2892 = vadd.f32 %v2724, %v2829
      %v2893 = vadd.f32 %v2725, %v2831
      %v2894 = vadd.f32 %v2726, %v2833
      %v2895 = vadd.f32 %v2727, %v2835
      %v2896 = vadd.f32 %v2728, %v2837
      %v2897 = vadd.f32 %v2729, %v2839
      %v2898 = vadd.f32 %v2730, %v2841
      %v2899 = vadd.f32 %v2731, %v2843
      %v2900 = vadd.f32 %v2732, %v2845
      %v2901 = vadd.f32 %v2733, %v2847
      %v2902 = vadd.f32 %v2734, %v2849
      %v2903 = vadd.f32 %v2735, %v2848
      %v2904 = vmul.f32 %v1298, %v1183
      %v2905 = vmul.f32 %v1303, %v1183
      %v2906 = vmul.f32 %v1308, %v1183
      %v2907 = vmul.f32 %v1313, %v1183
      %v2908 = vmul.f32 %v1318, %v1183
      %v2909 = vmul.f32 %v1323, %v1183
      %v2910 = vmul.f32 %v1328, %v1183
      %v2911 = vmul.f32 %v1333, %v1183
      %v2912 = vmul.f32 %v1338, %v1183
      %v2913 = vmul.f32 %v1343, %v1183
      %v2914 = vmul.f32 %v1348, %v1183
      %v2915 = vmul.f32 %v1353, %v1183
      %v2916 = vmul.f32 %v1358, %v1183
      %v2917 = vmul.f32 %v1363, %v1183
      %v2918 = vmul.f32 %v1368, %v1183
      %v2919 = vmul.f32 %v1373, %v1183
      %v2920 = vmul.f32 %v1378, %v1183
      %v2921 = vmul.f32 %v1383, %v1183
      %v2922 = vmul.f32 %v1388, %v1183
      %v2923 = vmul.f32 %v1393, %v1183
      %v2924 = vmul.f32 %v1398, %v1183
      %v2925 = vmul.f32 %v1403, %v1183
      %v2926 = vmul.f32 %v1408, %v1183
      %v2927 = vmul.f32 %v1413, %v1183
      %v2928 = vmul.f32 %v1418, %v1183
      %v2929 = vmul.f32 %v1423, %v1183
      %v2930 = vmul.f32 %v1428, %v1183
      %v2931 = vadd.f32 %v2877, %v2904
      %v2932 = vadd.f32 %v2878, %v2905
      %v2933 = vadd.f32 %v2879, %v2906
      %v2934 = vadd.f32 %v2880, %v2907
      %v2935 = vadd.f32 %v2881, %v2908
      %v2936 = vadd.f32 %v2882, %v2909
      %v2937 = vadd.f32 %v2883, %v2910
      %v2938 = vadd.f32 %v2884, %v2911
      %v2939 = vadd.f32 %v2885, %v2912
      %v2940 = vadd.f32 %v2886, %v2913
      %v2941 = vadd.f32 %v2887, %v2914
      %v2942 = vadd.f32 %v2888, %v2915
      %v2943 = vadd.f32 %v2889, %v2916
      %v2944 = vadd.f32 %v2890, %v2917
      %v2945 = vadd.f32 %v2891, %v2918
      %v2946 = vadd.f32 %v2892, %v2919
      %v2947 = vadd.f32 %v2893, %v2920
      %v2948 = vadd.f32 %v2894, %v2921
      %v2949 = vadd.f32 %v2895, %v2922
      %v2950 = vadd.f32 %v2896, %v2923
      %v2951 = vadd.f32 %v2897, %v2924
      %v2952 = vadd.f32 %v2898, %v2925
      %v2953 = vadd.f32 %v2899, %v2926
      %v2954 = vadd.f32 %v2900, %v2927
      %v2955 = vadd.f32 %v2901, %v2928
      %v2956 = vadd.f32 %v2902, %v2929
      %v2957 = vadd.f32 %v2903, %v2930
      %v2958 = vmul.f32 %v1048, %v1433
      %v2959 = vmul.f32 %v1053, %v1433
      %v2960 = vmul.f32 %v1058, %v1433
      %v2961 = vmul.f32 %v1063, %v1433
      %v2962 = vmul.f32 %v1068, %v1433
      %v2963 = vmul.f32 %v1073, %v1433
      %v2964 = vmul.f32 %v1078, %v1433
      %v2965 = vmul.f32 %v1083, %v1433
      %v2966 = vmul.f32 %v1088, %v1433
      %v2967 = vmul.f32 %v1093, %v1433
      %v2968 = vmul.f32 %v1098, %v1433
      %v2969 = vmul.f32 %v1103, %v1433
      %v2970 = vmul.f32 %v1108, %v1433
      %v2971 = vmul.f32 %v1113, %v1433
      %v2972 = vmul.f32 %v1118, %v1433
      %v2973 = vmul.f32 %v1123, %v1433
      %v2974 = vmul.f32 %v1128, %v1433
      %v2975 = vmul.f32 %v1133, %v1433
      %v2976 = vmul.f32 %v1138, %v1433
      %v2977 = vmul.f32 %v1143, %v1433
      %v2978 = vmul.f32 %v1148, %v1433
      %v2979 = vmul.f32 %v1153, %v1433
      %v2980 = vmul.f32 %v1158, %v1433
      %v2981 = vmul.f32 %v1163, %v1433
      %v2982 = vmul.f32 %v1168, %v1433
      %v2983 = vmul.f32 %v1173, %v1433
      %v2984 = vmul.f32 %v1496, %v1433
      %v3012 = vrot.slane %v2958, 1
      %v3013 = vrot.slane %v2959, 1
      %v3014 = vsel %vm880, %v3012, %v3013
      %v3015 = vrot.slane %v2960, 1
      %v3016 = vsel %vm880, %v3013, %v3015
      %v3017 = vrot.slane %v2961, 1
      %v3018 = vsel %vm880, %v3015, %v3017
      %v3019 = vrot.slane %v2962, 1
      %v3020 = vsel %vm880, %v3017, %v3019
      %v3021 = vrot.slane %v2963, 1
      %v3022 = vsel %vm880, %v3019, %v3021
      %v3023 = vrot.slane %v2964, 1
      %v3024 = vsel %vm880, %v3021, %v3023
      %v3025 = vrot.slane %v2965, 1
      %v3026 = vsel %vm880, %v3023, %v3025
      %v3027 = vrot.slane %v2966, 1
      %v3028 = vsel %vm880, %v3025, %v3027
      %v3029 = vrot.slane %v2967, 1
      %v3030 = vsel %vm880, %v3027, %v3029
      %v3031 = vrot.slane %v2968, 1
      %v3032 = vsel %vm880, %v3029, %v3031
      %v3033 = vrot.slane %v2969, 1
      %v3034 = vsel %vm880, %v3031, %v3033
      %v3035 = vrot.slane %v2970, 1
      %v3036 = vsel %vm880, %v3033, %v3035
      %v3037 = vrot.slane %v2971, 1
      %v3038 = vsel %vm880, %v3035, %v3037
      %v3039 = vrot.slane %v2972, 1
      %v3040 = vsel %vm880, %v3037, %v3039
      %v3041 = vrot.slane %v2973, 1
      %v3042 = vsel %vm880, %v3039, %v3041
      %v3043 = vrot.slane %v2974, 1
      %v3044 = vsel %vm880, %v3041, %v3043
      %v3045 = vrot.slane %v2975, 1
      %v3046 = vsel %vm880, %v3043, %v3045
      %v3047 = vrot.slane %v2976, 1
      %v3048 = vsel %vm880, %v3045, %v3047
      %v3049 = vrot.slane %v2977, 1
      %v3050 = vsel %vm880, %v3047, %v3049
      %v3051 = vrot.slane %v2978, 1
      %v3052 = vsel %vm880, %v3049, %v3051
      %v3053 = vrot.slane %v2979, 1
      %v3054 = vsel %vm880, %v3051, %v3053
      %v3055 = vrot.slane %v2980, 1
      %v3056 = vsel %vm880, %v3053, %v3055
      %v3057 = vrot.slane %v2981, 1
      %v3058 = vsel %vm880, %v3055, %v3057
      %v3059 = vrot.slane %v2982, 1
      %v3060 = vsel %vm880, %v3057, %v3059
      %v3061 = vrot.slane %v2983, 1
      %v3062 = vsel %vm880, %v3059, %v3061
      %v3063 = vrot.slane %v2984, 1
      %v3064 = vsel %vm880, %v3061, %v3063
      %v3092 = vadd.f32 %v2931, %v3014
      %v3093 = vadd.f32 %v2932, %v3016
      %v3094 = vadd.f32 %v2933, %v3018
      %v3095 = vadd.f32 %v2934, %v3020
      %v3096 = vadd.f32 %v2935, %v3022
      %v3097 = vadd.f32 %v2936, %v3024
      %v3098 = vadd.f32 %v2937, %v3026
      %v3099 = vadd.f32 %v2938, %v3028
      %v3100 = vadd.f32 %v2939, %v3030
      %v3101 = vadd.f32 %v2940, %v3032
      %v3102 = vadd.f32 %v2941, %v3034
      %v3103 = vadd.f32 %v2942, %v3036
      %v3104 = vadd.f32 %v2943, %v3038
      %v3105 = vadd.f32 %v2944, %v3040
      %v3106 = vadd.f32 %v2945, %v3042
      %v3107 = vadd.f32 %v2946, %v3044
      %v3108 = vadd.f32 %v2947, %v3046
      %v3109 = vadd.f32 %v2948, %v3048
      %v3110 = vadd.f32 %v2949, %v3050
      %v3111 = vadd.f32 %v2950, %v3052
      %v3112 = vadd.f32 %v2951, %v3054
      %v3113 = vadd.f32 %v2952, %v3056
      %v3114 = vadd.f32 %v2953, %v3058
      %v3115 = vadd.f32 %v2954, %v3060
      %v3116 = vadd.f32 %v2955, %v3062
      %v3117 = vadd.f32 %v2956, %v3064
      %v3118 = vadd.f32 %v2957, %v3063
      %v3119 = vld [vmem:[%s306 + $0x68] sm:$0x3]
      %v3120 = vunpack.c.l.bf16 %v3119
      %3122 = vset.pattern.permute.xlu0 0
      %3123 = vperm.xlu0 %3122, %v3120
      %v3124 = vpop.permute.xlu0 %3123
      %v3126 = vmul.f32 %v1298, %v1501
      %v3127 = vmul.f32 %v1303, %v1501
      %v3128 = vmul.f32 %v1308, %v1501
      %v3129 = vmul.f32 %v1313, %v1501
      %v3130 = vmul.f32 %v1318, %v1501
      %v3131 = vmul.f32 %v1323, %v1501
      %v3132 = vmul.f32 %v1328, %v1501
      %v3133 = vmul.f32 %v1333, %v1501
      %v3134 = vmul.f32 %v1338, %v1501
      %v3135 = vmul.f32 %v1343, %v1501
      %v3136 = vmul.f32 %v1348, %v1501
      %v3137 = vmul.f32 %v1353, %v1501
      %v3138 = vmul.f32 %v1358, %v1501
      %v3139 = vmul.f32 %v1363, %v1501
      %v3140 = vmul.f32 %v1368, %v1501
      %v3141 = vmul.f32 %v1373, %v1501
      %v3142 = vmul.f32 %v1378, %v1501
      %v3143 = vmul.f32 %v1383, %v1501
      %v3144 = vmul.f32 %v1388, %v1501
      %v3145 = vmul.f32 %v1393, %v1501
      %v3146 = vmul.f32 %v1398, %v1501
      %v3147 = vmul.f32 %v1403, %v1501
      %v3148 = vmul.f32 %v1408, %v1501
      %v3149 = vmul.f32 %v1413, %v1501
      %v3150 = vmul.f32 %v1418, %v1501
      %v3151 = vmul.f32 %v1423, %v1501
      %v3152 = vmul.f32 %v3124, %v1501
      %v3180 = vrot.slane %v3126, 1
      %v3181 = vrot.slane %v3127, 1
      %v3182 = vsel %vm880, %v3180, %v3181
      %v3183 = vrot.slane %v3128, 1
      %v3184 = vsel %vm880, %v3181, %v3183
      %v3185 = vrot.slane %v3129, 1
      %v3186 = vsel %vm880, %v3183, %v3185
      %v3187 = vrot.slane %v3130, 1
      %v3188 = vsel %vm880, %v3185, %v3187
      %v3189 = vrot.slane %v3131, 1
      %v3190 = vsel %vm880, %v3187, %v3189
      %v3191 = vrot.slane %v3132, 1
      %v3192 = vsel %vm880, %v3189, %v3191
      %v3193 = vrot.slane %v3133, 1
      %v3194 = vsel %vm880, %v3191, %v3193
      %v3195 = vrot.slane %v3134, 1
      %v3196 = vsel %vm880, %v3193, %v3195
      %v3197 = vrot.slane %v3135, 1
      %v3198 = vsel %vm880, %v3195, %v3197
      %v3199 = vrot.slane %v3136, 1
      %v3200 = vsel %vm880, %v3197, %v3199
      %v3201 = vrot.slane %v3137, 1
      %v3202 = vsel %vm880, %v3199, %v3201
      %v3203 = vrot.slane %v3138, 1
      %v3204 = vsel %vm880, %v3201, %v3203
      %v3205 = vrot.slane %v3139, 1
      %v3206 = vsel %vm880, %v3203, %v3205
      %v3207 = vrot.slane %v3140, 1
      %v3208 = vsel %vm880, %v3205, %v3207
      %v3209 = vrot.slane %v3141, 1
      %v3210 = vsel %vm880, %v3207, %v3209
      %v3211 = vrot.slane %v3142, 1
      %v3212 = vsel %vm880, %v3209, %v3211
      %v3213 = vrot.slane %v3143, 1
      %v3214 = vsel %vm880, %v3211, %v3213
      %v3215 = vrot.slane %v3144, 1
      %v3216 = vsel %vm880, %v3213, %v3215
      %v3217 = vrot.slane %v3145, 1
      %v3218 = vsel %vm880, %v3215, %v3217
      %v3219 = vrot.slane %v3146, 1
      %v3220 = vsel %vm880, %v3217, %v3219
      %v3221 = vrot.slane %v3147, 1
      %v3222 = vsel %vm880, %v3219, %v3221
      %v3223 = vrot.slane %v3148, 1
      %v3224 = vsel %vm880, %v3221, %v3223
      %v3225 = vrot.slane %v3149, 1
      %v3226 = vsel %vm880, %v3223, %v3225
      %v3227 = vrot.slane %v3150, 1
      %v3228 = vsel %vm880, %v3225, %v3227
      %v3229 = vrot.slane %v3151, 1
      %v3230 = vsel %vm880, %v3227, %v3229
      %v3231 = vrot.slane %v3152, 1
      %v3232 = vsel %vm880, %v3229, %v3231
      %v3260 = vadd.f32 %v3092, %v3182
      %v3261 = vadd.f32 %v3093, %v3184
      %v3262 = vadd.f32 %v3094, %v3186
      %v3263 = vadd.f32 %v3095, %v3188
      %v3264 = vadd.f32 %v3096, %v3190
      %v3265 = vadd.f32 %v3097, %v3192
      %v3266 = vadd.f32 %v3098, %v3194
      %v3267 = vadd.f32 %v3099, %v3196
      %v3268 = vadd.f32 %v3100, %v3198
      %v3269 = vadd.f32 %v3101, %v3200
      %v3270 = vadd.f32 %v3102, %v3202
      %v3271 = vadd.f32 %v3103, %v3204
      %v3272 = vadd.f32 %v3104, %v3206
      %v3273 = vadd.f32 %v3105, %v3208
      %v3274 = vadd.f32 %v3106, %v3210
      %v3275 = vadd.f32 %v3107, %v3212
      %v3276 = vadd.f32 %v3108, %v3214
      %v3277 = vadd.f32 %v3109, %v3216
      %v3278 = vadd.f32 %v3110, %v3218
      %v3279 = vadd.f32 %v3111, %v3220
      %v3280 = vadd.f32 %v3112, %v3222
      %v3281 = vadd.f32 %v3113, %v3224
      %v3282 = vadd.f32 %v3114, %v3226
      %v3283 = vadd.f32 %v3115, %v3228
      %v3284 = vadd.f32 %v3116, %v3230
      %v3285 = vadd.f32 %v3117, %v3232
      %v3286 = vadd.f32 %v3118, %v3231
      %v3287 = vmul.f32 %v2094, %v1865
      %v3288 = vmul.f32 %v2099, %v1865
      %v3289 = vmul.f32 %v2104, %v1865
      %v3290 = vmul.f32 %v2109, %v1865
      %v3291 = vmul.f32 %v2114, %v1865
      %v3292 = vmul.f32 %v2119, %v1865
      %v3293 = vmul.f32 %v2124, %v1865
      %v3294 = vmul.f32 %v2129, %v1865
      %v3295 = vmul.f32 %v2134, %v1865
      %v3296 = vmul.f32 %v2139, %v1865
      %v3297 = vmul.f32 %v2144, %v1865
      %v3298 = vmul.f32 %v2149, %v1865
      %v3299 = vmul.f32 %v2154, %v1865
      %v3300 = vmul.f32 %v2159, %v1865
      %v3301 = vmul.f32 %v2164, %v1865
      %v3302 = vmul.f32 %v2169, %v1865
      %v3303 = vmul.f32 %v2174, %v1865
      %v3304 = vmul.f32 %v2179, %v1865
      %v3305 = vmul.f32 %v2184, %v1865
      %v3306 = vmul.f32 %v2189, %v1865
      %v3307 = vmul.f32 %v2194, %v1865
      %v3308 = vmul.f32 %v2199, %v1865
      %v3309 = vmul.f32 %v2204, %v1865
      %v3310 = vmul.f32 %v2209, %v1865
      %v3311 = vmul.f32 %v2214, %v1865
      %v3312 = vmul.f32 %v2219, %v1865
      %v3313 = vmul.f32 %v2224, %v1865
      %v3314 = vmul.f32 %v2229, %v1865
      %v3343 = vrot.slane %v3287, 7
      %v3344 = vrot.slane %v3288, 7
      %v3345 = vsel %vm1922, %v3343, %v3344
      %v3346 = vrot.slane %v3289, 7
      %v3347 = vsel %vm1922, %v3344, %v3346
      %v3348 = vrot.slane %v3290, 7
      %v3349 = vsel %vm1922, %v3346, %v3348
      %v3350 = vrot.slane %v3291, 7
      %v3351 = vsel %vm1922, %v3348, %v3350
      %v3352 = vrot.slane %v3292, 7
      %v3353 = vsel %vm1922, %v3350, %v3352
      %v3354 = vrot.slane %v3293, 7
      %v3355 = vsel %vm1922, %v3352, %v3354
      %v3356 = vrot.slane %v3294, 7
      %v3357 = vsel %vm1922, %v3354, %v3356
      %v3358 = vrot.slane %v3295, 7
      %v3359 = vsel %vm1922, %v3356, %v3358
      %v3360 = vrot.slane %v3296, 7
      %v3361 = vsel %vm1922, %v3358, %v3360
      %v3362 = vrot.slane %v3297, 7
      %v3363 = vsel %vm1922, %v3360, %v3362
      %v3364 = vrot.slane %v3298, 7
      %v3365 = vsel %vm1922, %v3362, %v3364
      %v3366 = vrot.slane %v3299, 7
      %v3367 = vsel %vm1922, %v3364, %v3366
      %v3368 = vrot.slane %v3300, 7
      %v3369 = vsel %vm1922, %v3366, %v3368
      %v3370 = vrot.slane %v3301, 7
      %v3371 = vsel %vm1922, %v3368, %v3370
      %v3372 = vrot.slane %v3302, 7
      %v3373 = vsel %vm1922, %v3370, %v3372
      %v3374 = vrot.slane %v3303, 7
      %v3375 = vsel %vm1922, %v3372, %v3374
      %v3376 = vrot.slane %v3304, 7
      %v3377 = vsel %vm1922, %v3374, %v3376
      %v3378 = vrot.slane %v3305, 7
      %v3379 = vsel %vm1922, %v3376, %v3378
      %v3380 = vrot.slane %v3306, 7
      %v3381 = vsel %vm1922, %v3378, %v3380
      %v3382 = vrot.slane %v3307, 7
      %v3383 = vsel %vm1922, %v3380, %v3382
      %v3384 = vrot.slane %v3308, 7
      %v3385 = vsel %vm1922, %v3382, %v3384
      %v3386 = vrot.slane %v3309, 7
      %v3387 = vsel %vm1922, %v3384, %v3386
      %v3388 = vrot.slane %v3310, 7
      %v3389 = vsel %vm1922, %v3386, %v3388
      %v3390 = vrot.slane %v3311, 7
      %v3391 = vsel %vm1922, %v3388, %v3390
      %v3392 = vrot.slane %v3312, 7
      %v3393 = vsel %vm1922, %v3390, %v3392
      %v3394 = vrot.slane %v3313, 7
      %v3395 = vsel %vm1922, %v3392, %v3394
      %v3396 = vrot.slane %v3314, 7
      %v3397 = vsel %vm1922, %v3394, %v3396
      %v3425 = vadd.f32 %v3260, %v3345
      %v3426 = vadd.f32 %v3261, %v3347
      %v3427 = vadd.f32 %v3262, %v3349
      %v3428 = vadd.f32 %v3263, %v3351
      %v3429 = vadd.f32 %v3264, %v3353
      %v3430 = vadd.f32 %v3265, %v3355
      %v3431 = vadd.f32 %v3266, %v3357
      %v3432 = vadd.f32 %v3267, %v3359
      %v3433 = vadd.f32 %v3268, %v3361
      %v3434 = vadd.f32 %v3269, %v3363
      %v3435 = vadd.f32 %v3270, %v3365
      %v3436 = vadd.f32 %v3271, %v3367
      %v3437 = vadd.f32 %v3272, %v3369
      %v3438 = vadd.f32 %v3273, %v3371
      %v3439 = vadd.f32 %v3274, %v3373
      %v3440 = vadd.f32 %v3275, %v3375
      %v3441 = vadd.f32 %v3276, %v3377
      %v3442 = vadd.f32 %v3277, %v3379
      %v3443 = vadd.f32 %v3278, %v3381
      %v3444 = vadd.f32 %v3279, %v3383
      %v3445 = vadd.f32 %v3280, %v3385
      %v3446 = vadd.f32 %v3281, %v3387
      %v3447 = vadd.f32 %v3282, %v3389
      %v3448 = vadd.f32 %v3283, %v3391
      %v3449 = vadd.f32 %v3284, %v3393
      %v3450 = vadd.f32 %v3285, %v3395
      %v3451 = vadd.f32 %v3286, %v3397
      %v3452 = vmul.f32 %v1730, %v2234
      %v3453 = vmul.f32 %v1735, %v2234
      %v3454 = vmul.f32 %v1740, %v2234
      %v3455 = vmul.f32 %v1745, %v2234
      %v3456 = vmul.f32 %v1750, %v2234
      %v3457 = vmul.f32 %v1755, %v2234
      %v3458 = vmul.f32 %v1760, %v2234
      %v3459 = vmul.f32 %v1765, %v2234
      %v3460 = vmul.f32 %v1770, %v2234
      %v3461 = vmul.f32 %v1775, %v2234
      %v3462 = vmul.f32 %v1780, %v2234
      %v3463 = vmul.f32 %v1785, %v2234
      %v3464 = vmul.f32 %v1790, %v2234
      %v3465 = vmul.f32 %v1795, %v2234
      %v3466 = vmul.f32 %v1800, %v2234
      %v3467 = vmul.f32 %v1805, %v2234
      %v3468 = vmul.f32 %v1810, %v2234
      %v3469 = vmul.f32 %v1815, %v2234
      %v3470 = vmul.f32 %v1820, %v2234
      %v3471 = vmul.f32 %v1825, %v2234
      %v3472 = vmul.f32 %v1830, %v2234
      %v3473 = vmul.f32 %v1835, %v2234
      %v3474 = vmul.f32 %v1840, %v2234
      %v3475 = vmul.f32 %v1845, %v2234
      %v3476 = vmul.f32 %v1850, %v2234
      %v3477 = vmul.f32 %v1855, %v2234
      %v3478 = vmul.f32 %v1860, %v2234
      %v3479 = vadd.f32 %v3425, %v3452
      %v3480 = vadd.f32 %v3426, %v3453
      %v3481 = vadd.f32 %v3427, %v3454
      %v3482 = vadd.f32 %v3428, %v3455
      %v3483 = vadd.f32 %v3429, %v3456
      %v3484 = vadd.f32 %v3430, %v3457
      %v3485 = vadd.f32 %v3431, %v3458
      %v3486 = vadd.f32 %v3432, %v3459
      %v3487 = vadd.f32 %v3433, %v3460
      %v3488 = vadd.f32 %v3434, %v3461
      %v3489 = vadd.f32 %v3435, %v3462
      %v3490 = vadd.f32 %v3436, %v3463
      %v3491 = vadd.f32 %v3437, %v3464
      %v3492 = vadd.f32 %v3438, %v3465
      %v3493 = vadd.f32 %v3439, %v3466
      %v3494 = vadd.f32 %v3440, %v3467
      %v3495 = vadd.f32 %v3441, %v3468
      %v3496 = vadd.f32 %v3442, %v3469
      %v3497 = vadd.f32 %v3443, %v3470
      %v3498 = vadd.f32 %v3444, %v3471
      %v3499 = vadd.f32 %v3445, %v3472
      %v3500 = vadd.f32 %v3446, %v3473
      %v3501 = vadd.f32 %v3447, %v3474
      %v3502 = vadd.f32 %v3448, %v3475
      %v3503 = vadd.f32 %v3449, %v3476
      %v3504 = vadd.f32 %v3450, %v3477
      %v3505 = vadd.f32 %v3451, %v3478
      %v3506 = vmul.f32 %v2099, %v2406
      %v3507 = vmul.f32 %v2104, %v2406
      %v3508 = vmul.f32 %v2109, %v2406
      %v3509 = vmul.f32 %v2114, %v2406
      %v3510 = vmul.f32 %v2119, %v2406
      %v3511 = vmul.f32 %v2124, %v2406
      %v3512 = vmul.f32 %v2129, %v2406
      %v3513 = vmul.f32 %v2134, %v2406
      %v3514 = vmul.f32 %v2139, %v2406
      %v3515 = vmul.f32 %v2144, %v2406
      %v3516 = vmul.f32 %v2149, %v2406
      %v3517 = vmul.f32 %v2154, %v2406
      %v3518 = vmul.f32 %v2159, %v2406
      %v3519 = vmul.f32 %v2164, %v2406
      %v3520 = vmul.f32 %v2169, %v2406
      %v3521 = vmul.f32 %v2174, %v2406
      %v3522 = vmul.f32 %v2179, %v2406
      %v3523 = vmul.f32 %v2184, %v2406
      %v3524 = vmul.f32 %v2189, %v2406
      %v3525 = vmul.f32 %v2194, %v2406
      %v3526 = vmul.f32 %v2199, %v2406
      %v3527 = vmul.f32 %v2204, %v2406
      %v3528 = vmul.f32 %v2209, %v2406
      %v3529 = vmul.f32 %v2214, %v2406
      %v3530 = vmul.f32 %v2219, %v2406
      %v3531 = vmul.f32 %v2224, %v2406
      %v3532 = vmul.f32 %v2229, %v2406
      %v3533 = vadd.f32 %v3479, %v3506
      %v3534 = vadd.f32 %v3480, %v3507
      %v3535 = vadd.f32 %v3481, %v3508
      %v3536 = vadd.f32 %v3482, %v3509
      %v3537 = vadd.f32 %v3483, %v3510
      %v3538 = vadd.f32 %v3484, %v3511
      %v3539 = vadd.f32 %v3485, %v3512
      %v3540 = vadd.f32 %v3486, %v3513
      %v3541 = vadd.f32 %v3487, %v3514
      %v3542 = vadd.f32 %v3488, %v3515
      %v3543 = vadd.f32 %v3489, %v3516
      %v3544 = vadd.f32 %v3490, %v3517
      %v3545 = vadd.f32 %v3491, %v3518
      %v3546 = vadd.f32 %v3492, %v3519
      %v3547 = vadd.f32 %v3493, %v3520
      %v3548 = vadd.f32 %v3494, %v3521
      %v3549 = vadd.f32 %v3495, %v3522
      %v3550 = vadd.f32 %v3496, %v3523
      %v3551 = vadd.f32 %v3497, %v3524
      %v3552 = vadd.f32 %v3498, %v3525
      %v3553 = vadd.f32 %v3499, %v3526
      %v3554 = vadd.f32 %v3500, %v3527
      %v3555 = vadd.f32 %v3501, %v3528
      %v3556 = vadd.f32 %v3502, %v3529
      %v3557 = vadd.f32 %v3503, %v3530
      %v3558 = vadd.f32 %v3504, %v3531
      %v3559 = vadd.f32 %v3505, %v3532
      %v3560 = vadd.f32 %v3533, %v2465
      %v3561 = vadd.f32 %v3534, %v2465
      %v3562 = vadd.f32 %v3535, %v2465
      %v3563 = vadd.f32 %v3536, %v2465
      %v3564 = vadd.f32 %v3537, %v2465
      %v3565 = vadd.f32 %v3538, %v2465
      %v3566 = vadd.f32 %v3539, %v2465
      %v3567 = vadd.f32 %v3540, %v2465
      %v3568 = vadd.f32 %v3541, %v2465
      %v3569 = vadd.f32 %v3542, %v2465
      %v3570 = vadd.f32 %v3543, %v2465
      %v3571 = vadd.f32 %v3544, %v2465
      %v3572 = vadd.f32 %v3545, %v2465
      %v3573 = vadd.f32 %v3546, %v2465
      %v3574 = vadd.f32 %v3547, %v2465
      %v3575 = vadd.f32 %v3548, %v2465
      %v3576 = vadd.f32 %v3549, %v2465
      %v3577 = vadd.f32 %v3550, %v2465
      %v3578 = vadd.f32 %v3551, %v2465
      %v3579 = vadd.f32 %v3552, %v2465
      %v3580 = vadd.f32 %v3553, %v2465
      %v3581 = vadd.f32 %v3554, %v2465
      %v3582 = vadd.f32 %v3555, %v2465
      %v3583 = vadd.f32 %v3556, %v2465
      %v3584 = vadd.f32 %v3557, %v2465
      %v3585 = vadd.f32 %v3558, %v2465
      %v3586 = vadd.f32 %v3559, %v2465
      %v3587 = vmax.f32 %v3560, 0.0
      %v3588 = vmax.f32 %v3561, 0.0
      %v3589 = vmax.f32 %v3562, 0.0
      %v3590 = vmax.f32 %v3563, 0.0
      %v3591 = vmax.f32 %v3564, 0.0
      %v3592 = vmax.f32 %v3565, 0.0
      %v3593 = vmax.f32 %v3566, 0.0
      %v3594 = vmax.f32 %v3567, 0.0
      %v3595 = vmax.f32 %v3568, 0.0
      %v3596 = vmax.f32 %v3569, 0.0
      %v3597 = vmax.f32 %v3570, 0.0
      %v3598 = vmax.f32 %v3571, 0.0
      %v3599 = vmax.f32 %v3572, 0.0
      %v3600 = vmax.f32 %v3573, 0.0
      %v3601 = vmax.f32 %v3574, 0.0
      %v3602 = vmax.f32 %v3575, 0.0
      %v3603 = vmax.f32 %v3576, 0.0
      %v3604 = vmax.f32 %v3577, 0.0
      %v3605 = vmax.f32 %v3578, 0.0
      %v3606 = vmax.f32 %v3579, 0.0
      %v3607 = vmax.f32 %v3580, 0.0
      %v3608 = vmax.f32 %v3581, 0.0
      %v3609 = vmax.f32 %v3582, 0.0
      %v3610 = vmax.f32 %v3583, 0.0
      %v3611 = vmax.f32 %v3584, 0.0
      %v3612 = vmax.f32 %v3585, 0.0
      %v3613 = vmax.f32 %v3586, 0.0
      %v3614 = vmax.f32 %v2494, %v3587
      %v3615 = vmax.f32 %v2495, %v3588
      %v3616 = vmax.f32 %v2496, %v3589
      %v3617 = vmax.f32 %v2497, %v3590
      %v3618 = vmax.f32 %v2498, %v3591
      %v3619 = vmax.f32 %v2499, %v3592
      %v3620 = vmax.f32 %v2500, %v3593
      %v3621 = vmax.f32 %v2501, %v3594
      %v3622 = vmax.f32 %v2502, %v3595
      %v3623 = vmax.f32 %v2503, %v3596
      %v3624 = vmax.f32 %v2504, %v3597
      %v3625 = vmax.f32 %v2505, %v3598
      %v3626 = vmax.f32 %v2506, %v3599
      %v3627 = vmax.f32 %v2507, %v3600
      %v3628 = vmax.f32 %v2508, %v3601
      %v3629 = vmax.f32 %v2509, %v3602
      %v3630 = vmax.f32 %v2510, %v3603
      %v3631 = vmax.f32 %v2511, %v3604
      %v3632 = vmax.f32 %v2512, %v3605
      %v3633 = vmax.f32 %v2513, %v3606
      %v3634 = vmax.f32 %v2514, %v3607
      %v3635 = vmax.f32 %v2515, %v3608
      %v3636 = vmax.f32 %v2516, %v3609
      %v3637 = vmax.f32 %v2517, %v3610
      %v3638 = vmax.f32 %v2518, %v3611
      %v3639 = vmax.f32 %v2519, %v3612
      %v3640 = vmax.f32 %v2520, %v3613
      %v3641 = vmul.f32 %v1048, %v507
      %v3642 = vmul.f32 %v1053, %v507
      %v3643 = vmul.f32 %v1058, %v507
      %v3644 = vmul.f32 %v1063, %v507
      %v3645 = vmul.f32 %v1068, %v507
      %v3646 = vmul.f32 %v1073, %v507
      %v3647 = vmul.f32 %v1078, %v507
      %v3648 = vmul.f32 %v1083, %v507
      %v3649 = vmul.f32 %v1088, %v507
      %v3650 = vmul.f32 %v1093, %v507
      %v3651 = vmul.f32 %v1098, %v507
      %v3652 = vmul.f32 %v1103, %v507
      %v3653 = vmul.f32 %v1108, %v507
      %v3654 = vmul.f32 %v1113, %v507
      %v3655 = vmul.f32 %v1118, %v507
      %v3656 = vmul.f32 %v1123, %v507
      %v3657 = vmul.f32 %v1128, %v507
      %v3658 = vmul.f32 %v1133, %v507
      %v3659 = vmul.f32 %v1138, %v507
      %v3660 = vmul.f32 %v1143, %v507
      %v3661 = vmul.f32 %v1148, %v507
      %v3662 = vmul.f32 %v1153, %v507
      %v3663 = vmul.f32 %v1158, %v507
      %v3664 = vmul.f32 %v1163, %v507
      %v3665 = vmul.f32 %v1168, %v507
      %v3666 = vmul.f32 %v1173, %v507
      %v3667 = vmul.f32 %v1178, %v507
      %v3668 = vadd.f32 %v3641, 0.0
      %v3669 = vadd.f32 %v3642, 0.0
      %v3670 = vadd.f32 %v3643, 0.0
      %v3671 = vadd.f32 %v3644, 0.0
      %v3672 = vadd.f32 %v3645, 0.0
      %v3673 = vadd.f32 %v3646, 0.0
      %v3674 = vadd.f32 %v3647, 0.0
      %v3675 = vadd.f32 %v3648, 0.0
      %v3676 = vadd.f32 %v3649, 0.0
      %v3677 = vadd.f32 %v3650, 0.0
      %v3678 = vadd.f32 %v3651, 0.0
      %v3679 = vadd.f32 %v3652, 0.0
      %v3680 = vadd.f32 %v3653, 0.0
      %v3681 = vadd.f32 %v3654, 0.0
      %v3682 = vadd.f32 %v3655, 0.0
      %v3683 = vadd.f32 %v3656, 0.0
      %v3684 = vadd.f32 %v3657, 0.0
      %v3685 = vadd.f32 %v3658, 0.0
      %v3686 = vadd.f32 %v3659, 0.0
      %v3687 = vadd.f32 %v3660, 0.0
      %v3688 = vadd.f32 %v3661, 0.0
      %v3689 = vadd.f32 %v3662, 0.0
      %v3690 = vadd.f32 %v3663, 0.0
      %v3691 = vadd.f32 %v3664, 0.0
      %v3692 = vadd.f32 %v3665, 0.0
      %v3693 = vadd.f32 %v3666, 0.0
      %v3694 = vadd.f32 %v3667, 0.0
      %v3695 = vmul.f32 %v1298, %v757
      %v3696 = vmul.f32 %v1303, %v757
      %v3697 = vmul.f32 %v1308, %v757
      %v3698 = vmul.f32 %v1313, %v757
      %v3699 = vmul.f32 %v1318, %v757
      %v3700 = vmul.f32 %v1323, %v757
      %v3701 = vmul.f32 %v1328, %v757
      %v3702 = vmul.f32 %v1333, %v757
      %v3703 = vmul.f32 %v1338, %v757
      %v3704 = vmul.f32 %v1343, %v757
      %v3705 = vmul.f32 %v1348, %v757
      %v3706 = vmul.f32 %v1353, %v757
      %v3707 = vmul.f32 %v1358, %v757
      %v3708 = vmul.f32 %v1363, %v757
      %v3709 = vmul.f32 %v1368, %v757
      %v3710 = vmul.f32 %v1373, %v757
      %v3711 = vmul.f32 %v1378, %v757
      %v3712 = vmul.f32 %v1383, %v757
      %v3713 = vmul.f32 %v1388, %v757
      %v3714 = vmul.f32 %v1393, %v757
      %v3715 = vmul.f32 %v1398, %v757
      %v3716 = vmul.f32 %v1403, %v757
      %v3717 = vmul.f32 %v1408, %v757
      %v3718 = vmul.f32 %v1413, %v757
      %v3719 = vmul.f32 %v1418, %v757
      %v3720 = vmul.f32 %v1423, %v757
      %v3721 = vmul.f32 %v1428, %v757
      %v3722 = vadd.f32 %v3668, %v3695
      %v3723 = vadd.f32 %v3669, %v3696
      %v3724 = vadd.f32 %v3670, %v3697
      %v3725 = vadd.f32 %v3671, %v3698
      %v3726 = vadd.f32 %v3672, %v3699
      %v3727 = vadd.f32 %v3673, %v3700
      %v3728 = vadd.f32 %v3674, %v3701
      %v3729 = vadd.f32 %v3675, %v3702
      %v3730 = vadd.f32 %v3676, %v3703
      %v3731 = vadd.f32 %v3677, %v3704
      %v3732 = vadd.f32 %v3678, %v3705
      %v3733 = vadd.f32 %v3679, %v3706
      %v3734 = vadd.f32 %v3680, %v3707
      %v3735 = vadd.f32 %v3681, %v3708
      %v3736 = vadd.f32 %v3682, %v3709
      %v3737 = vadd.f32 %v3683, %v3710
      %v3738 = vadd.f32 %v3684, %v3711
      %v3739 = vadd.f32 %v3685, %v3712
      %v3740 = vadd.f32 %v3686, %v3713
      %v3741 = vadd.f32 %v3687, %v3714
      %v3742 = vadd.f32 %v3688, %v3715
      %v3743 = vadd.f32 %v3689, %v3716
      %v3744 = vadd.f32 %v3690, %v3717
      %v3745 = vadd.f32 %v3691, %v3718
      %v3746 = vadd.f32 %v3692, %v3719
      %v3747 = vadd.f32 %v3693, %v3720
      %v3748 = vadd.f32 %v3694, %v3721
      %v3749 = vmul.f32 %v1048, %v825
      %v3750 = vmul.f32 %v1053, %v825
      %v3751 = vmul.f32 %v1058, %v825
      %v3752 = vmul.f32 %v1063, %v825
      %v3753 = vmul.f32 %v1068, %v825
      %v3754 = vmul.f32 %v1073, %v825
      %v3755 = vmul.f32 %v1078, %v825
      %v3756 = vmul.f32 %v1083, %v825
      %v3757 = vmul.f32 %v1088, %v825
      %v3758 = vmul.f32 %v1093, %v825
      %v3759 = vmul.f32 %v1098, %v825
      %v3760 = vmul.f32 %v1103, %v825
      %v3761 = vmul.f32 %v1108, %v825
      %v3762 = vmul.f32 %v1113, %v825
      %v3763 = vmul.f32 %v1118, %v825
      %v3764 = vmul.f32 %v1123, %v825
      %v3765 = vmul.f32 %v1128, %v825
      %v3766 = vmul.f32 %v1133, %v825
      %v3767 = vmul.f32 %v1138, %v825
      %v3768 = vmul.f32 %v1143, %v825
      %v3769 = vmul.f32 %v1148, %v825
      %v3770 = vmul.f32 %v1153, %v825
      %v3771 = vmul.f32 %v1158, %v825
      %v3772 = vmul.f32 %v1163, %v825
      %v3773 = vmul.f32 %v1168, %v825
      %v3774 = vmul.f32 %v1173, %v825
      %v3775 = vmul.f32 %v1496, %v825
      %v3803 = vrot.slane %v3749, 1
      %v3804 = vrot.slane %v3750, 1
      %v3805 = vsel %vm880, %v3803, %v3804
      %v3806 = vrot.slane %v3751, 1
      %v3807 = vsel %vm880, %v3804, %v3806
      %v3808 = vrot.slane %v3752, 1
      %v3809 = vsel %vm880, %v3806, %v3808
      %v3810 = vrot.slane %v3753, 1
      %v3811 = vsel %vm880, %v3808, %v3810
      %v3812 = vrot.slane %v3754, 1
      %v3813 = vsel %vm880, %v3810, %v3812
      %v3814 = vrot.slane %v3755, 1
      %v3815 = vsel %vm880, %v3812, %v3814
      %v3816 = vrot.slane %v3756, 1
      %v3817 = vsel %vm880, %v3814, %v3816
      %v3818 = vrot.slane %v3757, 1
      %v3819 = vsel %vm880, %v3816, %v3818
      %v3820 = vrot.slane %v3758, 1
      %v3821 = vsel %vm880, %v3818, %v3820
      %v3822 = vrot.slane %v3759, 1
      %v3823 = vsel %vm880, %v3820, %v3822
      %v3824 = vrot.slane %v3760, 1
      %v3825 = vsel %vm880, %v3822, %v3824
      %v3826 = vrot.slane %v3761, 1
      %v3827 = vsel %vm880, %v3824, %v3826
      %v3828 = vrot.slane %v3762, 1
      %v3829 = vsel %vm880, %v3826, %v3828
      %v3830 = vrot.slane %v3763, 1
      %v3831 = vsel %vm880, %v3828, %v3830
      %v3832 = vrot.slane %v3764, 1
      %v3833 = vsel %vm880, %v3830, %v3832
      %v3834 = vrot.slane %v3765, 1
      %v3835 = vsel %vm880, %v3832, %v3834
      %v3836 = vrot.slane %v3766, 1
      %v3837 = vsel %vm880, %v3834, %v3836
      %v3838 = vrot.slane %v3767, 1
      %v3839 = vsel %vm880, %v3836, %v3838
      %v3840 = vrot.slane %v3768, 1
      %v3841 = vsel %vm880, %v3838, %v3840
      %v3842 = vrot.slane %v3769, 1
      %v3843 = vsel %vm880, %v3840, %v3842
      %v3844 = vrot.slane %v3770, 1
      %v3845 = vsel %vm880, %v3842, %v3844
      %v3846 = vrot.slane %v3771, 1
      %v3847 = vsel %vm880, %v3844, %v3846
      %v3848 = vrot.slane %v3772, 1
      %v3849 = vsel %vm880, %v3846, %v3848
      %v3850 = vrot.slane %v3773, 1
      %v3851 = vsel %vm880, %v3848, %v3850
      %v3852 = vrot.slane %v3774, 1
      %v3853 = vsel %vm880, %v3850, %v3852
      %v3854 = vrot.slane %v3775, 1
      %v3855 = vsel %vm880, %v3852, %v3854
      %v3883 = vadd.f32 %v3722, %v3805
      %v3884 = vadd.f32 %v3723, %v3807
      %v3885 = vadd.f32 %v3724, %v3809
      %v3886 = vadd.f32 %v3725, %v3811
      %v3887 = vadd.f32 %v3726, %v3813
      %v3888 = vadd.f32 %v3727, %v3815
      %v3889 = vadd.f32 %v3728, %v3817
      %v3890 = vadd.f32 %v3729, %v3819
      %v3891 = vadd.f32 %v3730, %v3821
      %v3892 = vadd.f32 %v3731, %v3823
      %v3893 = vadd.f32 %v3732, %v3825
      %v3894 = vadd.f32 %v3733, %v3827
      %v3895 = vadd.f32 %v3734, %v3829
      %v3896 = vadd.f32 %v3735, %v3831
      %v3897 = vadd.f32 %v3736, %v3833
      %v3898 = vadd.f32 %v3737, %v3835
      %v3899 = vadd.f32 %v3738, %v3837
      %v3900 = vadd.f32 %v3739, %v3839
      %v3901 = vadd.f32 %v3740, %v3841
      %v3902 = vadd.f32 %v3741, %v3843
      %v3903 = vadd.f32 %v3742, %v3845
      %v3904 = vadd.f32 %v3743, %v3847
      %v3905 = vadd.f32 %v3744, %v3849
      %v3906 = vadd.f32 %v3745, %v3851
      %v3907 = vadd.f32 %v3746, %v3853
      %v3908 = vadd.f32 %v3747, %v3855
      %v3909 = vadd.f32 %v3748, %v3854
      %v3910 = vmul.f32 %v1725, %v1183
      %v3911 = vmul.f32 %v1730, %v1183
      %v3912 = vmul.f32 %v1735, %v1183
      %v3913 = vmul.f32 %v1740, %v1183
      %v3914 = vmul.f32 %v1745, %v1183
      %v3915 = vmul.f32 %v1750, %v1183
      %v3916 = vmul.f32 %v1755, %v1183
      %v3917 = vmul.f32 %v1760, %v1183
      %v3918 = vmul.f32 %v1765, %v1183
      %v3919 = vmul.f32 %v1770, %v1183
      %v3920 = vmul.f32 %v1775, %v1183
      %v3921 = vmul.f32 %v1780, %v1183
      %v3922 = vmul.f32 %v1785, %v1183
      %v3923 = vmul.f32 %v1790, %v1183
      %v3924 = vmul.f32 %v1795, %v1183
      %v3925 = vmul.f32 %v1800, %v1183
      %v3926 = vmul.f32 %v1805, %v1183
      %v3927 = vmul.f32 %v1810, %v1183
      %v3928 = vmul.f32 %v1815, %v1183
      %v3929 = vmul.f32 %v1820, %v1183
      %v3930 = vmul.f32 %v1825, %v1183
      %v3931 = vmul.f32 %v1830, %v1183
      %v3932 = vmul.f32 %v1835, %v1183
      %v3933 = vmul.f32 %v1840, %v1183
      %v3934 = vmul.f32 %v1845, %v1183
      %v3935 = vmul.f32 %v1850, %v1183
      %v3936 = vmul.f32 %v1855, %v1183
      %v3937 = vmul.f32 %v1860, %v1183
      %v3966 = vrot.slane %v3910, 7
      %v3967 = vrot.slane %v3911, 7
      %v3968 = vsel %vm1922, %v3966, %v3967
      %v3969 = vrot.slane %v3912, 7
      %v3970 = vsel %vm1922, %v3967, %v3969
      %v3971 = vrot.slane %v3913, 7
      %v3972 = vsel %vm1922, %v3969, %v3971
      %v3973 = vrot.slane %v3914, 7
      %v3974 = vsel %vm1922, %v3971, %v3973
      %v3975 = vrot.slane %v3915, 7
      %v3976 = vsel %vm1922, %v3973, %v3975
      %v3977 = vrot.slane %v3916, 7
      %v3978 = vsel %vm1922, %v3975, %v3977
      %v3979 = vrot.slane %v3917, 7
      %v3980 = vsel %vm1922, %v3977, %v3979
      %v3981 = vrot.slane %v3918, 7
      %v3982 = vsel %vm1922, %v3979, %v3981
      %v3983 = vrot.slane %v3919, 7
      %v3984 = vsel %vm1922, %v3981, %v3983
      %v3985 = vrot.slane %v3920, 7
      %v3986 = vsel %vm1922, %v3983, %v3985
      %v3987 = vrot.slane %v3921, 7
      %v3988 = vsel %vm1922, %v3985, %v3987
      %v3989 = vrot.slane %v3922, 7
      %v3990 = vsel %vm1922, %v3987, %v3989
      %v3991 = vrot.slane %v3923, 7
      %v3992 = vsel %vm1922, %v3989, %v3991
      %v3993 = vrot.slane %v3924, 7
      %v3994 = vsel %vm1922, %v3991, %v3993
      %v3995 = vrot.slane %v3925, 7
      %v3996 = vsel %vm1922, %v3993, %v3995
      %v3997 = vrot.slane %v3926, 7
      %v3998 = vsel %vm1922, %v3995, %v3997
      %v3999 = vrot.slane %v3927, 7
      %v4000 = vsel %vm1922, %v3997, %v3999
      %v4001 = vrot.slane %v3928, 7
      %v4002 = vsel %vm1922, %v3999, %v4001
      %v4003 = vrot.slane %v3929, 7
      %v4004 = vsel %vm1922, %v4001, %v4003
      %v4005 = vrot.slane %v3930, 7
      %v4006 = vsel %vm1922, %v4003, %v4005
      %v4007 = vrot.slane %v3931, 7
      %v4008 = vsel %vm1922, %v4005, %v4007
      %v4009 = vrot.slane %v3932, 7
      %v4010 = vsel %vm1922, %v4007, %v4009
      %v4011 = vrot.slane %v3933, 7
      %v4012 = vsel %vm1922, %v4009, %v4011
      %v4013 = vrot.slane %v3934, 7
      %v4014 = vsel %vm1922, %v4011, %v4013
      %v4015 = vrot.slane %v3935, 7
      %v4016 = vsel %vm1922, %v4013, %v4015
      %v4017 = vrot.slane %v3936, 7
      %v4018 = vsel %vm1922, %v4015, %v4017
      %v4019 = vrot.slane %v3937, 7
      %v4020 = vsel %vm1922, %v4017, %v4019
      %v4048 = vadd.f32 %v3883, %v3968
      %v4049 = vadd.f32 %v3884, %v3970
      %v4050 = vadd.f32 %v3885, %v3972
      %v4051 = vadd.f32 %v3886, %v3974
      %v4052 = vadd.f32 %v3887, %v3976
      %v4053 = vadd.f32 %v3888, %v3978
      %v4054 = vadd.f32 %v3889, %v3980
      %v4055 = vadd.f32 %v3890, %v3982
      %v4056 = vadd.f32 %v3891, %v3984
      %v4057 = vadd.f32 %v3892, %v3986
      %v4058 = vadd.f32 %v3893, %v3988
      %v4059 = vadd.f32 %v3894, %v3990
      %v4060 = vadd.f32 %v3895, %v3992
      %v4061 = vadd.f32 %v3896, %v3994
      %v4062 = vadd.f32 %v3897, %v3996
      %v4063 = vadd.f32 %v3898, %v3998
      %v4064 = vadd.f32 %v3899, %v4000
      %v4065 = vadd.f32 %v3900, %v4002
      %v4066 = vadd.f32 %v3901, %v4004
      %v4067 = vadd.f32 %v3902, %v4006
      %v4068 = vadd.f32 %v3903, %v4008
      %v4069 = vadd.f32 %v3904, %v4010
      %v4070 = vadd.f32 %v3905, %v4012
      %v4071 = vadd.f32 %v3906, %v4014
      %v4072 = vadd.f32 %v3907, %v4016
      %v4073 = vadd.f32 %v3908, %v4018
      %v4074 = vadd.f32 %v3909, %v4020
      %v4075 = vmul.f32 %v2094, %v1433
      %v4076 = vmul.f32 %v2099, %v1433
      %v4077 = vmul.f32 %v2104, %v1433
      %v4078 = vmul.f32 %v2109, %v1433
      %v4079 = vmul.f32 %v2114, %v1433
      %v4080 = vmul.f32 %v2119, %v1433
      %v4081 = vmul.f32 %v2124, %v1433
      %v4082 = vmul.f32 %v2129, %v1433
      %v4083 = vmul.f32 %v2134, %v1433
      %v4084 = vmul.f32 %v2139, %v1433
      %v4085 = vmul.f32 %v2144, %v1433
      %v4086 = vmul.f32 %v2149, %v1433
      %v4087 = vmul.f32 %v2154, %v1433
      %v4088 = vmul.f32 %v2159, %v1433
      %v4089 = vmul.f32 %v2164, %v1433
      %v4090 = vmul.f32 %v2169, %v1433
      %v4091 = vmul.f32 %v2174, %v1433
      %v4092 = vmul.f32 %v2179, %v1433
      %v4093 = vmul.f32 %v2184, %v1433
      %v4094 = vmul.f32 %v2189, %v1433
      %v4095 = vmul.f32 %v2194, %v1433
      %v4096 = vmul.f32 %v2199, %v1433
      %v4097 = vmul.f32 %v2204, %v1433
      %v4098 = vmul.f32 %v2209, %v1433
      %v4099 = vmul.f32 %v2214, %v1433
      %v4100 = vmul.f32 %v2219, %v1433
      %v4101 = vmul.f32 %v2224, %v1433
      %v4102 = vmul.f32 %v2229, %v1433
      %v4131 = vrot.slane %v4075, 7
      %v4132 = vrot.slane %v4076, 7
      %v4133 = vsel %vm1922, %v4131, %v4132
      %v4134 = vrot.slane %v4077, 7
      %v4135 = vsel %vm1922, %v4132, %v4134
      %v4136 = vrot.slane %v4078, 7
      %v4137 = vsel %vm1922, %v4134, %v4136
      %v4138 = vrot.slane %v4079, 7
      %v4139 = vsel %vm1922, %v4136, %v4138
      %v4140 = vrot.slane %v4080, 7
      %v4141 = vsel %vm1922, %v4138, %v4140
      %v4142 = vrot.slane %v4081, 7
      %v4143 = vsel %vm1922, %v4140, %v4142
      %v4144 = vrot.slane %v4082, 7
      %v4145 = vsel %vm1922, %v4142, %v4144
      %v4146 = vrot.slane %v4083, 7
      %v4147 = vsel %vm1922, %v4144, %v4146
      %v4148 = vrot.slane %v4084, 7
      %v4149 = vsel %vm1922, %v4146, %v4148
      %v4150 = vrot.slane %v4085, 7
      %v4151 = vsel %vm1922, %v4148, %v4150
      %v4152 = vrot.slane %v4086, 7
      %v4153 = vsel %vm1922, %v4150, %v4152
      %v4154 = vrot.slane %v4087, 7
      %v4155 = vsel %vm1922, %v4152, %v4154
      %v4156 = vrot.slane %v4088, 7
      %v4157 = vsel %vm1922, %v4154, %v4156
      %v4158 = vrot.slane %v4089, 7
      %v4159 = vsel %vm1922, %v4156, %v4158
      %v4160 = vrot.slane %v4090, 7
      %v4161 = vsel %vm1922, %v4158, %v4160
      %v4162 = vrot.slane %v4091, 7
      %v4163 = vsel %vm1922, %v4160, %v4162
      %v4164 = vrot.slane %v4092, 7
      %v4165 = vsel %vm1922, %v4162, %v4164
      %v4166 = vrot.slane %v4093, 7
      %v4167 = vsel %vm1922, %v4164, %v4166
      %v4168 = vrot.slane %v4094, 7
      %v4169 = vsel %vm1922, %v4166, %v4168
      %v4170 = vrot.slane %v4095, 7
      %v4171 = vsel %vm1922, %v4168, %v4170
      %v4172 = vrot.slane %v4096, 7
      %v4173 = vsel %vm1922, %v4170, %v4172
      %v4174 = vrot.slane %v4097, 7
      %v4175 = vsel %vm1922, %v4172, %v4174
      %v4176 = vrot.slane %v4098, 7
      %v4177 = vsel %vm1922, %v4174, %v4176
      %v4178 = vrot.slane %v4099, 7
      %v4179 = vsel %vm1922, %v4176, %v4178
      %v4180 = vrot.slane %v4100, 7
      %v4181 = vsel %vm1922, %v4178, %v4180
      %v4182 = vrot.slane %v4101, 7
      %v4183 = vsel %vm1922, %v4180, %v4182
      %v4184 = vrot.slane %v4102, 7
      %v4185 = vsel %vm1922, %v4182, %v4184
      %v4213 = vadd.f32 %v4048, %v4133
      %v4214 = vadd.f32 %v4049, %v4135
      %v4215 = vadd.f32 %v4050, %v4137
      %v4216 = vadd.f32 %v4051, %v4139
      %v4217 = vadd.f32 %v4052, %v4141
      %v4218 = vadd.f32 %v4053, %v4143
      %v4219 = vadd.f32 %v4054, %v4145
      %v4220 = vadd.f32 %v4055, %v4147
      %v4221 = vadd.f32 %v4056, %v4149
      %v4222 = vadd.f32 %v4057, %v4151
      %v4223 = vadd.f32 %v4058, %v4153
      %v4224 = vadd.f32 %v4059, %v4155
      %v4225 = vadd.f32 %v4060, %v4157
      %v4226 = vadd.f32 %v4061, %v4159
      %v4227 = vadd.f32 %v4062, %v4161
      %v4228 = vadd.f32 %v4063, %v4163
      %v4229 = vadd.f32 %v4064, %v4165
      %v4230 = vadd.f32 %v4065, %v4167
      %v4231 = vadd.f32 %v4066, %v4169
      %v4232 = vadd.f32 %v4067, %v4171
      %v4233 = vadd.f32 %v4068, %v4173
      %v4234 = vadd.f32 %v4069, %v4175
      %v4235 = vadd.f32 %v4070, %v4177
      %v4236 = vadd.f32 %v4071, %v4179
      %v4237 = vadd.f32 %v4072, %v4181
      %v4238 = vadd.f32 %v4073, %v4183
      %v4239 = vadd.f32 %v4074, %v4185
      %v4240 = vmul.f32 %v1730, %v1501
      %v4241 = vmul.f32 %v1735, %v1501
      %v4242 = vmul.f32 %v1740, %v1501
      %v4243 = vmul.f32 %v1745, %v1501
      %v4244 = vmul.f32 %v1750, %v1501
      %v4245 = vmul.f32 %v1755, %v1501
      %v4246 = vmul.f32 %v1760, %v1501
      %v4247 = vmul.f32 %v1765, %v1501
      %v4248 = vmul.f32 %v1770, %v1501
      %v4249 = vmul.f32 %v1775, %v1501
      %v4250 = vmul.f32 %v1780, %v1501
      %v4251 = vmul.f32 %v1785, %v1501
      %v4252 = vmul.f32 %v1790, %v1501
      %v4253 = vmul.f32 %v1795, %v1501
      %v4254 = vmul.f32 %v1800, %v1501
      %v4255 = vmul.f32 %v1805, %v1501
      %v4256 = vmul.f32 %v1810, %v1501
      %v4257 = vmul.f32 %v1815, %v1501
      %v4258 = vmul.f32 %v1820, %v1501
      %v4259 = vmul.f32 %v1825, %v1501
      %v4260 = vmul.f32 %v1830, %v1501
      %v4261 = vmul.f32 %v1835, %v1501
      %v4262 = vmul.f32 %v1840, %v1501
      %v4263 = vmul.f32 %v1845, %v1501
      %v4264 = vmul.f32 %v1850, %v1501
      %v4265 = vmul.f32 %v1855, %v1501
      %v4266 = vmul.f32 %v1860, %v1501
      %v4267 = vadd.f32 %v4213, %v4240
      %v4268 = vadd.f32 %v4214, %v4241
      %v4269 = vadd.f32 %v4215, %v4242
      %v4270 = vadd.f32 %v4216, %v4243
      %v4271 = vadd.f32 %v4217, %v4244
      %v4272 = vadd.f32 %v4218, %v4245
      %v4273 = vadd.f32 %v4219, %v4246
      %v4274 = vadd.f32 %v4220, %v4247
      %v4275 = vadd.f32 %v4221, %v4248
      %v4276 = vadd.f32 %v4222, %v4249
      %v4277 = vadd.f32 %v4223, %v4250
      %v4278 = vadd.f32 %v4224, %v4251
      %v4279 = vadd.f32 %v4225, %v4252
      %v4280 = vadd.f32 %v4226, %v4253
      %v4281 = vadd.f32 %v4227, %v4254
      %v4282 = vadd.f32 %v4228, %v4255
      %v4283 = vadd.f32 %v4229, %v4256
      %v4284 = vadd.f32 %v4230, %v4257
      %v4285 = vadd.f32 %v4231, %v4258
      %v4286 = vadd.f32 %v4232, %v4259
      %v4287 = vadd.f32 %v4233, %v4260
      %v4288 = vadd.f32 %v4234, %v4261
      %v4289 = vadd.f32 %v4235, %v4262
      %v4290 = vadd.f32 %v4236, %v4263
      %v4291 = vadd.f32 %v4237, %v4264
      %v4292 = vadd.f32 %v4238, %v4265
      %v4293 = vadd.f32 %v4239, %v4266
      %v4294 = vld [vmem:[%s301 + $0x4] sm:$0x8]
      %v4295 = vld [vmem:[%s301 + $0x8] sm:$0xf]
      %v4296 = vld [vmem:[%s301 + $0xc] sm:$0xf]
      %v4297 = vld [vmem:[%s301 + $0x10] sm:$0xf]
      %v4298 = vld [vmem:[%s301 + $0x14] sm:$0xf]
      %v4299 = vld [vmem:[%s301 + $0x18] sm:$0xf]
      %v4300 = vld [vmem:[%s301 + $0x1c] sm:$0xf]
      %v4301 = vld [vmem:[%s301 + $0x20] sm:$0xf]
      %v4302 = vld [vmem:[%s301 + $0x24] sm:$0xf]
      %v4303 = vld [vmem:[%s301 + $0x28] sm:$0xf]
      %v4304 = vld [vmem:[%s301 + $0x2c] sm:$0xf]
      %v4305 = vld [vmem:[%s301 + $0x30] sm:$0xf]
      %v4306 = vld [vmem:[%s301 + $0x34] sm:$0xf]
      %v4307 = vld [vmem:[%s301 + $0x38] sm:$0xf]
      %v4308 = vld [vmem:[%s301 + $0x3c] sm:$0xf]
      %v4309 = vld [vmem:[%s301 + $0x40] sm:$0xf]
      %v4310 = vld [vmem:[%s301 + $0x44] sm:$0xf]
      %v4311 = vld [vmem:[%s301 + $0x48] sm:$0xf]
      %v4312 = vld [vmem:[%s301 + $0x4c] sm:$0xf]
      %v4313 = vld [vmem:[%s301 + $0x50] sm:$0xf]
      %v4314 = vld [vmem:[%s301 + $0x54] sm:$0xf]
      %v4315 = vld [vmem:[%s301 + $0x58] sm:$0xf]
      %v4316 = vld [vmem:[%s301 + $0x5c] sm:$0xf]
      %v4317 = vld [vmem:[%s301 + $0x60] sm:$0xf]
      %v4318 = vld [vmem:[%s301 + $0x64] sm:$0xf]
      %v4319 = vld [vmem:[%s301 + $0x68] sm:$0xf]
      %v4320 = vld [vmem:[%s301 + $0x6c] sm:$0xf]
      %v4321 = vld [vmem:[%s301 + $0x70] sm:$0x1]
      %v4322 = vunpack.c.l.bf16 %v4294
      %v4323 = vunpack.c.l.bf16 %v4295
      %v4324 = vunpack.c.l.bf16 %v4296
      %v4325 = vunpack.c.l.bf16 %v4297
      %v4326 = vunpack.c.l.bf16 %v4298
      %v4327 = vunpack.c.l.bf16 %v4299
      %v4328 = vunpack.c.l.bf16 %v4300
      %v4329 = vunpack.c.l.bf16 %v4301
      %v4330 = vunpack.c.l.bf16 %v4302
      %v4331 = vunpack.c.l.bf16 %v4303
      %v4332 = vunpack.c.l.bf16 %v4304
      %v4333 = vunpack.c.l.bf16 %v4305
      %v4334 = vunpack.c.l.bf16 %v4306
      %v4335 = vunpack.c.l.bf16 %v4307
      %v4336 = vunpack.c.l.bf16 %v4308
      %v4337 = vunpack.c.l.bf16 %v4309
      %v4338 = vunpack.c.l.bf16 %v4310
      %v4339 = vunpack.c.l.bf16 %v4311
      %v4340 = vunpack.c.l.bf16 %v4312
      %v4341 = vunpack.c.l.bf16 %v4313
      %v4342 = vunpack.c.l.bf16 %v4314
      %v4343 = vunpack.c.l.bf16 %v4315
      %v4344 = vunpack.c.l.bf16 %v4316
      %v4345 = vunpack.c.l.bf16 %v4317
      %v4346 = vunpack.c.l.bf16 %v4318
      %v4347 = vunpack.c.l.bf16 %v4319
      %v4348 = vunpack.c.l.bf16 %v4320
      %v4349 = vunpack.c.l.bf16 %v4321
      %4351 = vset.pattern.permute.xlu0 0
      %4352 = vperm.xlu0 %4351, %v4322
      %v4353 = vpop.permute.xlu0 %4352
      %4356 = vset.pattern.permute.xlu0 0
      %4357 = vperm.xlu0 %4356, %v4323
      %v4358 = vpop.permute.xlu0 %4357
      %4361 = vset.pattern.permute.xlu0 0
      %4362 = vperm.xlu0 %4361, %v4324
      %v4363 = vpop.permute.xlu0 %4362
      %4366 = vset.pattern.permute.xlu0 0
      %4367 = vperm.xlu0 %4366, %v4325
      %v4368 = vpop.permute.xlu0 %4367
      %4371 = vset.pattern.permute.xlu0 0
      %4372 = vperm.xlu0 %4371, %v4326
      %v4373 = vpop.permute.xlu0 %4372
      %4376 = vset.pattern.permute.xlu0 0
      %4377 = vperm.xlu0 %4376, %v4327
      %v4378 = vpop.permute.xlu0 %4377
      %4381 = vset.pattern.permute.xlu0 0
      %4382 = vperm.xlu0 %4381, %v4328
      %v4383 = vpop.permute.xlu0 %4382
      %4386 = vset.pattern.permute.xlu0 0
      %4387 = vperm.xlu0 %4386, %v4329
      %v4388 = vpop.permute.xlu0 %4387
      %4391 = vset.pattern.permute.xlu0 0
      %4392 = vperm.xlu0 %4391, %v4330
      %v4393 = vpop.permute.xlu0 %4392
      %4396 = vset.pattern.permute.xlu0 0
      %4397 = vperm.xlu0 %4396, %v4331
      %v4398 = vpop.permute.xlu0 %4397
      %4401 = vset.pattern.permute.xlu0 0
      %4402 = vperm.xlu0 %4401, %v4332
      %v4403 = vpop.permute.xlu0 %4402
      %4406 = vset.pattern.permute.xlu0 0
      %4407 = vperm.xlu0 %4406, %v4333
      %v4408 = vpop.permute.xlu0 %4407
      %4411 = vset.pattern.permute.xlu0 0
      %4412 = vperm.xlu0 %4411, %v4334
      %v4413 = vpop.permute.xlu0 %4412
      %4416 = vset.pattern.permute.xlu0 0
      %4417 = vperm.xlu0 %4416, %v4335
      %v4418 = vpop.permute.xlu0 %4417
      %4421 = vset.pattern.permute.xlu0 0
      %4422 = vperm.xlu0 %4421, %v4336
      %v4423 = vpop.permute.xlu0 %4422
      %4426 = vset.pattern.permute.xlu0 0
      %4427 = vperm.xlu0 %4426, %v4337
      %v4428 = vpop.permute.xlu0 %4427
      %4431 = vset.pattern.permute.xlu0 0
      %4432 = vperm.xlu0 %4431, %v4338
      %v4433 = vpop.permute.xlu0 %4432
      %4436 = vset.pattern.permute.xlu0 0
      %4437 = vperm.xlu0 %4436, %v4339
      %v4438 = vpop.permute.xlu0 %4437
      %4441 = vset.pattern.permute.xlu0 0
      %4442 = vperm.xlu0 %4441, %v4340
      %v4443 = vpop.permute.xlu0 %4442
      %4446 = vset.pattern.permute.xlu0 0
      %4447 = vperm.xlu0 %4446, %v4341
      %v4448 = vpop.permute.xlu0 %4447
      %4451 = vset.pattern.permute.xlu0 0
      %4452 = vperm.xlu0 %4451, %v4342
      %v4453 = vpop.permute.xlu0 %4452
      %4456 = vset.pattern.permute.xlu0 0
      %4457 = vperm.xlu0 %4456, %v4343
      %v4458 = vpop.permute.xlu0 %4457
      %4461 = vset.pattern.permute.xlu0 0
      %4462 = vperm.xlu0 %4461, %v4344
      %v4463 = vpop.permute.xlu0 %4462
      %4466 = vset.pattern.permute.xlu0 0
      %4467 = vperm.xlu0 %4466, %v4345
      %v4468 = vpop.permute.xlu0 %4467
      %4471 = vset.pattern.permute.xlu0 0
      %4472 = vperm.xlu0 %4471, %v4346
      %v4473 = vpop.permute.xlu0 %4472
      %4476 = vset.pattern.permute.xlu0 0
      %4477 = vperm.xlu0 %4476, %v4347
      %v4478 = vpop.permute.xlu0 %4477
      %4481 = vset.pattern.permute.xlu0 0
      %4482 = vperm.xlu0 %4481, %v4348
      %v4483 = vpop.permute.xlu0 %4482
      %4486 = vset.pattern.permute.xlu0 0
      %4487 = vperm.xlu0 %4486, %v4349
      %v4488 = vpop.permute.xlu0 %4487
      %v4490 = vmul.f32 %v4353, %v1865
      %v4491 = vmul.f32 %v4358, %v1865
      %v4492 = vmul.f32 %v4363, %v1865
      %v4493 = vmul.f32 %v4368, %v1865
      %v4494 = vmul.f32 %v4373, %v1865
      %v4495 = vmul.f32 %v4378, %v1865
      %v4496 = vmul.f32 %v4383, %v1865
      %v4497 = vmul.f32 %v4388, %v1865
      %v4498 = vmul.f32 %v4393, %v1865
      %v4499 = vmul.f32 %v4398, %v1865
      %v4500 = vmul.f32 %v4403, %v1865
      %v4501 = vmul.f32 %v4408, %v1865
      %v4502 = vmul.f32 %v4413, %v1865
      %v4503 = vmul.f32 %v4418, %v1865
      %v4504 = vmul.f32 %v4423, %v1865
      %v4505 = vmul.f32 %v4428, %v1865
      %v4506 = vmul.f32 %v4433, %v1865
      %v4507 = vmul.f32 %v4438, %v1865
      %v4508 = vmul.f32 %v4443, %v1865
      %v4509 = vmul.f32 %v4448, %v1865
      %v4510 = vmul.f32 %v4453, %v1865
      %v4511 = vmul.f32 %v4458, %v1865
      %v4512 = vmul.f32 %v4463, %v1865
      %v4513 = vmul.f32 %v4468, %v1865
      %v4514 = vmul.f32 %v4473, %v1865
      %v4515 = vmul.f32 %v4478, %v1865
      %v4516 = vmul.f32 %v4483, %v1865
      %v4517 = vmul.f32 %v4488, %v1865
      %v4546 = vrot.slane %v4490, 7
      %v4547 = vrot.slane %v4491, 7
      %v4548 = vsel %vm1922, %v4546, %v4547
      %v4549 = vrot.slane %v4492, 7
      %v4550 = vsel %vm1922, %v4547, %v4549
      %v4551 = vrot.slane %v4493, 7
      %v4552 = vsel %vm1922, %v4549, %v4551
      %v4553 = vrot.slane %v4494, 7
      %v4554 = vsel %vm1922, %v4551, %v4553
      %v4555 = vrot.slane %v4495, 7
      %v4556 = vsel %vm1922, %v4553, %v4555
      %v4557 = vrot.slane %v4496, 7
      %v4558 = vsel %vm1922, %v4555, %v4557
      %v4559 = vrot.slane %v4497, 7
      %v4560 = vsel %vm1922, %v4557, %v4559
      %v4561 = vrot.slane %v4498, 7
      %v4562 = vsel %vm1922, %v4559, %v4561
      %v4563 = vrot.slane %v4499, 7
      %v4564 = vsel %vm1922, %v4561, %v4563
      %v4565 = vrot.slane %v4500, 7
      %v4566 = vsel %vm1922, %v4563, %v4565
      %v4567 = vrot.slane %v4501, 7
      %v4568 = vsel %vm1922, %v4565, %v4567
      %v4569 = vrot.slane %v4502, 7
      %v4570 = vsel %vm1922, %v4567, %v4569
      %v4571 = vrot.slane %v4503, 7
      %v4572 = vsel %vm1922, %v4569, %v4571
      %v4573 = vrot.slane %v4504, 7
      %v4574 = vsel %vm1922, %v4571, %v4573
      %v4575 = vrot.slane %v4505, 7
      %v4576 = vsel %vm1922, %v4573, %v4575
      %v4577 = vrot.slane %v4506, 7
      %v4578 = vsel %vm1922, %v4575, %v4577
      %v4579 = vrot.slane %v4507, 7
      %v4580 = vsel %vm1922, %v4577, %v4579
      %v4581 = vrot.slane %v4508, 7
      %v4582 = vsel %vm1922, %v4579, %v4581
      %v4583 = vrot.slane %v4509, 7
      %v4584 = vsel %vm1922, %v4581, %v4583
      %v4585 = vrot.slane %v4510, 7
      %v4586 = vsel %vm1922, %v4583, %v4585
      %v4587 = vrot.slane %v4511, 7
      %v4588 = vsel %vm1922, %v4585, %v4587
      %v4589 = vrot.slane %v4512, 7
      %v4590 = vsel %vm1922, %v4587, %v4589
      %v4591 = vrot.slane %v4513, 7
      %v4592 = vsel %vm1922, %v4589, %v4591
      %v4593 = vrot.slane %v4514, 7
      %v4594 = vsel %vm1922, %v4591, %v4593
      %v4595 = vrot.slane %v4515, 7
      %v4596 = vsel %vm1922, %v4593, %v4595
      %v4597 = vrot.slane %v4516, 7
      %v4598 = vsel %vm1922, %v4595, %v4597
      %v4599 = vrot.slane %v4517, 7
      %v4600 = vsel %vm1922, %v4597, %v4599
      %v4628 = vadd.f32 %v4267, %v4548
      %v4629 = vadd.f32 %v4268, %v4550
      %v4630 = vadd.f32 %v4269, %v4552
      %v4631 = vadd.f32 %v4270, %v4554
      %v4632 = vadd.f32 %v4271, %v4556
      %v4633 = vadd.f32 %v4272, %v4558
      %v4634 = vadd.f32 %v4273, %v4560
      %v4635 = vadd.f32 %v4274, %v4562
      %v4636 = vadd.f32 %v4275, %v4564
      %v4637 = vadd.f32 %v4276, %v4566
      %v4638 = vadd.f32 %v4277, %v4568
      %v4639 = vadd.f32 %v4278, %v4570
      %v4640 = vadd.f32 %v4279, %v4572
      %v4641 = vadd.f32 %v4280, %v4574
      %v4642 = vadd.f32 %v4281, %v4576
      %v4643 = vadd.f32 %v4282, %v4578
      %v4644 = vadd.f32 %v4283, %v4580
      %v4645 = vadd.f32 %v4284, %v4582
      %v4646 = vadd.f32 %v4285, %v4584
      %v4647 = vadd.f32 %v4286, %v4586
      %v4648 = vadd.f32 %v4287, %v4588
      %v4649 = vadd.f32 %v4288, %v4590
      %v4650 = vadd.f32 %v4289, %v4592
      %v4651 = vadd.f32 %v4290, %v4594
      %v4652 = vadd.f32 %v4291, %v4596
      %v4653 = vadd.f32 %v4292, %v4598
      %v4654 = vadd.f32 %v4293, %v4600
      %v4655 = vld [vmem:[%s306 + $0x4] sm:$0x8]
      %v4656 = vld [vmem:[%s306 + $0x8] sm:$0xf]
      %v4657 = vld [vmem:[%s306 + $0xc] sm:$0xf]
      %v4658 = vld [vmem:[%s306 + $0x10] sm:$0xf]
      %v4659 = vld [vmem:[%s306 + $0x14] sm:$0xf]
      %v4660 = vld [vmem:[%s306 + $0x18] sm:$0xf]
      %v4661 = vld [vmem:[%s306 + $0x1c] sm:$0xf]
      %v4662 = vld [vmem:[%s306 + $0x20] sm:$0xf]
      %v4663 = vld [vmem:[%s306 + $0x24] sm:$0xf]
      %v4664 = vld [vmem:[%s306 + $0x28] sm:$0xf]
      %v4665 = vld [vmem:[%s306 + $0x2c] sm:$0xf]
      %v4666 = vld [vmem:[%s306 + $0x30] sm:$0xf]
      %v4667 = vld [vmem:[%s306 + $0x34] sm:$0xf]
      %v4668 = vld [vmem:[%s306 + $0x38] sm:$0xf]
      %v4669 = vld [vmem:[%s306 + $0x3c] sm:$0xf]
      %v4670 = vld [vmem:[%s306 + $0x40] sm:$0xf]
      %v4671 = vld [vmem:[%s306 + $0x44] sm:$0xf]
      %v4672 = vld [vmem:[%s306 + $0x48] sm:$0xf]
      %v4673 = vld [vmem:[%s306 + $0x4c] sm:$0xf]
      %v4674 = vld [vmem:[%s306 + $0x50] sm:$0xf]
      %v4675 = vld [vmem:[%s306 + $0x54] sm:$0xf]
      %v4676 = vld [vmem:[%s306 + $0x58] sm:$0xf]
      %v4677 = vld [vmem:[%s306 + $0x5c] sm:$0xf]
      %v4678 = vld [vmem:[%s306 + $0x60] sm:$0xf]
      %v4679 = vld [vmem:[%s306 + $0x64] sm:$0xf]
      %v4680 = vld [vmem:[%s306 + $0x68] sm:$0xf]
      %v4681 = vld [vmem:[%s306 + $0x6c] sm:$0xf]
      %v4682 = vld [vmem:[%s306 + $0x70] sm:$0x1]
      %v4683 = vunpack.c.l.bf16 %v4655
      %v4684 = vunpack.c.l.bf16 %v4656
      %v4685 = vunpack.c.l.bf16 %v4657
      %v4686 = vunpack.c.l.bf16 %v4658
      %v4687 = vunpack.c.l.bf16 %v4659
      %v4688 = vunpack.c.l.bf16 %v4660
      %v4689 = vunpack.c.l.bf16 %v4661
      %v4690 = vunpack.c.l.bf16 %v4662
      %v4691 = vunpack.c.l.bf16 %v4663
      %v4692 = vunpack.c.l.bf16 %v4664
      %v4693 = vunpack.c.l.bf16 %v4665
      %v4694 = vunpack.c.l.bf16 %v4666
      %v4695 = vunpack.c.l.bf16 %v4667
      %v4696 = vunpack.c.l.bf16 %v4668
      %v4697 = vunpack.c.l.bf16 %v4669
      %v4698 = vunpack.c.l.bf16 %v4670
      %v4699 = vunpack.c.l.bf16 %v4671
      %v4700 = vunpack.c.l.bf16 %v4672
      %v4701 = vunpack.c.l.bf16 %v4673
      %v4702 = vunpack.c.l.bf16 %v4674
      %v4703 = vunpack.c.l.bf16 %v4675
      %v4704 = vunpack.c.l.bf16 %v4676
      %v4705 = vunpack.c.l.bf16 %v4677
      %v4706 = vunpack.c.l.bf16 %v4678
      %v4707 = vunpack.c.l.bf16 %v4679
      %v4708 = vunpack.c.l.bf16 %v4680
      %v4709 = vunpack.c.l.bf16 %v4681
      %v4710 = vunpack.c.l.bf16 %v4682
      %4712 = vset.pattern.permute.xlu0 0
      %4713 = vperm.xlu0 %4712, %v4683
      %v4714 = vpop.permute.xlu0 %4713
      %4717 = vset.pattern.permute.xlu0 0
      %4718 = vperm.xlu0 %4717, %v4684
      %v4719 = vpop.permute.xlu0 %4718
      %4722 = vset.pattern.permute.xlu0 0
      %4723 = vperm.xlu0 %4722, %v4685
      %v4724 = vpop.permute.xlu0 %4723
      %4727 = vset.pattern.permute.xlu0 0
      %4728 = vperm.xlu0 %4727, %v4686
      %v4729 = vpop.permute.xlu0 %4728
      %4732 = vset.pattern.permute.xlu0 0
      %4733 = vperm.xlu0 %4732, %v4687
      %v4734 = vpop.permute.xlu0 %4733
      %4737 = vset.pattern.permute.xlu0 0
      %4738 = vperm.xlu0 %4737, %v4688
      %v4739 = vpop.permute.xlu0 %4738
      %4742 = vset.pattern.permute.xlu0 0
      %4743 = vperm.xlu0 %4742, %v4689
      %v4744 = vpop.permute.xlu0 %4743
      %4747 = vset.pattern.permute.xlu0 0
      %4748 = vperm.xlu0 %4747, %v4690
      %v4749 = vpop.permute.xlu0 %4748
      %4752 = vset.pattern.permute.xlu0 0
      %4753 = vperm.xlu0 %4752, %v4691
      %v4754 = vpop.permute.xlu0 %4753
      %4757 = vset.pattern.permute.xlu0 0
      %4758 = vperm.xlu0 %4757, %v4692
      %v4759 = vpop.permute.xlu0 %4758
      %4762 = vset.pattern.permute.xlu0 0
      %4763 = vperm.xlu0 %4762, %v4693
      %v4764 = vpop.permute.xlu0 %4763
      %4767 = vset.pattern.permute.xlu0 0
      %4768 = vperm.xlu0 %4767, %v4694
      %v4769 = vpop.permute.xlu0 %4768
      %4772 = vset.pattern.permute.xlu0 0
      %4773 = vperm.xlu0 %4772, %v4695
      %v4774 = vpop.permute.xlu0 %4773
      %4777 = vset.pattern.permute.xlu0 0
      %4778 = vperm.xlu0 %4777, %v4696
      %v4779 = vpop.permute.xlu0 %4778
      %4782 = vset.pattern.permute.xlu0 0
      %4783 = vperm.xlu0 %4782, %v4697
      %v4784 = vpop.permute.xlu0 %4783
      %4787 = vset.pattern.permute.xlu0 0
      %4788 = vperm.xlu0 %4787, %v4698
      %v4789 = vpop.permute.xlu0 %4788
      %4792 = vset.pattern.permute.xlu0 0
      %4793 = vperm.xlu0 %4792, %v4699
      %v4794 = vpop.permute.xlu0 %4793
      %4797 = vset.pattern.permute.xlu0 0
      %4798 = vperm.xlu0 %4797, %v4700
      %v4799 = vpop.permute.xlu0 %4798
      %4802 = vset.pattern.permute.xlu0 0
      %4803 = vperm.xlu0 %4802, %v4701
      %v4804 = vpop.permute.xlu0 %4803
      %4807 = vset.pattern.permute.xlu0 0
      %4808 = vperm.xlu0 %4807, %v4702
      %v4809 = vpop.permute.xlu0 %4808
      %4812 = vset.pattern.permute.xlu0 0
      %4813 = vperm.xlu0 %4812, %v4703
      %v4814 = vpop.permute.xlu0 %4813
      %4817 = vset.pattern.permute.xlu0 0
      %4818 = vperm.xlu0 %4817, %v4704
      %v4819 = vpop.permute.xlu0 %4818
      %4822 = vset.pattern.permute.xlu0 0
      %4823 = vperm.xlu0 %4822, %v4705
      %v4824 = vpop.permute.xlu0 %4823
      %4827 = vset.pattern.permute.xlu0 0
      %4828 = vperm.xlu0 %4827, %v4706
      %v4829 = vpop.permute.xlu0 %4828
      %4832 = vset.pattern.permute.xlu0 0
      %4833 = vperm.xlu0 %4832, %v4707
      %v4834 = vpop.permute.xlu0 %4833
      %4837 = vset.pattern.permute.xlu0 0
      %4838 = vperm.xlu0 %4837, %v4708
      %v4839 = vpop.permute.xlu0 %4838
      %4842 = vset.pattern.permute.xlu0 0
      %4843 = vperm.xlu0 %4842, %v4709
      %v4844 = vpop.permute.xlu0 %4843
      %4847 = vset.pattern.permute.xlu0 0
      %4848 = vperm.xlu0 %4847, %v4710
      %v4849 = vpop.permute.xlu0 %4848
      %v4851 = vmul.f32 %v4714, %v2234
      %v4852 = vmul.f32 %v4719, %v2234
      %v4853 = vmul.f32 %v4724, %v2234
      %v4854 = vmul.f32 %v4729, %v2234
      %v4855 = vmul.f32 %v4734, %v2234
      %v4856 = vmul.f32 %v4739, %v2234
      %v4857 = vmul.f32 %v4744, %v2234
      %v4858 = vmul.f32 %v4749, %v2234
      %v4859 = vmul.f32 %v4754, %v2234
      %v4860 = vmul.f32 %v4759, %v2234
      %v4861 = vmul.f32 %v4764, %v2234
      %v4862 = vmul.f32 %v4769, %v2234
      %v4863 = vmul.f32 %v4774, %v2234
      %v4864 = vmul.f32 %v4779, %v2234
      %v4865 = vmul.f32 %v4784, %v2234
      %v4866 = vmul.f32 %v4789, %v2234
      %v4867 = vmul.f32 %v4794, %v2234
      %v4868 = vmul.f32 %v4799, %v2234
      %v4869 = vmul.f32 %v4804, %v2234
      %v4870 = vmul.f32 %v4809, %v2234
      %v4871 = vmul.f32 %v4814, %v2234
      %v4872 = vmul.f32 %v4819, %v2234
      %v4873 = vmul.f32 %v4824, %v2234
      %v4874 = vmul.f32 %v4829, %v2234
      %v4875 = vmul.f32 %v4834, %v2234
      %v4876 = vmul.f32 %v4839, %v2234
      %v4877 = vmul.f32 %v4844, %v2234
      %v4878 = vmul.f32 %v4849, %v2234
      %v4907 = vrot.slane %v4851, 7
      %v4908 = vrot.slane %v4852, 7
      %v4909 = vsel %vm1922, %v4907, %v4908
      %v4910 = vrot.slane %v4853, 7
      %v4911 = vsel %vm1922, %v4908, %v4910
      %v4912 = vrot.slane %v4854, 7
      %v4913 = vsel %vm1922, %v4910, %v4912
      %v4914 = vrot.slane %v4855, 7
      %v4915 = vsel %vm1922, %v4912, %v4914
      %v4916 = vrot.slane %v4856, 7
      %v4917 = vsel %vm1922, %v4914, %v4916
      %v4918 = vrot.slane %v4857, 7
      %v4919 = vsel %vm1922, %v4916, %v4918
      %v4920 = vrot.slane %v4858, 7
      %v4921 = vsel %vm1922, %v4918, %v4920
      %v4922 = vrot.slane %v4859, 7
      %v4923 = vsel %vm1922, %v4920, %v4922
      %v4924 = vrot.slane %v4860, 7
      %v4925 = vsel %vm1922, %v4922, %v4924
      %v4926 = vrot.slane %v4861, 7
      %v4927 = vsel %vm1922, %v4924, %v4926
      %v4928 = vrot.slane %v4862, 7
      %v4929 = vsel %vm1922, %v4926, %v4928
      %v4930 = vrot.slane %v4863, 7
      %v4931 = vsel %vm1922, %v4928, %v4930
      %v4932 = vrot.slane %v4864, 7
      %v4933 = vsel %vm1922, %v4930, %v4932
      %v4934 = vrot.slane %v4865, 7
      %v4935 = vsel %vm1922, %v4932, %v4934
      %v4936 = vrot.slane %v4866, 7
      %v4937 = vsel %vm1922, %v4934, %v4936
      %v4938 = vrot.slane %v4867, 7
      %v4939 = vsel %vm1922, %v4936, %v4938
      %v4940 = vrot.slane %v4868, 7
      %v4941 = vsel %vm1922, %v4938, %v4940
      %v4942 = vrot.slane %v4869, 7
      %v4943 = vsel %vm1922, %v4940, %v4942
      %v4944 = vrot.slane %v4870, 7
      %v4945 = vsel %vm1922, %v4942, %v4944
      %v4946 = vrot.slane %v4871, 7
      %v4947 = vsel %vm1922, %v4944, %v4946
      %v4948 = vrot.slane %v4872, 7
      %v4949 = vsel %vm1922, %v4946, %v4948
      %v4950 = vrot.slane %v4873, 7
      %v4951 = vsel %vm1922, %v4948, %v4950
      %v4952 = vrot.slane %v4874, 7
      %v4953 = vsel %vm1922, %v4950, %v4952
      %v4954 = vrot.slane %v4875, 7
      %v4955 = vsel %vm1922, %v4952, %v4954
      %v4956 = vrot.slane %v4876, 7
      %v4957 = vsel %vm1922, %v4954, %v4956
      %v4958 = vrot.slane %v4877, 7
      %v4959 = vsel %vm1922, %v4956, %v4958
      %v4960 = vrot.slane %v4878, 7
      %v4961 = vsel %vm1922, %v4958, %v4960
      %v4989 = vadd.f32 %v4628, %v4909
      %v4990 = vadd.f32 %v4629, %v4911
      %v4991 = vadd.f32 %v4630, %v4913
      %v4992 = vadd.f32 %v4631, %v4915
      %v4993 = vadd.f32 %v4632, %v4917
      %v4994 = vadd.f32 %v4633, %v4919
      %v4995 = vadd.f32 %v4634, %v4921
      %v4996 = vadd.f32 %v4635, %v4923
      %v4997 = vadd.f32 %v4636, %v4925
      %v4998 = vadd.f32 %v4637, %v4927
      %v4999 = vadd.f32 %v4638, %v4929
      %v5000 = vadd.f32 %v4639, %v4931
      %v5001 = vadd.f32 %v4640, %v4933
      %v5002 = vadd.f32 %v4641, %v4935
      %v5003 = vadd.f32 %v4642, %v4937
      %v5004 = vadd.f32 %v4643, %v4939
      %v5005 = vadd.f32 %v4644, %v4941
      %v5006 = vadd.f32 %v4645, %v4943
      %v5007 = vadd.f32 %v4646, %v4945
      %v5008 = vadd.f32 %v4647, %v4947
      %v5009 = vadd.f32 %v4648, %v4949
      %v5010 = vadd.f32 %v4649, %v4951
      %v5011 = vadd.f32 %v4650, %v4953
      %v5012 = vadd.f32 %v4651, %v4955
      %v5013 = vadd.f32 %v4652, %v4957
      %v5014 = vadd.f32 %v4653, %v4959
      %v5015 = vadd.f32 %v4654, %v4961
      %v5016 = vmul.f32 %v4358, %v2406
      %v5017 = vmul.f32 %v4363, %v2406
      %v5018 = vmul.f32 %v4368, %v2406
      %v5019 = vmul.f32 %v4373, %v2406
      %v5020 = vmul.f32 %v4378, %v2406
      %v5021 = vmul.f32 %v4383, %v2406
      %v5022 = vmul.f32 %v4388, %v2406
      %v5023 = vmul.f32 %v4393, %v2406
      %v5024 = vmul.f32 %v4398, %v2406
      %v5025 = vmul.f32 %v4403, %v2406
      %v5026 = vmul.f32 %v4408, %v2406
      %v5027 = vmul.f32 %v4413, %v2406
      %v5028 = vmul.f32 %v4418, %v2406
      %v5029 = vmul.f32 %v4423, %v2406
      %v5030 = vmul.f32 %v4428, %v2406
      %v5031 = vmul.f32 %v4433, %v2406
      %v5032 = vmul.f32 %v4438, %v2406
      %v5033 = vmul.f32 %v4443, %v2406
      %v5034 = vmul.f32 %v4448, %v2406
      %v5035 = vmul.f32 %v4453, %v2406
      %v5036 = vmul.f32 %v4458, %v2406
      %v5037 = vmul.f32 %v4463, %v2406
      %v5038 = vmul.f32 %v4468, %v2406
      %v5039 = vmul.f32 %v4473, %v2406
      %v5040 = vmul.f32 %v4478, %v2406
      %v5041 = vmul.f32 %v4483, %v2406
      %v5042 = vmul.f32 %v4488, %v2406
      %v5043 = vadd.f32 %v4989, %v5016
      %v5044 = vadd.f32 %v4990, %v5017
      %v5045 = vadd.f32 %v4991, %v5018
      %v5046 = vadd.f32 %v4992, %v5019
      %v5047 = vadd.f32 %v4993, %v5020
      %v5048 = vadd.f32 %v4994, %v5021
      %v5049 = vadd.f32 %v4995, %v5022
      %v5050 = vadd.f32 %v4996, %v5023
      %v5051 = vadd.f32 %v4997, %v5024
      %v5052 = vadd.f32 %v4998, %v5025
      %v5053 = vadd.f32 %v4999, %v5026
      %v5054 = vadd.f32 %v5000, %v5027
      %v5055 = vadd.f32 %v5001, %v5028
      %v5056 = vadd.f32 %v5002, %v5029
      %v5057 = vadd.f32 %v5003, %v5030
      %v5058 = vadd.f32 %v5004, %v5031
      %v5059 = vadd.f32 %v5005, %v5032
      %v5060 = vadd.f32 %v5006, %v5033
      %v5061 = vadd.f32 %v5007, %v5034
      %v5062 = vadd.f32 %v5008, %v5035
      %v5063 = vadd.f32 %v5009, %v5036
      %v5064 = vadd.f32 %v5010, %v5037
      %v5065 = vadd.f32 %v5011, %v5038
      %v5066 = vadd.f32 %v5012, %v5039
      %v5067 = vadd.f32 %v5013, %v5040
      %v5068 = vadd.f32 %v5014, %v5041
      %v5069 = vadd.f32 %v5015, %v5042
      %v5070 = vadd.f32 %v5043, %v2465
      %v5071 = vadd.f32 %v5044, %v2465
      %v5072 = vadd.f32 %v5045, %v2465
      %v5073 = vadd.f32 %v5046, %v2465
      %v5074 = vadd.f32 %v5047, %v2465
      %v5075 = vadd.f32 %v5048, %v2465
      %v5076 = vadd.f32 %v5049, %v2465
      %v5077 = vadd.f32 %v5050, %v2465
      %v5078 = vadd.f32 %v5051, %v2465
      %v5079 = vadd.f32 %v5052, %v2465
      %v5080 = vadd.f32 %v5053, %v2465
      %v5081 = vadd.f32 %v5054, %v2465
      %v5082 = vadd.f32 %v5055, %v2465
      %v5083 = vadd.f32 %v5056, %v2465
      %v5084 = vadd.f32 %v5057, %v2465
      %v5085 = vadd.f32 %v5058, %v2465
      %v5086 = vadd.f32 %v5059, %v2465
      %v5087 = vadd.f32 %v5060, %v2465
      %v5088 = vadd.f32 %v5061, %v2465
      %v5089 = vadd.f32 %v5062, %v2465
      %v5090 = vadd.f32 %v5063, %v2465
      %v5091 = vadd.f32 %v5064, %v2465
      %v5092 = vadd.f32 %v5065, %v2465
      %v5093 = vadd.f32 %v5066, %v2465
      %v5094 = vadd.f32 %v5067, %v2465
      %v5095 = vadd.f32 %v5068, %v2465
      %v5096 = vadd.f32 %v5069, %v2465
      %v5097 = vmax.f32 %v5070, 0.0
      %v5098 = vmax.f32 %v5071, 0.0
      %v5099 = vmax.f32 %v5072, 0.0
      %v5100 = vmax.f32 %v5073, 0.0
      %v5101 = vmax.f32 %v5074, 0.0
      %v5102 = vmax.f32 %v5075, 0.0
      %v5103 = vmax.f32 %v5076, 0.0
      %v5104 = vmax.f32 %v5077, 0.0
      %v5105 = vmax.f32 %v5078, 0.0
      %v5106 = vmax.f32 %v5079, 0.0
      %v5107 = vmax.f32 %v5080, 0.0
      %v5108 = vmax.f32 %v5081, 0.0
      %v5109 = vmax.f32 %v5082, 0.0
      %v5110 = vmax.f32 %v5083, 0.0
      %v5111 = vmax.f32 %v5084, 0.0
      %v5112 = vmax.f32 %v5085, 0.0
      %v5113 = vmax.f32 %v5086, 0.0
      %v5114 = vmax.f32 %v5087, 0.0
      %v5115 = vmax.f32 %v5088, 0.0
      %v5116 = vmax.f32 %v5089, 0.0
      %v5117 = vmax.f32 %v5090, 0.0
      %v5118 = vmax.f32 %v5091, 0.0
      %v5119 = vmax.f32 %v5092, 0.0
      %v5120 = vmax.f32 %v5093, 0.0
      %v5121 = vmax.f32 %v5094, 0.0
      %v5122 = vmax.f32 %v5095, 0.0
      %v5123 = vmax.f32 %v5096, 0.0
      %v5124 = vmax.f32 %v3614, %v5097
      %v5125 = vmax.f32 %v3615, %v5098
      %v5126 = vmax.f32 %v3616, %v5099
      %v5127 = vmax.f32 %v3617, %v5100
      %v5128 = vmax.f32 %v3618, %v5101
      %v5129 = vmax.f32 %v3619, %v5102
      %v5130 = vmax.f32 %v3620, %v5103
      %v5131 = vmax.f32 %v3621, %v5104
      %v5132 = vmax.f32 %v3622, %v5105
      %v5133 = vmax.f32 %v3623, %v5106
      %v5134 = vmax.f32 %v3624, %v5107
      %v5135 = vmax.f32 %v3625, %v5108
      %v5136 = vmax.f32 %v3626, %v5109
      %v5137 = vmax.f32 %v3627, %v5110
      %v5138 = vmax.f32 %v3628, %v5111
      %v5139 = vmax.f32 %v3629, %v5112
      %v5140 = vmax.f32 %v3630, %v5113
      %v5141 = vmax.f32 %v3631, %v5114
      %v5142 = vmax.f32 %v3632, %v5115
      %v5143 = vmax.f32 %v3633, %v5116
      %v5144 = vmax.f32 %v3634, %v5117
      %v5145 = vmax.f32 %v3635, %v5118
      %v5146 = vmax.f32 %v3636, %v5119
      %v5147 = vmax.f32 %v3637, %v5120
      %v5148 = vmax.f32 %v3638, %v5121
      %v5149 = vmax.f32 %v3639, %v5122
      %v5150 = vmax.f32 %v3640, %v5123
      %v5151 = vmul.f32 %v1298, %v507
      %v5152 = vmul.f32 %v1303, %v507
      %v5153 = vmul.f32 %v1308, %v507
      %v5154 = vmul.f32 %v1313, %v507
      %v5155 = vmul.f32 %v1318, %v507
      %v5156 = vmul.f32 %v1323, %v507
      %v5157 = vmul.f32 %v1328, %v507
      %v5158 = vmul.f32 %v1333, %v507
      %v5159 = vmul.f32 %v1338, %v507
      %v5160 = vmul.f32 %v1343, %v507
      %v5161 = vmul.f32 %v1348, %v507
      %v5162 = vmul.f32 %v1353, %v507
      %v5163 = vmul.f32 %v1358, %v507
      %v5164 = vmul.f32 %v1363, %v507
      %v5165 = vmul.f32 %v1368, %v507
      %v5166 = vmul.f32 %v1373, %v507
      %v5167 = vmul.f32 %v1378, %v507
      %v5168 = vmul.f32 %v1383, %v507
      %v5169 = vmul.f32 %v1388, %v507
      %v5170 = vmul.f32 %v1393, %v507
      %v5171 = vmul.f32 %v1398, %v507
      %v5172 = vmul.f32 %v1403, %v507
      %v5173 = vmul.f32 %v1408, %v507
      %v5174 = vmul.f32 %v1413, %v507
      %v5175 = vmul.f32 %v1418, %v507
      %v5176 = vmul.f32 %v1423, %v507
      %v5177 = vmul.f32 %v1428, %v507
      %v5178 = vadd.f32 %v5151, 0.0
      %v5179 = vadd.f32 %v5152, 0.0
      %v5180 = vadd.f32 %v5153, 0.0
      %v5181 = vadd.f32 %v5154, 0.0
      %v5182 = vadd.f32 %v5155, 0.0
      %v5183 = vadd.f32 %v5156, 0.0
      %v5184 = vadd.f32 %v5157, 0.0
      %v5185 = vadd.f32 %v5158, 0.0
      %v5186 = vadd.f32 %v5159, 0.0
      %v5187 = vadd.f32 %v5160, 0.0
      %v5188 = vadd.f32 %v5161, 0.0
      %v5189 = vadd.f32 %v5162, 0.0
      %v5190 = vadd.f32 %v5163, 0.0
      %v5191 = vadd.f32 %v5164, 0.0
      %v5192 = vadd.f32 %v5165, 0.0
      %v5193 = vadd.f32 %v5166, 0.0
      %v5194 = vadd.f32 %v5167, 0.0
      %v5195 = vadd.f32 %v5168, 0.0
      %v5196 = vadd.f32 %v5169, 0.0
      %v5197 = vadd.f32 %v5170, 0.0
      %v5198 = vadd.f32 %v5171, 0.0
      %v5199 = vadd.f32 %v5172, 0.0
      %v5200 = vadd.f32 %v5173, 0.0
      %v5201 = vadd.f32 %v5174, 0.0
      %v5202 = vadd.f32 %v5175, 0.0
      %v5203 = vadd.f32 %v5176, 0.0
      %v5204 = vadd.f32 %v5177, 0.0
      %v5205 = vmul.f32 %v1048, %v757
      %v5206 = vmul.f32 %v1053, %v757
      %v5207 = vmul.f32 %v1058, %v757
      %v5208 = vmul.f32 %v1063, %v757
      %v5209 = vmul.f32 %v1068, %v757
      %v5210 = vmul.f32 %v1073, %v757
      %v5211 = vmul.f32 %v1078, %v757
      %v5212 = vmul.f32 %v1083, %v757
      %v5213 = vmul.f32 %v1088, %v757
      %v5214 = vmul.f32 %v1093, %v757
      %v5215 = vmul.f32 %v1098, %v757
      %v5216 = vmul.f32 %v1103, %v757
      %v5217 = vmul.f32 %v1108, %v757
      %v5218 = vmul.f32 %v1113, %v757
      %v5219 = vmul.f32 %v1118, %v757
      %v5220 = vmul.f32 %v1123, %v757
      %v5221 = vmul.f32 %v1128, %v757
      %v5222 = vmul.f32 %v1133, %v757
      %v5223 = vmul.f32 %v1138, %v757
      %v5224 = vmul.f32 %v1143, %v757
      %v5225 = vmul.f32 %v1148, %v757
      %v5226 = vmul.f32 %v1153, %v757
      %v5227 = vmul.f32 %v1158, %v757
      %v5228 = vmul.f32 %v1163, %v757
      %v5229 = vmul.f32 %v1168, %v757
      %v5230 = vmul.f32 %v1173, %v757
      %v5231 = vmul.f32 %v1496, %v757
      %v5259 = vrot.slane %v5205, 1
      %v5260 = vrot.slane %v5206, 1
      %v5261 = vsel %vm880, %v5259, %v5260
      %v5262 = vrot.slane %v5207, 1
      %v5263 = vsel %vm880, %v5260, %v5262
      %v5264 = vrot.slane %v5208, 1
      %v5265 = vsel %vm880, %v5262, %v5264
      %v5266 = vrot.slane %v5209, 1
      %v5267 = vsel %vm880, %v5264, %v5266
      %v5268 = vrot.slane %v5210, 1
      %v5269 = vsel %vm880, %v5266, %v5268
      %v5270 = vrot.slane %v5211, 1
      %v5271 = vsel %vm880, %v5268, %v5270
      %v5272 = vrot.slane %v5212, 1
      %v5273 = vsel %vm880, %v5270, %v5272
      %v5274 = vrot.slane %v5213, 1
      %v5275 = vsel %vm880, %v5272, %v5274
      %v5276 = vrot.slane %v5214, 1
      %v5277 = vsel %vm880, %v5274, %v5276
      %v5278 = vrot.slane %v5215, 1
      %v5279 = vsel %vm880, %v5276, %v5278
      %v5280 = vrot.slane %v5216, 1
      %v5281 = vsel %vm880, %v5278, %v5280
      %v5282 = vrot.slane %v5217, 1
      %v5283 = vsel %vm880, %v5280, %v5282
      %v5284 = vrot.slane %v5218, 1
      %v5285 = vsel %vm880, %v5282, %v5284
      %v5286 = vrot.slane %v5219, 1
      %v5287 = vsel %vm880, %v5284, %v5286
      %v5288 = vrot.slane %v5220, 1
      %v5289 = vsel %vm880, %v5286, %v5288
      %v5290 = vrot.slane %v5221, 1
      %v5291 = vsel %vm880, %v5288, %v5290
      %v5292 = vrot.slane %v5222, 1
      %v5293 = vsel %vm880, %v5290, %v5292
      %v5294 = vrot.slane %v5223, 1
      %v5295 = vsel %vm880, %v5292, %v5294
      %v5296 = vrot.slane %v5224, 1
      %v5297 = vsel %vm880, %v5294, %v5296
      %v5298 = vrot.slane %v5225, 1
      %v5299 = vsel %vm880, %v5296, %v5298
      %v5300 = vrot.slane %v5226, 1
      %v5301 = vsel %vm880, %v5298, %v5300
      %v5302 = vrot.slane %v5227, 1
      %v5303 = vsel %vm880, %v5300, %v5302
      %v5304 = vrot.slane %v5228, 1
      %v5305 = vsel %vm880, %v5302, %v5304
      %v5306 = vrot.slane %v5229, 1
      %v5307 = vsel %vm880, %v5304, %v5306
      %v5308 = vrot.slane %v5230, 1
      %v5309 = vsel %vm880, %v5306, %v5308
      %v5310 = vrot.slane %v5231, 1
      %v5311 = vsel %vm880, %v5308, %v5310
      %v5339 = vadd.f32 %v5178, %v5261
      %v5340 = vadd.f32 %v5179, %v5263
      %v5341 = vadd.f32 %v5180, %v5265
      %v5342 = vadd.f32 %v5181, %v5267
      %v5343 = vadd.f32 %v5182, %v5269
      %v5344 = vadd.f32 %v5183, %v5271
      %v5345 = vadd.f32 %v5184, %v5273
      %v5346 = vadd.f32 %v5185, %v5275
      %v5347 = vadd.f32 %v5186, %v5277
      %v5348 = vadd.f32 %v5187, %v5279
      %v5349 = vadd.f32 %v5188, %v5281
      %v5350 = vadd.f32 %v5189, %v5283
      %v5351 = vadd.f32 %v5190, %v5285
      %v5352 = vadd.f32 %v5191, %v5287
      %v5353 = vadd.f32 %v5192, %v5289
      %v5354 = vadd.f32 %v5193, %v5291
      %v5355 = vadd.f32 %v5194, %v5293
      %v5356 = vadd.f32 %v5195, %v5295
      %v5357 = vadd.f32 %v5196, %v5297
      %v5358 = vadd.f32 %v5197, %v5299
      %v5359 = vadd.f32 %v5198, %v5301
      %v5360 = vadd.f32 %v5199, %v5303
      %v5361 = vadd.f32 %v5200, %v5305
      %v5362 = vadd.f32 %v5201, %v5307
      %v5363 = vadd.f32 %v5202, %v5309
      %v5364 = vadd.f32 %v5203, %v5311
      %v5365 = vadd.f32 %v5204, %v5310
      %v5366 = vmul.f32 %v1298, %v825
      %v5367 = vmul.f32 %v1303, %v825
      %v5368 = vmul.f32 %v1308, %v825
      %v5369 = vmul.f32 %v1313, %v825
      %v5370 = vmul.f32 %v1318, %v825
      %v5371 = vmul.f32 %v1323, %v825
      %v5372 = vmul.f32 %v1328, %v825
      %v5373 = vmul.f32 %v1333, %v825
      %v5374 = vmul.f32 %v1338, %v825
      %v5375 = vmul.f32 %v1343, %v825
      %v5376 = vmul.f32 %v1348, %v825
      %v5377 = vmul.f32 %v1353, %v825
      %v5378 = vmul.f32 %v1358, %v825
      %v5379 = vmul.f32 %v1363, %v825
      %v5380 = vmul.f32 %v1368, %v825
      %v5381 = vmul.f32 %v1373, %v825
      %v5382 = vmul.f32 %v1378, %v825
      %v5383 = vmul.f32 %v1383, %v825
      %v5384 = vmul.f32 %v1388, %v825
      %v5385 = vmul.f32 %v1393, %v825
      %v5386 = vmul.f32 %v1398, %v825
      %v5387 = vmul.f32 %v1403, %v825
      %v5388 = vmul.f32 %v1408, %v825
      %v5389 = vmul.f32 %v1413, %v825
      %v5390 = vmul.f32 %v1418, %v825
      %v5391 = vmul.f32 %v1423, %v825
      %v5392 = vmul.f32 %v3124, %v825
      %v5420 = vrot.slane %v5366, 1
      %v5421 = vrot.slane %v5367, 1
      %v5422 = vsel %vm880, %v5420, %v5421
      %v5423 = vrot.slane %v5368, 1
      %v5424 = vsel %vm880, %v5421, %v5423
      %v5425 = vrot.slane %v5369, 1
      %v5426 = vsel %vm880, %v5423, %v5425
      %v5427 = vrot.slane %v5370, 1
      %v5428 = vsel %vm880, %v5425, %v5427
      %v5429 = vrot.slane %v5371, 1
      %v5430 = vsel %vm880, %v5427, %v5429
      %v5431 = vrot.slane %v5372, 1
      %v5432 = vsel %vm880, %v5429, %v5431
      %v5433 = vrot.slane %v5373, 1
      %v5434 = vsel %vm880, %v5431, %v5433
      %v5435 = vrot.slane %v5374, 1
      %v5436 = vsel %vm880, %v5433, %v5435
      %v5437 = vrot.slane %v5375, 1
      %v5438 = vsel %vm880, %v5435, %v5437
      %v5439 = vrot.slane %v5376, 1
      %v5440 = vsel %vm880, %v5437, %v5439
      %v5441 = vrot.slane %v5377, 1
      %v5442 = vsel %vm880, %v5439, %v5441
      %v5443 = vrot.slane %v5378, 1
      %v5444 = vsel %vm880, %v5441, %v5443
      %v5445 = vrot.slane %v5379, 1
      %v5446 = vsel %vm880, %v5443, %v5445
      %v5447 = vrot.slane %v5380, 1
      %v5448 = vsel %vm880, %v5445, %v5447
      %v5449 = vrot.slane %v5381, 1
      %v5450 = vsel %vm880, %v5447, %v5449
      %v5451 = vrot.slane %v5382, 1
      %v5452 = vsel %vm880, %v5449, %v5451
      %v5453 = vrot.slane %v5383, 1
      %v5454 = vsel %vm880, %v5451, %v5453
      %v5455 = vrot.slane %v5384, 1
      %v5456 = vsel %vm880, %v5453, %v5455
      %v5457 = vrot.slane %v5385, 1
      %v5458 = vsel %vm880, %v5455, %v5457
      %v5459 = vrot.slane %v5386, 1
      %v5460 = vsel %vm880, %v5457, %v5459
      %v5461 = vrot.slane %v5387, 1
      %v5462 = vsel %vm880, %v5459, %v5461
      %v5463 = vrot.slane %v5388, 1
      %v5464 = vsel %vm880, %v5461, %v5463
      %v5465 = vrot.slane %v5389, 1
      %v5466 = vsel %vm880, %v5463, %v5465
      %v5467 = vrot.slane %v5390, 1
      %v5468 = vsel %vm880, %v5465, %v5467
      %v5469 = vrot.slane %v5391, 1
      %v5470 = vsel %vm880, %v5467, %v5469
      %v5471 = vrot.slane %v5392, 1
      %v5472 = vsel %vm880, %v5469, %v5471
      %v5500 = vadd.f32 %v5339, %v5422
      %v5501 = vadd.f32 %v5340, %v5424
      %v5502 = vadd.f32 %v5341, %v5426
      %v5503 = vadd.f32 %v5342, %v5428
      %v5504 = vadd.f32 %v5343, %v5430
      %v5505 = vadd.f32 %v5344, %v5432
      %v5506 = vadd.f32 %v5345, %v5434
      %v5507 = vadd.f32 %v5346, %v5436
      %v5508 = vadd.f32 %v5347, %v5438
      %v5509 = vadd.f32 %v5348, %v5440
      %v5510 = vadd.f32 %v5349, %v5442
      %v5511 = vadd.f32 %v5350, %v5444
      %v5512 = vadd.f32 %v5351, %v5446
      %v5513 = vadd.f32 %v5352, %v5448
      %v5514 = vadd.f32 %v5353, %v5450
      %v5515 = vadd.f32 %v5354, %v5452
      %v5516 = vadd.f32 %v5355, %v5454
      %v5517 = vadd.f32 %v5356, %v5456
      %v5518 = vadd.f32 %v5357, %v5458
      %v5519 = vadd.f32 %v5358, %v5460
      %v5520 = vadd.f32 %v5359, %v5462
      %v5521 = vadd.f32 %v5360, %v5464
      %v5522 = vadd.f32 %v5361, %v5466
      %v5523 = vadd.f32 %v5362, %v5468
      %v5524 = vadd.f32 %v5363, %v5470
      %v5525 = vadd.f32 %v5364, %v5472
      %v5526 = vadd.f32 %v5365, %v5471
      %v5527 = vmul.f32 %v2094, %v1183
      %v5528 = vmul.f32 %v2099, %v1183
      %v5529 = vmul.f32 %v2104, %v1183
      %v5530 = vmul.f32 %v2109, %v1183
      %v5531 = vmul.f32 %v2114, %v1183
      %v5532 = vmul.f32 %v2119, %v1183
      %v5533 = vmul.f32 %v2124, %v1183
      %v5534 = vmul.f32 %v2129, %v1183
      %v5535 = vmul.f32 %v2134, %v1183
      %v5536 = vmul.f32 %v2139, %v1183
      %v5537 = vmul.f32 %v2144, %v1183
      %v5538 = vmul.f32 %v2149, %v1183
      %v5539 = vmul.f32 %v2154, %v1183
      %v5540 = vmul.f32 %v2159, %v1183
      %v5541 = vmul.f32 %v2164, %v1183
      %v5542 = vmul.f32 %v2169, %v1183
      %v5543 = vmul.f32 %v2174, %v1183
      %v5544 = vmul.f32 %v2179, %v1183
      %v5545 = vmul.f32 %v2184, %v1183
      %v5546 = vmul.f32 %v2189, %v1183
      %v5547 = vmul.f32 %v2194, %v1183
      %v5548 = vmul.f32 %v2199, %v1183
      %v5549 = vmul.f32 %v2204, %v1183
      %v5550 = vmul.f32 %v2209, %v1183
      %v5551 = vmul.f32 %v2214, %v1183
      %v5552 = vmul.f32 %v2219, %v1183
      %v5553 = vmul.f32 %v2224, %v1183
      %v5554 = vmul.f32 %v2229, %v1183
      %v5583 = vrot.slane %v5527, 7
      %v5584 = vrot.slane %v5528, 7
      %v5585 = vsel %vm1922, %v5583, %v5584
      %v5586 = vrot.slane %v5529, 7
      %v5587 = vsel %vm1922, %v5584, %v5586
      %v5588 = vrot.slane %v5530, 7
      %v5589 = vsel %vm1922, %v5586, %v5588
      %v5590 = vrot.slane %v5531, 7
      %v5591 = vsel %vm1922, %v5588, %v5590
      %v5592 = vrot.slane %v5532, 7
      %v5593 = vsel %vm1922, %v5590, %v5592
      %v5594 = vrot.slane %v5533, 7
      %v5595 = vsel %vm1922, %v5592, %v5594
      %v5596 = vrot.slane %v5534, 7
      %v5597 = vsel %vm1922, %v5594, %v5596
      %v5598 = vrot.slane %v5535, 7
      %v5599 = vsel %vm1922, %v5596, %v5598
      %v5600 = vrot.slane %v5536, 7
      %v5601 = vsel %vm1922, %v5598, %v5600
      %v5602 = vrot.slane %v5537, 7
      %v5603 = vsel %vm1922, %v5600, %v5602
      %v5604 = vrot.slane %v5538, 7
      %v5605 = vsel %vm1922, %v5602, %v5604
      %v5606 = vrot.slane %v5539, 7
      %v5607 = vsel %vm1922, %v5604, %v5606
      %v5608 = vrot.slane %v5540, 7
      %v5609 = vsel %vm1922, %v5606, %v5608
      %v5610 = vrot.slane %v5541, 7
      %v5611 = vsel %vm1922, %v5608, %v5610
      %v5612 = vrot.slane %v5542, 7
      %v5613 = vsel %vm1922, %v5610, %v5612
      %v5614 = vrot.slane %v5543, 7
      %v5615 = vsel %vm1922, %v5612, %v5614
      %v5616 = vrot.slane %v5544, 7
      %v5617 = vsel %vm1922, %v5614, %v5616
      %v5618 = vrot.slane %v5545, 7
      %v5619 = vsel %vm1922, %v5616, %v5618
      %v5620 = vrot.slane %v5546, 7
      %v5621 = vsel %vm1922, %v5618, %v5620
      %v5622 = vrot.slane %v5547, 7
      %v5623 = vsel %vm1922, %v5620, %v5622
      %v5624 = vrot.slane %v5548, 7
      %v5625 = vsel %vm1922, %v5622, %v5624
      %v5626 = vrot.slane %v5549, 7
      %v5627 = vsel %vm1922, %v5624, %v5626
      %v5628 = vrot.slane %v5550, 7
      %v5629 = vsel %vm1922, %v5626, %v5628
      %v5630 = vrot.slane %v5551, 7
      %v5631 = vsel %vm1922, %v5628, %v5630
      %v5632 = vrot.slane %v5552, 7
      %v5633 = vsel %vm1922, %v5630, %v5632
      %v5634 = vrot.slane %v5553, 7
      %v5635 = vsel %vm1922, %v5632, %v5634
      %v5636 = vrot.slane %v5554, 7
      %v5637 = vsel %vm1922, %v5634, %v5636
      %v5665 = vadd.f32 %v5500, %v5585
      %v5666 = vadd.f32 %v5501, %v5587
      %v5667 = vadd.f32 %v5502, %v5589
      %v5668 = vadd.f32 %v5503, %v5591
      %v5669 = vadd.f32 %v5504, %v5593
      %v5670 = vadd.f32 %v5505, %v5595
      %v5671 = vadd.f32 %v5506, %v5597
      %v5672 = vadd.f32 %v5507, %v5599
      %v5673 = vadd.f32 %v5508, %v5601
      %v5674 = vadd.f32 %v5509, %v5603
      %v5675 = vadd.f32 %v5510, %v5605
      %v5676 = vadd.f32 %v5511, %v5607
      %v5677 = vadd.f32 %v5512, %v5609
      %v5678 = vadd.f32 %v5513, %v5611
      %v5679 = vadd.f32 %v5514, %v5613
      %v5680 = vadd.f32 %v5515, %v5615
      %v5681 = vadd.f32 %v5516, %v5617
      %v5682 = vadd.f32 %v5517, %v5619
      %v5683 = vadd.f32 %v5518, %v5621
      %v5684 = vadd.f32 %v5519, %v5623
      %v5685 = vadd.f32 %v5520, %v5625
      %v5686 = vadd.f32 %v5521, %v5627
      %v5687 = vadd.f32 %v5522, %v5629
      %v5688 = vadd.f32 %v5523, %v5631
      %v5689 = vadd.f32 %v5524, %v5633
      %v5690 = vadd.f32 %v5525, %v5635
      %v5691 = vadd.f32 %v5526, %v5637
      %v5692 = vmul.f32 %v1730, %v1433
      %v5693 = vmul.f32 %v1735, %v1433
      %v5694 = vmul.f32 %v1740, %v1433
      %v5695 = vmul.f32 %v1745, %v1433
      %v5696 = vmul.f32 %v1750, %v1433
      %v5697 = vmul.f32 %v1755, %v1433
      %v5698 = vmul.f32 %v1760, %v1433
      %v5699 = vmul.f32 %v1765, %v1433
      %v5700 = vmul.f32 %v1770, %v1433
      %v5701 = vmul.f32 %v1775, %v1433
      %v5702 = vmul.f32 %v1780, %v1433
      %v5703 = vmul.f32 %v1785, %v1433
      %v5704 = vmul.f32 %v1790, %v1433
      %v5705 = vmul.f32 %v1795, %v1433
      %v5706 = vmul.f32 %v1800, %v1433
      %v5707 = vmul.f32 %v1805, %v1433
      %v5708 = vmul.f32 %v1810, %v1433
      %v5709 = vmul.f32 %v1815, %v1433
      %v5710 = vmul.f32 %v1820, %v1433
      %v5711 = vmul.f32 %v1825, %v1433
      %v5712 = vmul.f32 %v1830, %v1433
      %v5713 = vmul.f32 %v1835, %v1433
      %v5714 = vmul.f32 %v1840, %v1433
      %v5715 = vmul.f32 %v1845, %v1433
      %v5716 = vmul.f32 %v1850, %v1433
      %v5717 = vmul.f32 %v1855, %v1433
      %v5718 = vmul.f32 %v1860, %v1433
      %v5719 = vadd.f32 %v5665, %v5692
      %v5720 = vadd.f32 %v5666, %v5693
      %v5721 = vadd.f32 %v5667, %v5694
      %v5722 = vadd.f32 %v5668, %v5695
      %v5723 = vadd.f32 %v5669, %v5696
      %v5724 = vadd.f32 %v5670, %v5697
      %v5725 = vadd.f32 %v5671, %v5698
      %v5726 = vadd.f32 %v5672, %v5699
      %v5727 = vadd.f32 %v5673, %v5700
      %v5728 = vadd.f32 %v5674, %v5701
      %v5729 = vadd.f32 %v5675, %v5702
      %v5730 = vadd.f32 %v5676, %v5703
      %v5731 = vadd.f32 %v5677, %v5704
      %v5732 = vadd.f32 %v5678, %v5705
      %v5733 = vadd.f32 %v5679, %v5706
      %v5734 = vadd.f32 %v5680, %v5707
      %v5735 = vadd.f32 %v5681, %v5708
      %v5736 = vadd.f32 %v5682, %v5709
      %v5737 = vadd.f32 %v5683, %v5710
      %v5738 = vadd.f32 %v5684, %v5711
      %v5739 = vadd.f32 %v5685, %v5712
      %v5740 = vadd.f32 %v5686, %v5713
      %v5741 = vadd.f32 %v5687, %v5714
      %v5742 = vadd.f32 %v5688, %v5715
      %v5743 = vadd.f32 %v5689, %v5716
      %v5744 = vadd.f32 %v5690, %v5717
      %v5745 = vadd.f32 %v5691, %v5718
      %v5746 = vmul.f32 %v2099, %v1501
      %v5747 = vmul.f32 %v2104, %v1501
      %v5748 = vmul.f32 %v2109, %v1501
      %v5749 = vmul.f32 %v2114, %v1501
      %v5750 = vmul.f32 %v2119, %v1501
      %v5751 = vmul.f32 %v2124, %v1501
      %v5752 = vmul.f32 %v2129, %v1501
      %v5753 = vmul.f32 %v2134, %v1501
      %v5754 = vmul.f32 %v2139, %v1501
      %v5755 = vmul.f32 %v2144, %v1501
      %v5756 = vmul.f32 %v2149, %v1501
      %v5757 = vmul.f32 %v2154, %v1501
      %v5758 = vmul.f32 %v2159, %v1501
      %v5759 = vmul.f32 %v2164, %v1501
      %v5760 = vmul.f32 %v2169, %v1501
      %v5761 = vmul.f32 %v2174, %v1501
      %v5762 = vmul.f32 %v2179, %v1501
      %v5763 = vmul.f32 %v2184, %v1501
      %v5764 = vmul.f32 %v2189, %v1501
      %v5765 = vmul.f32 %v2194, %v1501
      %v5766 = vmul.f32 %v2199, %v1501
      %v5767 = vmul.f32 %v2204, %v1501
      %v5768 = vmul.f32 %v2209, %v1501
      %v5769 = vmul.f32 %v2214, %v1501
      %v5770 = vmul.f32 %v2219, %v1501
      %v5771 = vmul.f32 %v2224, %v1501
      %v5772 = vmul.f32 %v2229, %v1501
      %v5773 = vadd.f32 %v5719, %v5746
      %v5774 = vadd.f32 %v5720, %v5747
      %v5775 = vadd.f32 %v5721, %v5748
      %v5776 = vadd.f32 %v5722, %v5749
      %v5777 = vadd.f32 %v5723, %v5750
      %v5778 = vadd.f32 %v5724, %v5751
      %v5779 = vadd.f32 %v5725, %v5752
      %v5780 = vadd.f32 %v5726, %v5753
      %v5781 = vadd.f32 %v5727, %v5754
      %v5782 = vadd.f32 %v5728, %v5755
      %v5783 = vadd.f32 %v5729, %v5756
      %v5784 = vadd.f32 %v5730, %v5757
      %v5785 = vadd.f32 %v5731, %v5758
      %v5786 = vadd.f32 %v5732, %v5759
      %v5787 = vadd.f32 %v5733, %v5760
      %v5788 = vadd.f32 %v5734, %v5761
      %v5789 = vadd.f32 %v5735, %v5762
      %v5790 = vadd.f32 %v5736, %v5763
      %v5791 = vadd.f32 %v5737, %v5764
      %v5792 = vadd.f32 %v5738, %v5765
      %v5793 = vadd.f32 %v5739, %v5766
      %v5794 = vadd.f32 %v5740, %v5767
      %v5795 = vadd.f32 %v5741, %v5768
      %v5796 = vadd.f32 %v5742, %v5769
      %v5797 = vadd.f32 %v5743, %v5770
      %v5798 = vadd.f32 %v5744, %v5771
      %v5799 = vadd.f32 %v5745, %v5772
      %v5800 = vmul.f32 %v4714, %v1865
      %v5801 = vmul.f32 %v4719, %v1865
      %v5802 = vmul.f32 %v4724, %v1865
      %v5803 = vmul.f32 %v4729, %v1865
      %v5804 = vmul.f32 %v4734, %v1865
      %v5805 = vmul.f32 %v4739, %v1865
      %v5806 = vmul.f32 %v4744, %v1865
      %v5807 = vmul.f32 %v4749, %v1865
      %v5808 = vmul.f32 %v4754, %v1865
      %v5809 = vmul.f32 %v4759, %v1865
      %v5810 = vmul.f32 %v4764, %v1865
      %v5811 = vmul.f32 %v4769, %v1865
      %v5812 = vmul.f32 %v4774, %v1865
      %v5813 = vmul.f32 %v4779, %v1865
      %v5814 = vmul.f32 %v4784, %v1865
      %v5815 = vmul.f32 %v4789, %v1865
      %v5816 = vmul.f32 %v4794, %v1865
      %v5817 = vmul.f32 %v4799, %v1865
      %v5818 = vmul.f32 %v4804, %v1865
      %v5819 = vmul.f32 %v4809, %v1865
      %v5820 = vmul.f32 %v4814, %v1865
      %v5821 = vmul.f32 %v4819, %v1865
      %v5822 = vmul.f32 %v4824, %v1865
      %v5823 = vmul.f32 %v4829, %v1865
      %v5824 = vmul.f32 %v4834, %v1865
      %v5825 = vmul.f32 %v4839, %v1865
      %v5826 = vmul.f32 %v4844, %v1865
      %v5827 = vmul.f32 %v4849, %v1865
      %v5856 = vrot.slane %v5800, 7
      %v5857 = vrot.slane %v5801, 7
      %v5858 = vsel %vm1922, %v5856, %v5857
      %v5859 = vrot.slane %v5802, 7
      %v5860 = vsel %vm1922, %v5857, %v5859
      %v5861 = vrot.slane %v5803, 7
      %v5862 = vsel %vm1922, %v5859, %v5861
      %v5863 = vrot.slane %v5804, 7
      %v5864 = vsel %vm1922, %v5861, %v5863
      %v5865 = vrot.slane %v5805, 7
      %v5866 = vsel %vm1922, %v5863, %v5865
      %v5867 = vrot.slane %v5806, 7
      %v5868 = vsel %vm1922, %v5865, %v5867
      %v5869 = vrot.slane %v5807, 7
      %v5870 = vsel %vm1922, %v5867, %v5869
      %v5871 = vrot.slane %v5808, 7
      %v5872 = vsel %vm1922, %v5869, %v5871
      %v5873 = vrot.slane %v5809, 7
      %v5874 = vsel %vm1922, %v5871, %v5873
      %v5875 = vrot.slane %v5810, 7
      %v5876 = vsel %vm1922, %v5873, %v5875
      %v5877 = vrot.slane %v5811, 7
      %v5878 = vsel %vm1922, %v5875, %v5877
      %v5879 = vrot.slane %v5812, 7
      %v5880 = vsel %vm1922, %v5877, %v5879
      %v5881 = vrot.slane %v5813, 7
      %v5882 = vsel %vm1922, %v5879, %v5881
      %v5883 = vrot.slane %v5814, 7
      %v5884 = vsel %vm1922, %v5881, %v5883
      %v5885 = vrot.slane %v5815, 7
      %v5886 = vsel %vm1922, %v5883, %v5885
      %v5887 = vrot.slane %v5816, 7
      %v5888 = vsel %vm1922, %v5885, %v5887
      %v5889 = vrot.slane %v5817, 7
      %v5890 = vsel %vm1922, %v5887, %v5889
      %v5891 = vrot.slane %v5818, 7
      %v5892 = vsel %vm1922, %v5889, %v5891
      %v5893 = vrot.slane %v5819, 7
      %v5894 = vsel %vm1922, %v5891, %v5893
      %v5895 = vrot.slane %v5820, 7
      %v5896 = vsel %vm1922, %v5893, %v5895
      %v5897 = vrot.slane %v5821, 7
      %v5898 = vsel %vm1922, %v5895, %v5897
      %v5899 = vrot.slane %v5822, 7
      %v5900 = vsel %vm1922, %v5897, %v5899
      %v5901 = vrot.slane %v5823, 7
      %v5902 = vsel %vm1922, %v5899, %v5901
      %v5903 = vrot.slane %v5824, 7
      %v5904 = vsel %vm1922, %v5901, %v5903
      %v5905 = vrot.slane %v5825, 7
      %v5906 = vsel %vm1922, %v5903, %v5905
      %v5907 = vrot.slane %v5826, 7
      %v5908 = vsel %vm1922, %v5905, %v5907
      %v5909 = vrot.slane %v5827, 7
      %v5910 = vsel %vm1922, %v5907, %v5909
      %v5938 = vadd.f32 %v5773, %v5858
      %v5939 = vadd.f32 %v5774, %v5860
      %v5940 = vadd.f32 %v5775, %v5862
      %v5941 = vadd.f32 %v5776, %v5864
      %v5942 = vadd.f32 %v5777, %v5866
      %v5943 = vadd.f32 %v5778, %v5868
      %v5944 = vadd.f32 %v5779, %v5870
      %v5945 = vadd.f32 %v5780, %v5872
      %v5946 = vadd.f32 %v5781, %v5874
      %v5947 = vadd.f32 %v5782, %v5876
      %v5948 = vadd.f32 %v5783, %v5878
      %v5949 = vadd.f32 %v5784, %v5880
      %v5950 = vadd.f32 %v5785, %v5882
      %v5951 = vadd.f32 %v5786, %v5884
      %v5952 = vadd.f32 %v5787, %v5886
      %v5953 = vadd.f32 %v5788, %v5888
      %v5954 = vadd.f32 %v5789, %v5890
      %v5955 = vadd.f32 %v5790, %v5892
      %v5956 = vadd.f32 %v5791, %v5894
      %v5957 = vadd.f32 %v5792, %v5896
      %v5958 = vadd.f32 %v5793, %v5898
      %v5959 = vadd.f32 %v5794, %v5900
      %v5960 = vadd.f32 %v5795, %v5902
      %v5961 = vadd.f32 %v5796, %v5904
      %v5962 = vadd.f32 %v5797, %v5906
      %v5963 = vadd.f32 %v5798, %v5908
      %v5964 = vadd.f32 %v5799, %v5910
      %v5965 = vmul.f32 %v4358, %v2234
      %v5966 = vmul.f32 %v4363, %v2234
      %v5967 = vmul.f32 %v4368, %v2234
      %v5968 = vmul.f32 %v4373, %v2234
      %v5969 = vmul.f32 %v4378, %v2234
      %v5970 = vmul.f32 %v4383, %v2234
      %v5971 = vmul.f32 %v4388, %v2234
      %v5972 = vmul.f32 %v4393, %v2234
      %v5973 = vmul.f32 %v4398, %v2234
      %v5974 = vmul.f32 %v4403, %v2234
      %v5975 = vmul.f32 %v4408, %v2234
      %v5976 = vmul.f32 %v4413, %v2234
      %v5977 = vmul.f32 %v4418, %v2234
      %v5978 = vmul.f32 %v4423, %v2234
      %v5979 = vmul.f32 %v4428, %v2234
      %v5980 = vmul.f32 %v4433, %v2234
      %v5981 = vmul.f32 %v4438, %v2234
      %v5982 = vmul.f32 %v4443, %v2234
      %v5983 = vmul.f32 %v4448, %v2234
      %v5984 = vmul.f32 %v4453, %v2234
      %v5985 = vmul.f32 %v4458, %v2234
      %v5986 = vmul.f32 %v4463, %v2234
      %v5987 = vmul.f32 %v4468, %v2234
      %v5988 = vmul.f32 %v4473, %v2234
      %v5989 = vmul.f32 %v4478, %v2234
      %v5990 = vmul.f32 %v4483, %v2234
      %v5991 = vmul.f32 %v4488, %v2234
      %v5992 = vadd.f32 %v5938, %v5965
      %v5993 = vadd.f32 %v5939, %v5966
      %v5994 = vadd.f32 %v5940, %v5967
      %v5995 = vadd.f32 %v5941, %v5968
      %v5996 = vadd.f32 %v5942, %v5969
      %v5997 = vadd.f32 %v5943, %v5970
      %v5998 = vadd.f32 %v5944, %v5971
      %v5999 = vadd.f32 %v5945, %v5972
      %v6000 = vadd.f32 %v5946, %v5973
      %v6001 = vadd.f32 %v5947, %v5974
      %v6002 = vadd.f32 %v5948, %v5975
      %v6003 = vadd.f32 %v5949, %v5976
      %v6004 = vadd.f32 %v5950, %v5977
      %v6005 = vadd.f32 %v5951, %v5978
      %v6006 = vadd.f32 %v5952, %v5979
      %v6007 = vadd.f32 %v5953, %v5980
      %v6008 = vadd.f32 %v5954, %v5981
      %v6009 = vadd.f32 %v5955, %v5982
      %v6010 = vadd.f32 %v5956, %v5983
      %v6011 = vadd.f32 %v5957, %v5984
      %v6012 = vadd.f32 %v5958, %v5985
      %v6013 = vadd.f32 %v5959, %v5986
      %v6014 = vadd.f32 %v5960, %v5987
      %v6015 = vadd.f32 %v5961, %v5988
      %v6016 = vadd.f32 %v5962, %v5989
      %v6017 = vadd.f32 %v5963, %v5990
      %v6018 = vadd.f32 %v5964, %v5991
      %v6019 = vmul.f32 %v4719, %v2406
      %v6020 = vmul.f32 %v4724, %v2406
      %v6021 = vmul.f32 %v4729, %v2406
      %v6022 = vmul.f32 %v4734, %v2406
      %v6023 = vmul.f32 %v4739, %v2406
      %v6024 = vmul.f32 %v4744, %v2406
      %v6025 = vmul.f32 %v4749, %v2406
      %v6026 = vmul.f32 %v4754, %v2406
      %v6027 = vmul.f32 %v4759, %v2406
      %v6028 = vmul.f32 %v4764, %v2406
      %v6029 = vmul.f32 %v4769, %v2406
      %v6030 = vmul.f32 %v4774, %v2406
      %v6031 = vmul.f32 %v4779, %v2406
      %v6032 = vmul.f32 %v4784, %v2406
      %v6033 = vmul.f32 %v4789, %v2406
      %v6034 = vmul.f32 %v4794, %v2406
      %v6035 = vmul.f32 %v4799, %v2406
      %v6036 = vmul.f32 %v4804, %v2406
      %v6037 = vmul.f32 %v4809, %v2406
      %v6038 = vmul.f32 %v4814, %v2406
      %v6039 = vmul.f32 %v4819, %v2406
      %v6040 = vmul.f32 %v4824, %v2406
      %v6041 = vmul.f32 %v4829, %v2406
      %v6042 = vmul.f32 %v4834, %v2406
      %v6043 = vmul.f32 %v4839, %v2406
      %v6044 = vmul.f32 %v4844, %v2406
      %v6045 = vmul.f32 %v4849, %v2406
      %v6046 = vadd.f32 %v5992, %v6019
      %v6047 = vadd.f32 %v5993, %v6020
      %v6048 = vadd.f32 %v5994, %v6021
      %v6049 = vadd.f32 %v5995, %v6022
      %v6050 = vadd.f32 %v5996, %v6023
      %v6051 = vadd.f32 %v5997, %v6024
      %v6052 = vadd.f32 %v5998, %v6025
      %v6053 = vadd.f32 %v5999, %v6026
      %v6054 = vadd.f32 %v6000, %v6027
      %v6055 = vadd.f32 %v6001, %v6028
      %v6056 = vadd.f32 %v6002, %v6029
      %v6057 = vadd.f32 %v6003, %v6030
      %v6058 = vadd.f32 %v6004, %v6031
      %v6059 = vadd.f32 %v6005, %v6032
      %v6060 = vadd.f32 %v6006, %v6033
      %v6061 = vadd.f32 %v6007, %v6034
      %v6062 = vadd.f32 %v6008, %v6035
      %v6063 = vadd.f32 %v6009, %v6036
      %v6064 = vadd.f32 %v6010, %v6037
      %v6065 = vadd.f32 %v6011, %v6038
      %v6066 = vadd.f32 %v6012, %v6039
      %v6067 = vadd.f32 %v6013, %v6040
      %v6068 = vadd.f32 %v6014, %v6041
      %v6069 = vadd.f32 %v6015, %v6042
      %v6070 = vadd.f32 %v6016, %v6043
      %v6071 = vadd.f32 %v6017, %v6044
      %v6072 = vadd.f32 %v6018, %v6045
      %v6073 = vadd.f32 %v6046, %v2465
      %v6074 = vadd.f32 %v6047, %v2465
      %v6075 = vadd.f32 %v6048, %v2465
      %v6076 = vadd.f32 %v6049, %v2465
      %v6077 = vadd.f32 %v6050, %v2465
      %v6078 = vadd.f32 %v6051, %v2465
      %v6079 = vadd.f32 %v6052, %v2465
      %v6080 = vadd.f32 %v6053, %v2465
      %v6081 = vadd.f32 %v6054, %v2465
      %v6082 = vadd.f32 %v6055, %v2465
      %v6083 = vadd.f32 %v6056, %v2465
      %v6084 = vadd.f32 %v6057, %v2465
      %v6085 = vadd.f32 %v6058, %v2465
      %v6086 = vadd.f32 %v6059, %v2465
      %v6087 = vadd.f32 %v6060, %v2465
      %v6088 = vadd.f32 %v6061, %v2465
      %v6089 = vadd.f32 %v6062, %v2465
      %v6090 = vadd.f32 %v6063, %v2465
      %v6091 = vadd.f32 %v6064, %v2465
      %v6092 = vadd.f32 %v6065, %v2465
      %v6093 = vadd.f32 %v6066, %v2465
      %v6094 = vadd.f32 %v6067, %v2465
      %v6095 = vadd.f32 %v6068, %v2465
      %v6096 = vadd.f32 %v6069, %v2465
      %v6097 = vadd.f32 %v6070, %v2465
      %v6098 = vadd.f32 %v6071, %v2465
      %v6099 = vadd.f32 %v6072, %v2465
      %v6100 = vmax.f32 %v6073, 0.0
      %v6101 = vmax.f32 %v6074, 0.0
      %v6102 = vmax.f32 %v6075, 0.0
      %v6103 = vmax.f32 %v6076, 0.0
      %v6104 = vmax.f32 %v6077, 0.0
      %v6105 = vmax.f32 %v6078, 0.0
      %v6106 = vmax.f32 %v6079, 0.0
      %v6107 = vmax.f32 %v6080, 0.0
      %v6108 = vmax.f32 %v6081, 0.0
      %v6109 = vmax.f32 %v6082, 0.0
      %v6110 = vmax.f32 %v6083, 0.0
      %v6111 = vmax.f32 %v6084, 0.0
      %v6112 = vmax.f32 %v6085, 0.0
      %v6113 = vmax.f32 %v6086, 0.0
      %v6114 = vmax.f32 %v6087, 0.0
      %v6115 = vmax.f32 %v6088, 0.0
      %v6116 = vmax.f32 %v6089, 0.0
      %v6117 = vmax.f32 %v6090, 0.0
      %v6118 = vmax.f32 %v6091, 0.0
      %v6119 = vmax.f32 %v6092, 0.0
      %v6120 = vmax.f32 %v6093, 0.0
      %v6121 = vmax.f32 %v6094, 0.0
      %v6122 = vmax.f32 %v6095, 0.0
      %v6123 = vmax.f32 %v6096, 0.0
      %v6124 = vmax.f32 %v6097, 0.0
      %v6125 = vmax.f32 %v6098, 0.0
      %v6126 = vmax.f32 %v6099, 0.0
      %v6127 = vmax.f32 %v5124, %v6100
      %v6128 = vmax.f32 %v5125, %v6101
      %v6129 = vmax.f32 %v5126, %v6102
      %v6130 = vmax.f32 %v5127, %v6103
      %v6131 = vmax.f32 %v5128, %v6104
      %v6132 = vmax.f32 %v5129, %v6105
      %v6133 = vmax.f32 %v5130, %v6106
      %v6134 = vmax.f32 %v5131, %v6107
      %v6135 = vmax.f32 %v5132, %v6108
      %v6136 = vmax.f32 %v5133, %v6109
      %v6137 = vmax.f32 %v5134, %v6110
      %v6138 = vmax.f32 %v5135, %v6111
      %v6139 = vmax.f32 %v5136, %v6112
      %v6140 = vmax.f32 %v5137, %v6113
      %v6141 = vmax.f32 %v5138, %v6114
      %v6142 = vmax.f32 %v5139, %v6115
      %v6143 = vmax.f32 %v5140, %v6116
      %v6144 = vmax.f32 %v5141, %v6117
      %v6145 = vmax.f32 %v5142, %v6118
      %v6146 = vmax.f32 %v5143, %v6119
      %v6147 = vmax.f32 %v5144, %v6120
      %v6148 = vmax.f32 %v5145, %v6121
      %v6149 = vmax.f32 %v5146, %v6122
      %v6150 = vmax.f32 %v5147, %v6123
      %v6151 = vmax.f32 %v5148, %v6124
      %v6152 = vmax.f32 %v5149, %v6125
      %v6153 = vmax.f32 %v5150, %v6126
      %vm6154 = vcmask 261120
      %6155 = vst.msk [vmem:[%s311] sm:$0xff] %vm6154, %v6127
      %6156 = vst.msk [vmem:[%s311 + $0x8] sm:$0xff] %vm6154, %v6128
      %6157 = vst.msk [vmem:[%s311 + $0x10] sm:$0xff] %vm6154, %v6129
      %6158 = vst.msk [vmem:[%s311 + $0x18] sm:$0xff] %vm6154, %v6130
      %6159 = vst.msk [vmem:[%s311 + $0x20] sm:$0xff] %vm6154, %v6131
      %6160 = vst.msk [vmem:[%s311 + $0x28] sm:$0xff] %vm6154, %v6132
      %6161 = vst.msk [vmem:[%s311 + $0x30] sm:$0xff] %vm6154, %v6133
      %6162 = vst.msk [vmem:[%s311 + $0x38] sm:$0xff] %vm6154, %v6134
      %6163 = vst.msk [vmem:[%s311 + $0x40] sm:$0xff] %vm6154, %v6135
      %6164 = vst.msk [vmem:[%s311 + $0x48] sm:$0xff] %vm6154, %v6136
      %6165 = vst.msk [vmem:[%s311 + $0x50] sm:$0xff] %vm6154, %v6137
      %6166 = vst.msk [vmem:[%s311 + $0x58] sm:$0xff] %vm6154, %v6138
      %6167 = vst.msk [vmem:[%s311 + $0x60] sm:$0xff] %vm6154, %v6139
      %6168 = vst.msk [vmem:[%s311 + $0x68] sm:$0xff] %vm6154, %v6140
      %6169 = vst.msk [vmem:[%s311 + $0x70] sm:$0xff] %vm6154, %v6141
      %6170 = vst.msk [vmem:[%s311 + $0x78] sm:$0xff] %vm6154, %v6142
      %6171 = vst.msk [vmem:[%s311 + $0x80] sm:$0xff] %vm6154, %v6143
      %6172 = vst.msk [vmem:[%s311 + $0x88] sm:$0xff] %vm6154, %v6144
      %6173 = vst.msk [vmem:[%s311 + $0x90] sm:$0xff] %vm6154, %v6145
      %6174 = vst.msk [vmem:[%s311 + $0x98] sm:$0xff] %vm6154, %v6146
      %6175 = vst.msk [vmem:[%s311 + $0xa0] sm:$0xff] %vm6154, %v6147
      %6176 = vst.msk [vmem:[%s311 + $0xa8] sm:$0xff] %vm6154, %v6148
      %6177 = vst.msk [vmem:[%s311 + $0xb0] sm:$0xff] %vm6154, %v6149
      %6178 = vst.msk [vmem:[%s311 + $0xb8] sm:$0xff] %vm6154, %v6150
      %6179 = vst.msk [vmem:[%s311 + $0xc0] sm:$0xff] %vm6154, %v6151
      %6180 = vst.msk [vmem:[%s311 + $0xc8] sm:$0xff] %vm6154, %v6152
      %vm6181 = vcmask 254976
      %6182 = vst.msk [vmem:[%s311 + $0xd0] sm:$0x3] %vm6181, %v6153
      %p6183 = scmp.lt.s32.totalorder %s17, 1
      %s6184 = scalar_select %p6183, %s17, 1
      %s6185 = smul.addr %s6184, 27
      %s6186 = smul.addr %s6185, 8
      %s6187 = scalar_lea.vmem %s6, %s6186
      // Predicated region
      $region45: #{tpu_custom_call.1} parent=43 // pred_check
        %p6188 = pneg %p181
      $region46: #{tpu_custom_call.1} parent=43 // pred_check_branch
        %6190 = sbr.rel (%p6188) target = $region48
      $region47: #{tpu_custom_call.1} parent=43 // pred_region
        _
      $region48: #{tpu_custom_call.1} parent=43 // pred_fallthru
        _
    $region44: #{tpu_custom_call.1} parent=5 // pred_fallthru
      _
    %p6191 = scmp.le.s32.totalorder 2, %s12
    // Predicated region
    $region49: #{tpu_custom_call.1} parent=5 // pred_check
      %p6192 = pneg %p6191
    $region50: #{tpu_custom_call.1} parent=5 // pred_check_branch
      %6194 = sbr.rel (%p6192) target = $region52
    $region51: #{tpu_custom_call.1} parent=5 // pred_region
      %s6195 = ssub.s32 %s12, 2
      // Predicated region
      $region53: #{tpu_custom_call.1} parent=51 // pred_check
        %p6196 = pneg %p187
      $region54: #{tpu_custom_call.1} parent=51 // pred_check_branch
        %6198 = sbr.rel (%p6196) target = $region56
      $region55: #{tpu_custom_call.1} parent=51 // pred_region
        %p6199 = scmp.lt.s32.totalorder %s18, 1
        %s6200 = scalar_select %p6199, %s18, 1
        %s6201 = smul.addr %s6200, 27
        %s6202 = smul.addr %s6201, 8
        %s6203 = scalar_lea.vmem %s6, %s6202
      $region56: #{tpu_custom_call.1} parent=51 // pred_fallthru
        _
    $region52: #{tpu_custom_call.1} parent=5 // pred_fallthru
      _
  $region6: #{tpu_custom_call.1} parent=0 // loop_footer
    %s16 = sadd.s32 1, %s12
  $region7: #{tpu_custom_call.1} parent=0 // loop_footer_branch
    %11 = sbr.rel target = $region3
  $region8: #{tpu_custom_call.1} parent=0 // loop_exit
    _

</llo_original>
